<compile_context>
chip_gen: v6e
topology: v6e:2x2x1
jax: 0.10.0
libtpu: 0.0.40
codegen_flags: <defaults>
</compile_context>

<pallas_src>
import numpy as np
import jax
import jax.numpy as jnp
from jax.experimental import pallas as pl
from jax.experimental.pallas import tpu as pltpu

N_QUBITS = 10
L_LAYERS = 1
N_STATES = 2 ** N_QUBITS      # 1024 = 32 * 32 (28x28 image padded by 2 per side)
N_CLASSES = 10
N_OUT_PAD = 128               # lane-dense padded classifier width (multiple of 128)


def _round_up(x, m):
    return (x + m - 1) // m * m


# ----------------------------- circuit folding (parameter setup, plain numpy) --

def _ry(theta):
    c, s = np.cos(theta / 2.0), np.sin(theta / 2.0)
    return np.array([[c, -s], [s, c]], dtype=np.float64)


def _ry_layer_unitary(angles_l):
    # qubit 0 is the most-significant bit of the basis-state index.
    U = np.array([[1.0]], dtype=np.float64)
    for q in range(N_QUBITS):
        U = np.kron(U, _ry(angles_l[q]))
    return U


def _cx_chain_permutation():
    # CX(control=c, target=c+1) for c = 0..n-2, applied in order.
    T = np.arange(N_STATES)
    for c in range(N_QUBITS - 1):
        t = c + 1
        cpos = N_QUBITS - 1 - c   # bit position of control (qubit 0 = MSB)
        tpos = N_QUBITS - 1 - t   # bit position of target
        cbit = (T >> cpos) & 1
        T = T ^ (cbit << tpos)
    return T


def build_circuit_unitary(angles):
    """angles: (L, n) float64 numpy array -> full real circuit unitary (2^n, 2^n)."""
    T = _cx_chain_permutation()
    P = np.zeros((N_STATES, N_STATES), dtype=np.float64)
    P[T, np.arange(N_STATES)] = 1.0
    U = np.eye(N_STATES, dtype=np.float64)
    for l in range(L_LAYERS):
        U = P @ _ry_layer_unitary(angles[l]) @ U
    return U


# ----------------------------- Pallas kernel (hot path) ------------------------

def qnn_kernel(x_ref, ut_ref, wt_ref, o_ref):
    # x_ref : (TB, 1024)        f32  padded + flattened image rows (batch tile)
    # ut_ref: (1024, 1024)      bf16 circuit unitary, transposed (resident)
    # wt_ref: (1024, 128)       bf16 linear weight^T, zero-padded to 128 lanes
    # o_ref : (TB, 128)         f32  padded logits (no bias)
    x = x_ref[...]
    # per-row L2 normalization (torch.linalg.norm(ord=2, dim=1, keepdim=True)).
    # eps-guard keeps zero padding rows finite (the torch reference NaNs on an
    # all-zero image; real MNIST rows are never all-zero).
    norm_sq = jnp.sum(x * x, axis=1, keepdims=True)
    xn = x * jax.lax.rsqrt(jnp.maximum(norm_sq, 1e-30))
    # state evolution: psi^T = x @ U^T  (state_vector = x.T in the torch module)
    s = jnp.dot(xn.astype(jnp.bfloat16), ut_ref[...],
                preferred_element_type=jnp.float32)
    # measurement probabilities in the computational basis (state is real)
    p = s * s
    # final linear layer (bias added in the wrapper)
    o_ref[...] = jnp.dot(p.astype(jnp.bfloat16), wt_ref[...],
                         preferred_element_type=jnp.float32)


def qnn_forward(x_img, U, W, b, *, block_b=256):
    """x_img: (B, 1, 28, 28) float32 NCHW. Returns (B, 10) logits."""
    B = x_img.shape[0]
    # batch tile: multiple of 8 (sublane), capped at block_b (MXU-friendly)
    TB = min(block_b, _round_up(B, 8))
    Bp = _round_up(B, TB)
    n_tiles = Bp // TB

    # F.pad(x, (2, 2, 2, 2), 'constant', 0) -> (B, 1, 32, 32), then flatten
    xp = jnp.pad(x_img, ((0, 0), (0, 0), (2, 2), (2, 2)))
    xf = xp.reshape(B, N_STATES).astype(jnp.float32)
    xf = jnp.pad(xf, ((0, Bp - B), (0, 0)))          # zero padding rows

    Ut = jnp.asarray(U.T, dtype=jnp.bfloat16)
    Wt = jnp.zeros((N_STATES, N_OUT_PAD), dtype=jnp.bfloat16)
    Wt = Wt.at[:, :N_CLASSES].set(jnp.asarray(W.T, dtype=jnp.bfloat16))

    cost = pl.CostEstimate(
        flops=2 * Bp * N_STATES * N_STATES + 2 * Bp * N_STATES * N_OUT_PAD,
        transcendentals=Bp,
        bytes_accessed=(Bp * N_STATES * 4            # x (f32)
                        + N_STATES * N_STATES * 2    # U^T (bf16)
                        + N_STATES * N_OUT_PAD * 2   # W^T (bf16)
                        + Bp * N_OUT_PAD * 4),       # out (f32)
    )

    out_pad = pl.pallas_call(
        qnn_kernel,
        out_shape=jax.ShapeDtypeStruct((Bp, N_OUT_PAD), jnp.float32),
        grid_spec=pltpu.PrefetchScalarGridSpec(
            num_scalar_prefetch=0,
            grid=(n_tiles,),
            in_specs=[
                pl.BlockSpec((TB, N_STATES), lambda i: (i, 0)),
                pl.BlockSpec((N_STATES, N_STATES), lambda i: (0, 0)),   # resident
                pl.BlockSpec((N_STATES, N_OUT_PAD), lambda i: (0, 0)),  # resident
            ],
            out_specs=pl.BlockSpec((TB, N_OUT_PAD), lambda i: (i, 0)),
        ),
        compiler_params=pltpu.CompilerParams(
            dimension_semantics=("parallel",),   # shard batch tiles across TCs (v7x)
        ),
        cost_estimate=cost,
    )(xf, Ut, Wt)

    b2 = jnp.asarray(b, dtype=jnp.float32).reshape(1, N_CLASSES)
    return out_pad[:B, :N_CLASSES] + b2


# ----------------------------- pure-JAX f32 reference --------------------------

def qnn_reference(x_img, U, W, b):
    B = x_img.shape[0]
    xp = jnp.pad(x_img, ((0, 0), (0, 0), (2, 2), (2, 2))).reshape(B, N_STATES)
    xp = xp.astype(jnp.float32)
    xn = xp / jnp.linalg.norm(xp, ord=2, axis=1, keepdims=True)
    s = xn @ jnp.asarray(U, dtype=jnp.float32).T
    p = s * s
    return p @ jnp.asarray(W, dtype=jnp.float32).T + jnp.asarray(b, jnp.float32)


# ----------------------------- driver ------------------------------------------

if __name__ == "__main__":
    key = jax.random.PRNGKey(0)
    k_x, k_ang, k_w, k_b = jax.random.split(key, 4)

    B = 2
    # deterministic example input (MNIST-sized), NCHW
    x_img = jax.random.uniform(k_x, (B, 1, 28, 28), dtype=jnp.float32)

    # angles ~ U(-0.01, 0.01), shape (L, n)  (torch.nn.init.uniform_)
    angles = jax.random.uniform(
        k_ang, (L_LAYERS, N_QUBITS), dtype=jnp.float32, minval=-0.01, maxval=0.01
    )
    # nn.Linear(2**n, 10) default init: U(-1/sqrt(fan_in), 1/sqrt(fan_in))
    bound = 1.0 / np.sqrt(N_STATES)
    W = jax.random.uniform(
        k_w, (N_CLASSES, N_STATES), dtype=jnp.float32, minval=-bound, maxval=bound
    )
    b = jax.random.uniform(
        k_b, (N_CLASSES,), dtype=jnp.float32, minval=-bound, maxval=bound
    )

    # fold the parameterized quantum circuit into one unitary (parameter-only)
    U = build_circuit_unitary(np.asarray(angles, dtype=np.float64))

    out = qnn_forward(x_img, U, W, b)
    out = jax.block_until_ready(out)
    assert out.shape == (B, N_CLASSES)
    assert bool(jnp.all(jnp.isfinite(out)))

    # validate bf16 kernel against the f32 reference
    ref = jax.block_until_ready(qnn_reference(x_img, U, W, b))
    assert bool(jnp.allclose(out, ref, atol=5e-3, rtol=5e-3)), (
        float(jnp.max(jnp.abs(out - ref)))
    )
    print("KERNEL_OK")
</pallas_src>

<mosaic_0001>
module attributes {stable_mosaic.version = 11 : i64} {
  func.func @qnn_kernel(%arg0: i32, %arg1: memref<8x1024xf32, #tpu.memory_space<vmem>>, %arg2: memref<1024x1024xbf16, #tpu.memory_space<vmem>>, %arg3: memref<1024x128xbf16, #tpu.memory_space<vmem>>, %arg4: memref<8x128xf32, #tpu.memory_space<vmem>>) attributes {dimension_semantics = [#tpu.dimension_semantics<parallel>], iteration_bounds = array<i64: 1>, scalar_prefetch = 0 : i64, scratch_operands = 0 : i64, tpu.core_type = #tpu.core_type<tc>, window_params = [{transform_indices = @transform_0, window_bounds = array<i64: 8, 1024>}, {pipeline_mode = #tpu.pipeline_mode<synchronous>, transform_indices = @transform_1, window_bounds = array<i64: 1024, 1024>}, {pipeline_mode = #tpu.pipeline_mode<synchronous>, transform_indices = @transform_2, window_bounds = array<i64: 1024, 128>}, {transform_indices = @transform_3, window_bounds = array<i64: 8, 128>}]} {
    %c0 = arith.constant 0 : index
    %c0_0 = arith.constant 0 : index
    %0 = vector.load %arg1[%c0, %c0_0] : memref<8x1024xf32, #tpu.memory_space<vmem>>, vector<8x1024xf32>
    %1 = arith.mulf %0, %0 : vector<8x1024xf32>
    %cst = arith.constant dense<0.000000e+00> : vector<8xf32>
    %2 = vector.multi_reduction <add>, %1, %cst [1] : vector<8x1024xf32> to vector<8xf32>
    %3 = vector.shape_cast %2 : vector<8xf32> to vector<8x1xf32>
    %cst_1 = arith.constant 1.000000e-30 : f32
    %4 = vector.broadcast %cst_1 : f32 to vector<8x1xf32>
    %5 = arith.maximumf %3, %4 : vector<8x1xf32>
    %6 = math.rsqrt %5 : vector<8x1xf32>
    %7 = vector.broadcast %6 : vector<8x1xf32> to vector<8x1024xf32>
    %8 = arith.mulf %0, %7 : vector<8x1024xf32>
    %9 = arith.truncf %8 : vector<8x1024xf32> to vector<8x1024xbf16>
    %c0_2 = arith.constant 0 : index
    %c0_3 = arith.constant 0 : index
    %10 = vector.load %arg2[%c0_2, %c0_3] : memref<1024x1024xbf16, #tpu.memory_space<vmem>>, vector<1024x1024xbf16>
    %cst_4 = arith.constant dense<0.000000e+00> : vector<8x1024xf32>
    %11 = tpu.matmul %9, %10, %cst_4 {dimension_numbers = #tpu.dot_dimension_numbers<[1], [0], [0], [1], [0, 0, 1, 1], [], []>} : vector<8x1024xbf16>, vector<1024x1024xbf16>, vector<8x1024xf32> -> vector<8x1024xf32>
    %12 = arith.mulf %11, %11 : vector<8x1024xf32>
    %13 = arith.truncf %12 : vector<8x1024xf32> to vector<8x1024xbf16>
    %c0_5 = arith.constant 0 : index
    %c0_6 = arith.constant 0 : index
    %14 = vector.load %arg3[%c0_5, %c0_6] : memref<1024x128xbf16, #tpu.memory_space<vmem>>, vector<1024x128xbf16>
    %cst_7 = arith.constant dense<0.000000e+00> : vector<8x128xf32>
    %15 = tpu.matmul %13, %14, %cst_7 {dimension_numbers = #tpu.dot_dimension_numbers<[1], [0], [0], [1], [0, 0, 1, 1], [], []>} : vector<8x1024xbf16>, vector<1024x128xbf16>, vector<8x128xf32> -> vector<8x128xf32>
    %c0_8 = arith.constant 0 : index
    %c0_9 = arith.constant 0 : index
    %16 = vector.load %arg4[%c0_8, %c0_9] : memref<8x128xf32, #tpu.memory_space<vmem>>, vector<8x128xf32>
    tpu.vector_store %arg4[%c0_8, %c0_9], %15 {strides = array<i32>} : memref<8x128xf32, #tpu.memory_space<vmem>>, vector<8x128xf32>,
    return
  }
  func.func @transform_0(%arg0: i32) -> (i32, i32) {
    %c0_i32 = arith.constant 0 : i32
    %c0_i32_0 = arith.constant 0 : i32
    return %arg0, %c0_i32 : i32, i32
  }
  func.func @transform_1(%arg0: i32) -> (i32, i32) {
    %c0_i32 = arith.constant 0 : i32
    %c0_i32_0 = arith.constant 0 : i32
    %c0_i32_1 = arith.constant 0 : i32
    return %c0_i32, %c0_i32_0 : i32, i32
  }
  func.func @transform_2(%arg0: i32) -> (i32, i32) {
    %c0_i32 = arith.constant 0 : i32
    %c0_i32_0 = arith.constant 0 : i32
    %c0_i32_1 = arith.constant 0 : i32
    return %c0_i32, %c0_i32_0 : i32, i32
  }
  func.func @transform_3(%arg0: i32) -> (i32, i32) {
    %c0_i32 = arith.constant 0 : i32
    %c0_i32_0 = arith.constant 0 : i32
    return %arg0, %c0_i32 : i32, i32
  }
}

</mosaic_0001>

<llo_original>
// kernel: tpu_custom_call.1
$region0: #{tpu_custom_call.1}
  #allocation0 [shape = 'u32[]', space=smem, size = 0x4, offset = 0x4, fixed_abs, tag = 'smem constant byte address 0x4 - core index']
  #allocation1 [shape = 'u32[144,128]{1,0:T(1,128)}', space=vmem, size = 0x12000, scoped, tag = 'internal scratch']
  %s0 = inlined_call_operand.hbm [shape: f32[8,1024], index: 0, kind: input, shape index: {}]
  %s1 = inlined_call_operand.hbm [shape: bf16[1024,1024], index: 1, kind: input, shape index: {}]
  %s2 = inlined_call_operand.hbm [shape: bf16[1024,128], index: 2, kind: input, shape index: {}]
  %s3 = inlined_call_operand.hbm [shape: f32[8,128], index: 3, kind: output, shape index: {}]
  %s4 = sld [smem:[#allocation0]]
  $region34: #{tpu_custom_call.1} parent=0
    _
  %s6 = ssub.s32 1, %s4
  %s7 = scalar_select 0, %s6, %s4
  $region1: #{tpu_custom_call.1} parent=0
    #allocation2 [shape = 'u8[32768]{0}', space=vmem, size = 0x8000, scoped, tag = 'input window, operand 0, single buffered']
    #allocation3 [shape = 's32[1]{0}', space=sflag, size = 0x4, scoped, tag = 'scoped memory for tpu_custom_call.1']
    #allocation4 [shape = 's32[1]{0}', space=sflag, size = 0x4, scoped, tag = 'scoped memory for tpu_custom_call.1']
    #allocation5 [shape = 'u8[2097152]{0}', space=vmem, size = 0x200000, scoped, tag = 'input window, operand 1, single buffered']
    #allocation6 [shape = 's32[1]{0}', space=sflag, size = 0x4, scoped, tag = 'scoped memory for tpu_custom_call.1']
    #allocation7 [shape = 'u8[262144]{0}', space=vmem, size = 0x40000, scoped, tag = 'input window, operand 2, single buffered']
    #allocation8 [shape = 'u8[4096]{0}', space=vmem, size = 0x1000, scoped, tag = 'output window, operand 0, single buffered']
    %8 = vsyncpa [#allocation3], 0
    %9 = vsyncpa [#allocation6], 0
    %10 = vsyncpa [#allocation4], 0
    // Predicated region
    $region2: #{tpu_custom_call.1} parent=1 // pred_check
      _
    $region3: #{tpu_custom_call.1} parent=1 // pred_check_branch
      %12 = sbr.rel (0) target = $region5
    $region4: #{tpu_custom_call.1} parent=1 // pred_region
      %s14 = ssub.s32 1024, 1024
      %15 = vsyncadd [#allocation3], %s14
      %s17 = sshll.u32 [#allocation2], 4
      %s18 = int_to_ptr.vmem [resolvable:$true] %s17
      %20 = dma.hbm_to_vmem [thread:$0]  %s0, 1024, %s18, [#allocation3]
    $region5: #{tpu_custom_call.1} parent=1 // pred_fallthru
      _
    // Predicated region
    $region6: #{tpu_custom_call.1} parent=1 // pred_check
      _
    $region7: #{tpu_custom_call.1} parent=1 // pred_check_branch
      %22 = sbr.rel (0) target = $region9
    $region8: #{tpu_custom_call.1} parent=1 // pred_region
      %s24 = ssub.s32 65536, 65536
      %25 = vsyncadd [#allocation6], %s24
      %s26 = sshll.u32 [#allocation5], 4
      %s27 = int_to_ptr.vmem [resolvable:$true] %s26
      %32 = dma.hbm_to_vmem [thread:$0]  %s1, 65536, %s27, [#allocation6], 512, 512, 32
    $region9: #{tpu_custom_call.1} parent=1 // pred_fallthru
      _
    // Predicated region
    $region10: #{tpu_custom_call.1} parent=1 // pred_check
      _
    $region11: #{tpu_custom_call.1} parent=1 // pred_check_branch
      %34 = sbr.rel (0) target = $region13
    $region12: #{tpu_custom_call.1} parent=1 // pred_region
      %s36 = ssub.s32 8192, 8192
      %37 = vsyncadd [#allocation6], %s36
      %s38 = sshll.u32 [#allocation7], 4
      %s39 = int_to_ptr.vmem [resolvable:$true] %s38
      %44 = dma.hbm_to_vmem [thread:$0]  %s2, 8192, %s39, [#allocation6], 64, 64, 4
    $region13: #{tpu_custom_call.1} parent=1 // pred_fallthru
      _
    // Predicated region
    $region14: #{tpu_custom_call.1} parent=1 // pred_check
      _
    $region15: #{tpu_custom_call.1} parent=1 // pred_check_branch
      %46 = sbr.rel (0) target = $region17
    $region16: #{tpu_custom_call.1} parent=1 // pred_region
      %47 = dma.done [#allocation3], 1024
    $region17: #{tpu_custom_call.1} parent=1 // pred_fallthru
      _
    // Predicated region
    $region18: #{tpu_custom_call.1} parent=1 // pred_check
      _
    $region19: #{tpu_custom_call.1} parent=1 // pred_check_branch
      %49 = sbr.rel (0) target = $region21
    $region20: #{tpu_custom_call.1} parent=1 // pred_region
      %50 = dma.done [#allocation6], 65536
    $region21: #{tpu_custom_call.1} parent=1 // pred_fallthru
      _
    // Predicated region
    $region22: #{tpu_custom_call.1} parent=1 // pred_check
      _
    $region23: #{tpu_custom_call.1} parent=1 // pred_check_branch
      %52 = sbr.rel (0) target = $region25
    $region24: #{tpu_custom_call.1} parent=1 // pred_region
      %53 = dma.done [#allocation6], 8192
    $region25: #{tpu_custom_call.1} parent=1 // pred_fallthru
      _
    %v55 = vld [vmem:[#allocation2] sm:$0xff]
    %v56 = vld [vmem:[#allocation2 + $0x8] sm:$0xff]
    %v57 = vld [vmem:[#allocation2 + $0x10] sm:$0xff]
    %v58 = vld [vmem:[#allocation2 + $0x18] sm:$0xff]
    %v59 = vld [vmem:[#allocation2 + $0x20] sm:$0xff]
    %v60 = vld [vmem:[#allocation2 + $0x28] sm:$0xff]
    %v61 = vld [vmem:[#allocation2 + $0x30] sm:$0xff]
    %v62 = vld [vmem:[#allocation2 + $0x38] sm:$0xff]
    %v63 = vmul.f32 %v55, %v55
    %v64 = vmul.f32 %v56, %v56
    %v65 = vmul.f32 %v57, %v57
    %v66 = vmul.f32 %v58, %v58
    %v67 = vmul.f32 %v59, %v59
    %v68 = vmul.f32 %v60, %v60
    %v69 = vmul.f32 %v61, %v61
    %v70 = vmul.f32 %v62, %v62
    %v71 = vadd.f32 %v63, %v64
    %v72 = vadd.f32 %v71, %v65
    %v73 = vadd.f32 %v72, %v66
    %v74 = vadd.f32 %v73, %v67
    %v75 = vadd.f32 %v74, %v68
    %v76 = vadd.f32 %v75, %v69
    %v77 = vadd.f32 %v76, %v70
    %78 = vadd.xlane.f32.xlu0 %v77
    %v79 = vpop.xlane.xlu0 %78
    %v80 = vmax.f32 %v79, 1e-30
    %v81 = vrsqrt.pop %v80
    %v82 = vmul.f32 %v55, %v81
    %v83 = vmul.f32 %v56, %v81
    %v84 = vmul.f32 %v57, %v81
    %v85 = vmul.f32 %v58, %v81
    %v86 = vmul.f32 %v59, %v81
    %v87 = vmul.f32 %v60, %v81
    %v88 = vmul.f32 %v61, %v81
    %v89 = vmul.f32 %v62, %v81
    %v90 = vpack.c.bf16 %v82, %v82
    %v91 = vpack.c.bf16 %v83, %v83
    %v92 = vpack.c.bf16 %v84, %v84
    %v93 = vpack.c.bf16 %v85, %v85
    %v94 = vpack.c.bf16 %v86, %v86
    %v95 = vpack.c.bf16 %v87, %v87
    %v96 = vpack.c.bf16 %v88, %v88
    %v97 = vpack.c.bf16 %v89, %v89
    %v98 = vld [vmem:[#allocation5] sm:$0xff]
    %v99 = vld [vmem:[#allocation5 + $0x8] sm:$0xff]
    %v100 = vld [vmem:[#allocation5 + $0x10] sm:$0xff]
    %v101 = vld [vmem:[#allocation5 + $0x18] sm:$0xff]
    %v102 = vld [vmem:[#allocation5 + $0x20] sm:$0xff]
    %v103 = vld [vmem:[#allocation5 + $0x28] sm:$0xff]
    %v104 = vld [vmem:[#allocation5 + $0x30] sm:$0xff]
    %v105 = vld [vmem:[#allocation5 + $0x38] sm:$0xff]
    %v106 = vld [vmem:[#allocation5 + $0x40] sm:$0xff]
    %v107 = vld [vmem:[#allocation5 + $0x48] sm:$0xff]
    %v108 = vld [vmem:[#allocation5 + $0x50] sm:$0xff]
    %v109 = vld [vmem:[#allocation5 + $0x58] sm:$0xff]
    %v110 = vld [vmem:[#allocation5 + $0x60] sm:$0xff]
    %v111 = vld [vmem:[#allocation5 + $0x68] sm:$0xff]
    %v112 = vld [vmem:[#allocation5 + $0x70] sm:$0xff]
    %v113 = vld [vmem:[#allocation5 + $0x78] sm:$0xff]
    %v114 = vld [vmem:[#allocation5 + $0x80] sm:$0xff]
    %v115 = vld [vmem:[#allocation5 + $0x88] sm:$0xff]
    %v116 = vld [vmem:[#allocation5 + $0x90] sm:$0xff]
    %v117 = vld [vmem:[#allocation5 + $0x98] sm:$0xff]
    %v118 = vld [vmem:[#allocation5 + $0xa0] sm:$0xff]
    %v119 = vld [vmem:[#allocation5 + $0xa8] sm:$0xff]
    %v120 = vld [vmem:[#allocation5 + $0xb0] sm:$0xff]
    %v121 = vld [vmem:[#allocation5 + $0xb8] sm:$0xff]
    %v122 = vld [vmem:[#allocation5 + $0xc0] sm:$0xff]
    %v123 = vld [vmem:[#allocation5 + $0xc8] sm:$0xff]
    %v124 = vld [vmem:[#allocation5 + $0xd0] sm:$0xff]
    %v125 = vld [vmem:[#allocation5 + $0xd8] sm:$0xff]
    %v126 = vld [vmem:[#allocation5 + $0xe0] sm:$0xff]
    %v127 = vld [vmem:[#allocation5 + $0xe8] sm:$0xff]
    %v128 = vld [vmem:[#allocation5 + $0xf0] sm:$0xff]
    %v129 = vld [vmem:[#allocation5 + $0xf8] sm:$0xff]
    %v130 = vld [vmem:[#allocation5 + $0x100] sm:$0xff]
    %v131 = vld [vmem:[#allocation5 + $0x108] sm:$0xff]
    %v132 = vld [vmem:[#allocation5 + $0x110] sm:$0xff]
    %v133 = vld [vmem:[#allocation5 + $0x118] sm:$0xff]
    %v134 = vld [vmem:[#allocation5 + $0x120] sm:$0xff]
    %v135 = vld [vmem:[#allocation5 + $0x128] sm:$0xff]
    %v136 = vld [vmem:[#allocation5 + $0x130] sm:$0xff]
    %v137 = vld [vmem:[#allocation5 + $0x138] sm:$0xff]
    %v138 = vld [vmem:[#allocation5 + $0x140] sm:$0xff]
    %v139 = vld [vmem:[#allocation5 + $0x148] sm:$0xff]
    %v140 = vld [vmem:[#allocation5 + $0x150] sm:$0xff]
    %v141 = vld [vmem:[#allocation5 + $0x158] sm:$0xff]
    %v142 = vld [vmem:[#allocation5 + $0x160] sm:$0xff]
    %v143 = vld [vmem:[#allocation5 + $0x168] sm:$0xff]
    %v144 = vld [vmem:[#allocation5 + $0x170] sm:$0xff]
    %v145 = vld [vmem:[#allocation5 + $0x178] sm:$0xff]
    %v146 = vld [vmem:[#allocation5 + $0x180] sm:$0xff]
    %v147 = vld [vmem:[#allocation5 + $0x188] sm:$0xff]
    %v148 = vld [vmem:[#allocation5 + $0x190] sm:$0xff]
    %v149 = vld [vmem:[#allocation5 + $0x198] sm:$0xff]
    %v150 = vld [vmem:[#allocation5 + $0x1a0] sm:$0xff]
    %v151 = vld [vmem:[#allocation5 + $0x1a8] sm:$0xff]
    %v152 = vld [vmem:[#allocation5 + $0x1b0] sm:$0xff]
    %v153 = vld [vmem:[#allocation5 + $0x1b8] sm:$0xff]
    %v154 = vld [vmem:[#allocation5 + $0x1c0] sm:$0xff]
    %v155 = vld [vmem:[#allocation5 + $0x1c8] sm:$0xff]
    %v156 = vld [vmem:[#allocation5 + $0x1d0] sm:$0xff]
    %v157 = vld [vmem:[#allocation5 + $0x1d8] sm:$0xff]
    %v158 = vld [vmem:[#allocation5 + $0x1e0] sm:$0xff]
    %v159 = vld [vmem:[#allocation5 + $0x1e8] sm:$0xff]
    %v160 = vld [vmem:[#allocation5 + $0x1f0] sm:$0xff]
    %v161 = vld [vmem:[#allocation5 + $0x1f8] sm:$0xff]
    %v162 = vld [vmem:[#allocation5 + $0x200] sm:$0xff]
    %v163 = vld [vmem:[#allocation5 + $0x208] sm:$0xff]
    %v164 = vld [vmem:[#allocation5 + $0x210] sm:$0xff]
    %v165 = vld [vmem:[#allocation5 + $0x218] sm:$0xff]
    %v166 = vld [vmem:[#allocation5 + $0x220] sm:$0xff]
    %v167 = vld [vmem:[#allocation5 + $0x228] sm:$0xff]
    %v168 = vld [vmem:[#allocation5 + $0x230] sm:$0xff]
    %v169 = vld [vmem:[#allocation5 + $0x238] sm:$0xff]
    %v170 = vld [vmem:[#allocation5 + $0x240] sm:$0xff]
    %v171 = vld [vmem:[#allocation5 + $0x248] sm:$0xff]
    %v172 = vld [vmem:[#allocation5 + $0x250] sm:$0xff]
    %v173 = vld [vmem:[#allocation5 + $0x258] sm:$0xff]
    %v174 = vld [vmem:[#allocation5 + $0x260] sm:$0xff]
    %v175 = vld [vmem:[#allocation5 + $0x268] sm:$0xff]
    %v176 = vld [vmem:[#allocation5 + $0x270] sm:$0xff]
    %v177 = vld [vmem:[#allocation5 + $0x278] sm:$0xff]
    %v178 = vld [vmem:[#allocation5 + $0x280] sm:$0xff]
    %v179 = vld [vmem:[#allocation5 + $0x288] sm:$0xff]
    %v180 = vld [vmem:[#allocation5 + $0x290] sm:$0xff]
    %v181 = vld [vmem:[#allocation5 + $0x298] sm:$0xff]
    %v182 = vld [vmem:[#allocation5 + $0x2a0] sm:$0xff]
    %v183 = vld [vmem:[#allocation5 + $0x2a8] sm:$0xff]
    %v184 = vld [vmem:[#allocation5 + $0x2b0] sm:$0xff]
    %v185 = vld [vmem:[#allocation5 + $0x2b8] sm:$0xff]
    %v186 = vld [vmem:[#allocation5 + $0x2c0] sm:$0xff]
    %v187 = vld [vmem:[#allocation5 + $0x2c8] sm:$0xff]
    %v188 = vld [vmem:[#allocation5 + $0x2d0] sm:$0xff]
    %v189 = vld [vmem:[#allocation5 + $0x2d8] sm:$0xff]
    %v190 = vld [vmem:[#allocation5 + $0x2e0] sm:$0xff]
    %v191 = vld [vmem:[#allocation5 + $0x2e8] sm:$0xff]
    %v192 = vld [vmem:[#allocation5 + $0x2f0] sm:$0xff]
    %v193 = vld [vmem:[#allocation5 + $0x2f8] sm:$0xff]
    %v194 = vld [vmem:[#allocation5 + $0x300] sm:$0xff]
    %v195 = vld [vmem:[#allocation5 + $0x308] sm:$0xff]
    %v196 = vld [vmem:[#allocation5 + $0x310] sm:$0xff]
    %v197 = vld [vmem:[#allocation5 + $0x318] sm:$0xff]
    %v198 = vld [vmem:[#allocation5 + $0x320] sm:$0xff]
    %v199 = vld [vmem:[#allocation5 + $0x328] sm:$0xff]
    %v200 = vld [vmem:[#allocation5 + $0x330] sm:$0xff]
    %v201 = vld [vmem:[#allocation5 + $0x338] sm:$0xff]
    %v202 = vld [vmem:[#allocation5 + $0x340] sm:$0xff]
    %v203 = vld [vmem:[#allocation5 + $0x348] sm:$0xff]
    %v204 = vld [vmem:[#allocation5 + $0x350] sm:$0xff]
    %v205 = vld [vmem:[#allocation5 + $0x358] sm:$0xff]
    %v206 = vld [vmem:[#allocation5 + $0x360] sm:$0xff]
    %v207 = vld [vmem:[#allocation5 + $0x368] sm:$0xff]
    %v208 = vld [vmem:[#allocation5 + $0x370] sm:$0xff]
    %v209 = vld [vmem:[#allocation5 + $0x378] sm:$0xff]
    %v210 = vld [vmem:[#allocation5 + $0x380] sm:$0xff]
    %v211 = vld [vmem:[#allocation5 + $0x388] sm:$0xff]
    %v212 = vld [vmem:[#allocation5 + $0x390] sm:$0xff]
    %v213 = vld [vmem:[#allocation5 + $0x398] sm:$0xff]
    %v214 = vld [vmem:[#allocation5 + $0x3a0] sm:$0xff]
    %v215 = vld [vmem:[#allocation5 + $0x3a8] sm:$0xff]
    %v216 = vld [vmem:[#allocation5 + $0x3b0] sm:$0xff]
    %v217 = vld [vmem:[#allocation5 + $0x3b8] sm:$0xff]
    %v218 = vld [vmem:[#allocation5 + $0x3c0] sm:$0xff]
    %v219 = vld [vmem:[#allocation5 + $0x3c8] sm:$0xff]
    %v220 = vld [vmem:[#allocation5 + $0x3d0] sm:$0xff]
    %v221 = vld [vmem:[#allocation5 + $0x3d8] sm:$0xff]
    %v222 = vld [vmem:[#allocation5 + $0x3e0] sm:$0xff]
    %v223 = vld [vmem:[#allocation5 + $0x3e8] sm:$0xff]
    %v224 = vld [vmem:[#allocation5 + $0x3f0] sm:$0xff]
    %v225 = vld [vmem:[#allocation5 + $0x3f8] sm:$0xff]
    %v226 = vld [vmem:[#allocation5 + $0x400] sm:$0xff]
    %v227 = vld [vmem:[#allocation5 + $0x408] sm:$0xff]
    %v228 = vld [vmem:[#allocation5 + $0x410] sm:$0xff]
    %v229 = vld [vmem:[#allocation5 + $0x418] sm:$0xff]
    %v230 = vld [vmem:[#allocation5 + $0x420] sm:$0xff]
    %v231 = vld [vmem:[#allocation5 + $0x428] sm:$0xff]
    %v232 = vld [vmem:[#allocation5 + $0x430] sm:$0xff]
    %v233 = vld [vmem:[#allocation5 + $0x438] sm:$0xff]
    %v234 = vld [vmem:[#allocation5 + $0x440] sm:$0xff]
    %v235 = vld [vmem:[#allocation5 + $0x448] sm:$0xff]
    %v236 = vld [vmem:[#allocation5 + $0x450] sm:$0xff]
    %v237 = vld [vmem:[#allocation5 + $0x458] sm:$0xff]
    %v238 = vld [vmem:[#allocation5 + $0x460] sm:$0xff]
    %v239 = vld [vmem:[#allocation5 + $0x468] sm:$0xff]
    %v240 = vld [vmem:[#allocation5 + $0x470] sm:$0xff]
    %v241 = vld [vmem:[#allocation5 + $0x478] sm:$0xff]
    %v242 = vld [vmem:[#allocation5 + $0x480] sm:$0xff]
    %v243 = vld [vmem:[#allocation5 + $0x488] sm:$0xff]
    %v244 = vld [vmem:[#allocation5 + $0x490] sm:$0xff]
    %v245 = vld [vmem:[#allocation5 + $0x498] sm:$0xff]
    %v246 = vld [vmem:[#allocation5 + $0x4a0] sm:$0xff]
    %v247 = vld [vmem:[#allocation5 + $0x4a8] sm:$0xff]
    %v248 = vld [vmem:[#allocation5 + $0x4b0] sm:$0xff]
    %v249 = vld [vmem:[#allocation5 + $0x4b8] sm:$0xff]
    %v250 = vld [vmem:[#allocation5 + $0x4c0] sm:$0xff]
    %v251 = vld [vmem:[#allocation5 + $0x4c8] sm:$0xff]
    %v252 = vld [vmem:[#allocation5 + $0x4d0] sm:$0xff]
    %v253 = vld [vmem:[#allocation5 + $0x4d8] sm:$0xff]
    %v254 = vld [vmem:[#allocation5 + $0x4e0] sm:$0xff]
    %v255 = vld [vmem:[#allocation5 + $0x4e8] sm:$0xff]
    %v256 = vld [vmem:[#allocation5 + $0x4f0] sm:$0xff]
    %v257 = vld [vmem:[#allocation5 + $0x4f8] sm:$0xff]
    %v258 = vld [vmem:[#allocation5 + $0x500] sm:$0xff]
    %v259 = vld [vmem:[#allocation5 + $0x508] sm:$0xff]
    %v260 = vld [vmem:[#allocation5 + $0x510] sm:$0xff]
    %v261 = vld [vmem:[#allocation5 + $0x518] sm:$0xff]
    %v262 = vld [vmem:[#allocation5 + $0x520] sm:$0xff]
    %v263 = vld [vmem:[#allocation5 + $0x528] sm:$0xff]
    %v264 = vld [vmem:[#allocation5 + $0x530] sm:$0xff]
    %v265 = vld [vmem:[#allocation5 + $0x538] sm:$0xff]
    %v266 = vld [vmem:[#allocation5 + $0x540] sm:$0xff]
    %v267 = vld [vmem:[#allocation5 + $0x548] sm:$0xff]
    %v268 = vld [vmem:[#allocation5 + $0x550] sm:$0xff]
    %v269 = vld [vmem:[#allocation5 + $0x558] sm:$0xff]
    %v270 = vld [vmem:[#allocation5 + $0x560] sm:$0xff]
    %v271 = vld [vmem:[#allocation5 + $0x568] sm:$0xff]
    %v272 = vld [vmem:[#allocation5 + $0x570] sm:$0xff]
    %v273 = vld [vmem:[#allocation5 + $0x578] sm:$0xff]
    %v274 = vld [vmem:[#allocation5 + $0x580] sm:$0xff]
    %v275 = vld [vmem:[#allocation5 + $0x588] sm:$0xff]
    %v276 = vld [vmem:[#allocation5 + $0x590] sm:$0xff]
    %v277 = vld [vmem:[#allocation5 + $0x598] sm:$0xff]
    %v278 = vld [vmem:[#allocation5 + $0x5a0] sm:$0xff]
    %v279 = vld [vmem:[#allocation5 + $0x5a8] sm:$0xff]
    %v280 = vld [vmem:[#allocation5 + $0x5b0] sm:$0xff]
    %v281 = vld [vmem:[#allocation5 + $0x5b8] sm:$0xff]
    %v282 = vld [vmem:[#allocation5 + $0x5c0] sm:$0xff]
    %v283 = vld [vmem:[#allocation5 + $0x5c8] sm:$0xff]
    %v284 = vld [vmem:[#allocation5 + $0x5d0] sm:$0xff]
    %v285 = vld [vmem:[#allocation5 + $0x5d8] sm:$0xff]
    %v286 = vld [vmem:[#allocation5 + $0x5e0] sm:$0xff]
    %v287 = vld [vmem:[#allocation5 + $0x5e8] sm:$0xff]
    %v288 = vld [vmem:[#allocation5 + $0x5f0] sm:$0xff]
    %v289 = vld [vmem:[#allocation5 + $0x5f8] sm:$0xff]
    %v290 = vld [vmem:[#allocation5 + $0x600] sm:$0xff]
    %v291 = vld [vmem:[#allocation5 + $0x608] sm:$0xff]
    %v292 = vld [vmem:[#allocation5 + $0x610] sm:$0xff]
    %v293 = vld [vmem:[#allocation5 + $0x618] sm:$0xff]
    %v294 = vld [vmem:[#allocation5 + $0x620] sm:$0xff]
    %v295 = vld [vmem:[#allocation5 + $0x628] sm:$0xff]
    %v296 = vld [vmem:[#allocation5 + $0x630] sm:$0xff]
    %v297 = vld [vmem:[#allocation5 + $0x638] sm:$0xff]
    %v298 = vld [vmem:[#allocation5 + $0x640] sm:$0xff]
    %v299 = vld [vmem:[#allocation5 + $0x648] sm:$0xff]
    %v300 = vld [vmem:[#allocation5 + $0x650] sm:$0xff]
    %v301 = vld [vmem:[#allocation5 + $0x658] sm:$0xff]
    %v302 = vld [vmem:[#allocation5 + $0x660] sm:$0xff]
    %v303 = vld [vmem:[#allocation5 + $0x668] sm:$0xff]
    %v304 = vld [vmem:[#allocation5 + $0x670] sm:$0xff]
    %v305 = vld [vmem:[#allocation5 + $0x678] sm:$0xff]
    %v306 = vld [vmem:[#allocation5 + $0x680] sm:$0xff]
    %v307 = vld [vmem:[#allocation5 + $0x688] sm:$0xff]
    %v308 = vld [vmem:[#allocation5 + $0x690] sm:$0xff]
    %v309 = vld [vmem:[#allocation5 + $0x698] sm:$0xff]
    %v310 = vld [vmem:[#allocation5 + $0x6a0] sm:$0xff]
    %v311 = vld [vmem:[#allocation5 + $0x6a8] sm:$0xff]
    %v312 = vld [vmem:[#allocation5 + $0x6b0] sm:$0xff]
    %v313 = vld [vmem:[#allocation5 + $0x6b8] sm:$0xff]
    %v314 = vld [vmem:[#allocation5 + $0x6c0] sm:$0xff]
    %v315 = vld [vmem:[#allocation5 + $0x6c8] sm:$0xff]
    %v316 = vld [vmem:[#allocation5 + $0x6d0] sm:$0xff]
    %v317 = vld [vmem:[#allocation5 + $0x6d8] sm:$0xff]
    %v318 = vld [vmem:[#allocation5 + $0x6e0] sm:$0xff]
    %v319 = vld [vmem:[#allocation5 + $0x6e8] sm:$0xff]
    %v320 = vld [vmem:[#allocation5 + $0x6f0] sm:$0xff]
    %v321 = vld [vmem:[#allocation5 + $0x6f8] sm:$0xff]
    %v322 = vld [vmem:[#allocation5 + $0x700] sm:$0xff]
    %v323 = vld [vmem:[#allocation5 + $0x708] sm:$0xff]
    %v324 = vld [vmem:[#allocation5 + $0x710] sm:$0xff]
    %v325 = vld [vmem:[#allocation5 + $0x718] sm:$0xff]
    %v326 = vld [vmem:[#allocation5 + $0x720] sm:$0xff]
    %v327 = vld [vmem:[#allocation5 + $0x728] sm:$0xff]
    %v328 = vld [vmem:[#allocation5 + $0x730] sm:$0xff]
    %v329 = vld [vmem:[#allocation5 + $0x738] sm:$0xff]
    %v330 = vld [vmem:[#allocation5 + $0x740] sm:$0xff]
    %v331 = vld [vmem:[#allocation5 + $0x748] sm:$0xff]
    %v332 = vld [vmem:[#allocation5 + $0x750] sm:$0xff]
    %v333 = vld [vmem:[#allocation5 + $0x758] sm:$0xff]
    %v334 = vld [vmem:[#allocation5 + $0x760] sm:$0xff]
    %v335 = vld [vmem:[#allocation5 + $0x768] sm:$0xff]
    %v336 = vld [vmem:[#allocation5 + $0x770] sm:$0xff]
    %v337 = vld [vmem:[#allocation5 + $0x778] sm:$0xff]
    %v338 = vld [vmem:[#allocation5 + $0x780] sm:$0xff]
    %v339 = vld [vmem:[#allocation5 + $0x788] sm:$0xff]
    %v340 = vld [vmem:[#allocation5 + $0x790] sm:$0xff]
    %v341 = vld [vmem:[#allocation5 + $0x798] sm:$0xff]
    %v342 = vld [vmem:[#allocation5 + $0x7a0] sm:$0xff]
    %v343 = vld [vmem:[#allocation5 + $0x7a8] sm:$0xff]
    %v344 = vld [vmem:[#allocation5 + $0x7b0] sm:$0xff]
    %v345 = vld [vmem:[#allocation5 + $0x7b8] sm:$0xff]
    %v346 = vld [vmem:[#allocation5 + $0x7c0] sm:$0xff]
    %v347 = vld [vmem:[#allocation5 + $0x7c8] sm:$0xff]
    %v348 = vld [vmem:[#allocation5 + $0x7d0] sm:$0xff]
    %v349 = vld [vmem:[#allocation5 + $0x7d8] sm:$0xff]
    %v350 = vld [vmem:[#allocation5 + $0x7e0] sm:$0xff]
    %v351 = vld [vmem:[#allocation5 + $0x7e8] sm:$0xff]
    %v352 = vld [vmem:[#allocation5 + $0x7f0] sm:$0xff]
    %v353 = vld [vmem:[#allocation5 + $0x7f8] sm:$0xff]
    %v354 = vld [vmem:[#allocation5 + $0x800] sm:$0xff]
    %v355 = vld [vmem:[#allocation5 + $0x808] sm:$0xff]
    %v356 = vld [vmem:[#allocation5 + $0x810] sm:$0xff]
    %v357 = vld [vmem:[#allocation5 + $0x818] sm:$0xff]
    %v358 = vld [vmem:[#allocation5 + $0x820] sm:$0xff]
    %v359 = vld [vmem:[#allocation5 + $0x828] sm:$0xff]
    %v360 = vld [vmem:[#allocation5 + $0x830] sm:$0xff]
    %v361 = vld [vmem:[#allocation5 + $0x838] sm:$0xff]
    %v362 = vld [vmem:[#allocation5 + $0x840] sm:$0xff]
    %v363 = vld [vmem:[#allocation5 + $0x848] sm:$0xff]
    %v364 = vld [vmem:[#allocation5 + $0x850] sm:$0xff]
    %v365 = vld [vmem:[#allocation5 + $0x858] sm:$0xff]
    %v366 = vld [vmem:[#allocation5 + $0x860] sm:$0xff]
    %v367 = vld [vmem:[#allocation5 + $0x868] sm:$0xff]
    %v368 = vld [vmem:[#allocation5 + $0x870] sm:$0xff]
    %v369 = vld [vmem:[#allocation5 + $0x878] sm:$0xff]
    %v370 = vld [vmem:[#allocation5 + $0x880] sm:$0xff]
    %v371 = vld [vmem:[#allocation5 + $0x888] sm:$0xff]
    %v372 = vld [vmem:[#allocation5 + $0x890] sm:$0xff]
    %v373 = vld [vmem:[#allocation5 + $0x898] sm:$0xff]
    %v374 = vld [vmem:[#allocation5 + $0x8a0] sm:$0xff]
    %v375 = vld [vmem:[#allocation5 + $0x8a8] sm:$0xff]
    %v376 = vld [vmem:[#allocation5 + $0x8b0] sm:$0xff]
    %v377 = vld [vmem:[#allocation5 + $0x8b8] sm:$0xff]
    %v378 = vld [vmem:[#allocation5 + $0x8c0] sm:$0xff]
    %v379 = vld [vmem:[#allocation5 + $0x8c8] sm:$0xff]
    %v380 = vld [vmem:[#allocation5 + $0x8d0] sm:$0xff]
    %v381 = vld [vmem:[#allocation5 + $0x8d8] sm:$0xff]
    %v382 = vld [vmem:[#allocation5 + $0x8e0] sm:$0xff]
    %v383 = vld [vmem:[#allocation5 + $0x8e8] sm:$0xff]
    %v384 = vld [vmem:[#allocation5 + $0x8f0] sm:$0xff]
    %v385 = vld [vmem:[#allocation5 + $0x8f8] sm:$0xff]
    %v386 = vld [vmem:[#allocation5 + $0x900] sm:$0xff]
    %v387 = vld [vmem:[#allocation5 + $0x908] sm:$0xff]
    %v388 = vld [vmem:[#allocation5 + $0x910] sm:$0xff]
    %v389 = vld [vmem:[#allocation5 + $0x918] sm:$0xff]
    %v390 = vld [vmem:[#allocation5 + $0x920] sm:$0xff]
    %v391 = vld [vmem:[#allocation5 + $0x928] sm:$0xff]
    %v392 = vld [vmem:[#allocation5 + $0x930] sm:$0xff]
    %v393 = vld [vmem:[#allocation5 + $0x938] sm:$0xff]
    %v394 = vld [vmem:[#allocation5 + $0x940] sm:$0xff]
    %v395 = vld [vmem:[#allocation5 + $0x948] sm:$0xff]
    %v396 = vld [vmem:[#allocation5 + $0x950] sm:$0xff]
    %v397 = vld [vmem:[#allocation5 + $0x958] sm:$0xff]
    %v398 = vld [vmem:[#allocation5 + $0x960] sm:$0xff]
    %v399 = vld [vmem:[#allocation5 + $0x968] sm:$0xff]
    %v400 = vld [vmem:[#allocation5 + $0x970] sm:$0xff]
    %v401 = vld [vmem:[#allocation5 + $0x978] sm:$0xff]
    %v402 = vld [vmem:[#allocation5 + $0x980] sm:$0xff]
    %v403 = vld [vmem:[#allocation5 + $0x988] sm:$0xff]
    %v404 = vld [vmem:[#allocation5 + $0x990] sm:$0xff]
    %v405 = vld [vmem:[#allocation5 + $0x998] sm:$0xff]
    %v406 = vld [vmem:[#allocation5 + $0x9a0] sm:$0xff]
    %v407 = vld [vmem:[#allocation5 + $0x9a8] sm:$0xff]
    %v408 = vld [vmem:[#allocation5 + $0x9b0] sm:$0xff]
    %v409 = vld [vmem:[#allocation5 + $0x9b8] sm:$0xff]
    %v410 = vld [vmem:[#allocation5 + $0x9c0] sm:$0xff]
    %v411 = vld [vmem:[#allocation5 + $0x9c8] sm:$0xff]
    %v412 = vld [vmem:[#allocation5 + $0x9d0] sm:$0xff]
    %v413 = vld [vmem:[#allocation5 + $0x9d8] sm:$0xff]
    %v414 = vld [vmem:[#allocation5 + $0x9e0] sm:$0xff]
    %v415 = vld [vmem:[#allocation5 + $0x9e8] sm:$0xff]
    %v416 = vld [vmem:[#allocation5 + $0x9f0] sm:$0xff]
    %v417 = vld [vmem:[#allocation5 + $0x9f8] sm:$0xff]
    %v418 = vld [vmem:[#allocation5 + $0xa00] sm:$0xff]
    %v419 = vld [vmem:[#allocation5 + $0xa08] sm:$0xff]
    %v420 = vld [vmem:[#allocation5 + $0xa10] sm:$0xff]
    %v421 = vld [vmem:[#allocation5 + $0xa18] sm:$0xff]
    %v422 = vld [vmem:[#allocation5 + $0xa20] sm:$0xff]
    %v423 = vld [vmem:[#allocation5 + $0xa28] sm:$0xff]
    %v424 = vld [vmem:[#allocation5 + $0xa30] sm:$0xff]
    %v425 = vld [vmem:[#allocation5 + $0xa38] sm:$0xff]
    %v426 = vld [vmem:[#allocation5 + $0xa40] sm:$0xff]
    %v427 = vld [vmem:[#allocation5 + $0xa48] sm:$0xff]
    %v428 = vld [vmem:[#allocation5 + $0xa50] sm:$0xff]
    %v429 = vld [vmem:[#allocation5 + $0xa58] sm:$0xff]
    %v430 = vld [vmem:[#allocation5 + $0xa60] sm:$0xff]
    %v431 = vld [vmem:[#allocation5 + $0xa68] sm:$0xff]
    %v432 = vld [vmem:[#allocation5 + $0xa70] sm:$0xff]
    %v433 = vld [vmem:[#allocation5 + $0xa78] sm:$0xff]
    %v434 = vld [vmem:[#allocation5 + $0xa80] sm:$0xff]
    %v435 = vld [vmem:[#allocation5 + $0xa88] sm:$0xff]
    %v436 = vld [vmem:[#allocation5 + $0xa90] sm:$0xff]
    %v437 = vld [vmem:[#allocation5 + $0xa98] sm:$0xff]
    %v438 = vld [vmem:[#allocation5 + $0xaa0] sm:$0xff]
    %v439 = vld [vmem:[#allocation5 + $0xaa8] sm:$0xff]
    %v440 = vld [vmem:[#allocation5 + $0xab0] sm:$0xff]
    %v441 = vld [vmem:[#allocation5 + $0xab8] sm:$0xff]
    %v442 = vld [vmem:[#allocation5 + $0xac0] sm:$0xff]
    %v443 = vld [vmem:[#allocation5 + $0xac8] sm:$0xff]
    %v444 = vld [vmem:[#allocation5 + $0xad0] sm:$0xff]
    %v445 = vld [vmem:[#allocation5 + $0xad8] sm:$0xff]
    %v446 = vld [vmem:[#allocation5 + $0xae0] sm:$0xff]
    %v447 = vld [vmem:[#allocation5 + $0xae8] sm:$0xff]
    %v448 = vld [vmem:[#allocation5 + $0xaf0] sm:$0xff]
    %v449 = vld [vmem:[#allocation5 + $0xaf8] sm:$0xff]
    %v450 = vld [vmem:[#allocation5 + $0xb00] sm:$0xff]
    %v451 = vld [vmem:[#allocation5 + $0xb08] sm:$0xff]
    %v452 = vld [vmem:[#allocation5 + $0xb10] sm:$0xff]
    %v453 = vld [vmem:[#allocation5 + $0xb18] sm:$0xff]
    %v454 = vld [vmem:[#allocation5 + $0xb20] sm:$0xff]
    %v455 = vld [vmem:[#allocation5 + $0xb28] sm:$0xff]
    %v456 = vld [vmem:[#allocation5 + $0xb30] sm:$0xff]
    %v457 = vld [vmem:[#allocation5 + $0xb38] sm:$0xff]
    %v458 = vld [vmem:[#allocation5 + $0xb40] sm:$0xff]
    %v459 = vld [vmem:[#allocation5 + $0xb48] sm:$0xff]
    %v460 = vld [vmem:[#allocation5 + $0xb50] sm:$0xff]
    %v461 = vld [vmem:[#allocation5 + $0xb58] sm:$0xff]
    %v462 = vld [vmem:[#allocation5 + $0xb60] sm:$0xff]
    %v463 = vld [vmem:[#allocation5 + $0xb68] sm:$0xff]
    %v464 = vld [vmem:[#allocation5 + $0xb70] sm:$0xff]
    %v465 = vld [vmem:[#allocation5 + $0xb78] sm:$0xff]
    %v466 = vld [vmem:[#allocation5 + $0xb80] sm:$0xff]
    %v467 = vld [vmem:[#allocation5 + $0xb88] sm:$0xff]
    %v468 = vld [vmem:[#allocation5 + $0xb90] sm:$0xff]
    %v469 = vld [vmem:[#allocation5 + $0xb98] sm:$0xff]
    %v470 = vld [vmem:[#allocation5 + $0xba0] sm:$0xff]
    %v471 = vld [vmem:[#allocation5 + $0xba8] sm:$0xff]
    %v472 = vld [vmem:[#allocation5 + $0xbb0] sm:$0xff]
    %v473 = vld [vmem:[#allocation5 + $0xbb8] sm:$0xff]
    %v474 = vld [vmem:[#allocation5 + $0xbc0] sm:$0xff]
    %v475 = vld [vmem:[#allocation5 + $0xbc8] sm:$0xff]
    %v476 = vld [vmem:[#allocation5 + $0xbd0] sm:$0xff]
    %v477 = vld [vmem:[#allocation5 + $0xbd8] sm:$0xff]
    %v478 = vld [vmem:[#allocation5 + $0xbe0] sm:$0xff]
    %v479 = vld [vmem:[#allocation5 + $0xbe8] sm:$0xff]
    %v480 = vld [vmem:[#allocation5 + $0xbf0] sm:$0xff]
    %v481 = vld [vmem:[#allocation5 + $0xbf8] sm:$0xff]
    %v482 = vld [vmem:[#allocation5 + $0xc00] sm:$0xff]
    %v483 = vld [vmem:[#allocation5 + $0xc08] sm:$0xff]
    %v484 = vld [vmem:[#allocation5 + $0xc10] sm:$0xff]
    %v485 = vld [vmem:[#allocation5 + $0xc18] sm:$0xff]
    %v486 = vld [vmem:[#allocation5 + $0xc20] sm:$0xff]
    %v487 = vld [vmem:[#allocation5 + $0xc28] sm:$0xff]
    %v488 = vld [vmem:[#allocation5 + $0xc30] sm:$0xff]
    %v489 = vld [vmem:[#allocation5 + $0xc38] sm:$0xff]
    %v490 = vld [vmem:[#allocation5 + $0xc40] sm:$0xff]
    %v491 = vld [vmem:[#allocation5 + $0xc48] sm:$0xff]
    %v492 = vld [vmem:[#allocation5 + $0xc50] sm:$0xff]
    %v493 = vld [vmem:[#allocation5 + $0xc58] sm:$0xff]
    %v494 = vld [vmem:[#allocation5 + $0xc60] sm:$0xff]
    %v495 = vld [vmem:[#allocation5 + $0xc68] sm:$0xff]
    %v496 = vld [vmem:[#allocation5 + $0xc70] sm:$0xff]
    %v497 = vld [vmem:[#allocation5 + $0xc78] sm:$0xff]
    %v498 = vld [vmem:[#allocation5 + $0xc80] sm:$0xff]
    %v499 = vld [vmem:[#allocation5 + $0xc88] sm:$0xff]
    %v500 = vld [vmem:[#allocation5 + $0xc90] sm:$0xff]
    %v501 = vld [vmem:[#allocation5 + $0xc98] sm:$0xff]
    %v502 = vld [vmem:[#allocation5 + $0xca0] sm:$0xff]
    %v503 = vld [vmem:[#allocation5 + $0xca8] sm:$0xff]
    %v504 = vld [vmem:[#allocation5 + $0xcb0] sm:$0xff]
    %v505 = vld [vmem:[#allocation5 + $0xcb8] sm:$0xff]
    %v506 = vld [vmem:[#allocation5 + $0xcc0] sm:$0xff]
    %v507 = vld [vmem:[#allocation5 + $0xcc8] sm:$0xff]
    %v508 = vld [vmem:[#allocation5 + $0xcd0] sm:$0xff]
    %v509 = vld [vmem:[#allocation5 + $0xcd8] sm:$0xff]
    %v510 = vld [vmem:[#allocation5 + $0xce0] sm:$0xff]
    %v511 = vld [vmem:[#allocation5 + $0xce8] sm:$0xff]
    %v512 = vld [vmem:[#allocation5 + $0xcf0] sm:$0xff]
    %v513 = vld [vmem:[#allocation5 + $0xcf8] sm:$0xff]
    %v514 = vld [vmem:[#allocation5 + $0xd00] sm:$0xff]
    %v515 = vld [vmem:[#allocation5 + $0xd08] sm:$0xff]
    %v516 = vld [vmem:[#allocation5 + $0xd10] sm:$0xff]
    %v517 = vld [vmem:[#allocation5 + $0xd18] sm:$0xff]
    %v518 = vld [vmem:[#allocation5 + $0xd20] sm:$0xff]
    %v519 = vld [vmem:[#allocation5 + $0xd28] sm:$0xff]
    %v520 = vld [vmem:[#allocation5 + $0xd30] sm:$0xff]
    %v521 = vld [vmem:[#allocation5 + $0xd38] sm:$0xff]
    %v522 = vld [vmem:[#allocation5 + $0xd40] sm:$0xff]
    %v523 = vld [vmem:[#allocation5 + $0xd48] sm:$0xff]
    %v524 = vld [vmem:[#allocation5 + $0xd50] sm:$0xff]
    %v525 = vld [vmem:[#allocation5 + $0xd58] sm:$0xff]
    %v526 = vld [vmem:[#allocation5 + $0xd60] sm:$0xff]
    %v527 = vld [vmem:[#allocation5 + $0xd68] sm:$0xff]
    %v528 = vld [vmem:[#allocation5 + $0xd70] sm:$0xff]
    %v529 = vld [vmem:[#allocation5 + $0xd78] sm:$0xff]
    %v530 = vld [vmem:[#allocation5 + $0xd80] sm:$0xff]
    %v531 = vld [vmem:[#allocation5 + $0xd88] sm:$0xff]
    %v532 = vld [vmem:[#allocation5 + $0xd90] sm:$0xff]
    %v533 = vld [vmem:[#allocation5 + $0xd98] sm:$0xff]
    %v534 = vld [vmem:[#allocation5 + $0xda0] sm:$0xff]
    %v535 = vld [vmem:[#allocation5 + $0xda8] sm:$0xff]
    %v536 = vld [vmem:[#allocation5 + $0xdb0] sm:$0xff]
    %v537 = vld [vmem:[#allocation5 + $0xdb8] sm:$0xff]
    %v538 = vld [vmem:[#allocation5 + $0xdc0] sm:$0xff]
    %v539 = vld [vmem:[#allocation5 + $0xdc8] sm:$0xff]
    %v540 = vld [vmem:[#allocation5 + $0xdd0] sm:$0xff]
    %v541 = vld [vmem:[#allocation5 + $0xdd8] sm:$0xff]
    %v542 = vld [vmem:[#allocation5 + $0xde0] sm:$0xff]
    %v543 = vld [vmem:[#allocation5 + $0xde8] sm:$0xff]
    %v544 = vld [vmem:[#allocation5 + $0xdf0] sm:$0xff]
    %v545 = vld [vmem:[#allocation5 + $0xdf8] sm:$0xff]
    %v546 = vld [vmem:[#allocation5 + $0xe00] sm:$0xff]
    %v547 = vld [vmem:[#allocation5 + $0xe08] sm:$0xff]
    %v548 = vld [vmem:[#allocation5 + $0xe10] sm:$0xff]
    %v549 = vld [vmem:[#allocation5 + $0xe18] sm:$0xff]
    %v550 = vld [vmem:[#allocation5 + $0xe20] sm:$0xff]
    %v551 = vld [vmem:[#allocation5 + $0xe28] sm:$0xff]
    %v552 = vld [vmem:[#allocation5 + $0xe30] sm:$0xff]
    %v553 = vld [vmem:[#allocation5 + $0xe38] sm:$0xff]
    %v554 = vld [vmem:[#allocation5 + $0xe40] sm:$0xff]
    %v555 = vld [vmem:[#allocation5 + $0xe48] sm:$0xff]
    %v556 = vld [vmem:[#allocation5 + $0xe50] sm:$0xff]
    %v557 = vld [vmem:[#allocation5 + $0xe58] sm:$0xff]
    %v558 = vld [vmem:[#allocation5 + $0xe60] sm:$0xff]
    %v559 = vld [vmem:[#allocation5 + $0xe68] sm:$0xff]
    %v560 = vld [vmem:[#allocation5 + $0xe70] sm:$0xff]
    %v561 = vld [vmem:[#allocation5 + $0xe78] sm:$0xff]
    %v562 = vld [vmem:[#allocation5 + $0xe80] sm:$0xff]
    %v563 = vld [vmem:[#allocation5 + $0xe88] sm:$0xff]
    %v564 = vld [vmem:[#allocation5 + $0xe90] sm:$0xff]
    %v565 = vld [vmem:[#allocation5 + $0xe98] sm:$0xff]
    %v566 = vld [vmem:[#allocation5 + $0xea0] sm:$0xff]
    %v567 = vld [vmem:[#allocation5 + $0xea8] sm:$0xff]
    %v568 = vld [vmem:[#allocation5 + $0xeb0] sm:$0xff]
    %v569 = vld [vmem:[#allocation5 + $0xeb8] sm:$0xff]
    %v570 = vld [vmem:[#allocation5 + $0xec0] sm:$0xff]
    %v571 = vld [vmem:[#allocation5 + $0xec8] sm:$0xff]
    %v572 = vld [vmem:[#allocation5 + $0xed0] sm:$0xff]
    %v573 = vld [vmem:[#allocation5 + $0xed8] sm:$0xff]
    %v574 = vld [vmem:[#allocation5 + $0xee0] sm:$0xff]
    %v575 = vld [vmem:[#allocation5 + $0xee8] sm:$0xff]
    %v576 = vld [vmem:[#allocation5 + $0xef0] sm:$0xff]
    %v577 = vld [vmem:[#allocation5 + $0xef8] sm:$0xff]
    %v578 = vld [vmem:[#allocation5 + $0xf00] sm:$0xff]
    %v579 = vld [vmem:[#allocation5 + $0xf08] sm:$0xff]
    %v580 = vld [vmem:[#allocation5 + $0xf10] sm:$0xff]
    %v581 = vld [vmem:[#allocation5 + $0xf18] sm:$0xff]
    %v582 = vld [vmem:[#allocation5 + $0xf20] sm:$0xff]
    %v583 = vld [vmem:[#allocation5 + $0xf28] sm:$0xff]
    %v584 = vld [vmem:[#allocation5 + $0xf30] sm:$0xff]
    %v585 = vld [vmem:[#allocation5 + $0xf38] sm:$0xff]
    %v586 = vld [vmem:[#allocation5 + $0xf40] sm:$0xff]
    %v587 = vld [vmem:[#allocation5 + $0xf48] sm:$0xff]
    %v588 = vld [vmem:[#allocation5 + $0xf50] sm:$0xff]
    %v589 = vld [vmem:[#allocation5 + $0xf58] sm:$0xff]
    %v590 = vld [vmem:[#allocation5 + $0xf60] sm:$0xff]
    %v591 = vld [vmem:[#allocation5 + $0xf68] sm:$0xff]
    %v592 = vld [vmem:[#allocation5 + $0xf70] sm:$0xff]
    %v593 = vld [vmem:[#allocation5 + $0xf78] sm:$0xff]
    %v594 = vld [vmem:[#allocation5 + $0xf80] sm:$0xff]
    %v595 = vld [vmem:[#allocation5 + $0xf88] sm:$0xff]
    %v596 = vld [vmem:[#allocation5 + $0xf90] sm:$0xff]
    %v597 = vld [vmem:[#allocation5 + $0xf98] sm:$0xff]
    %v598 = vld [vmem:[#allocation5 + $0xfa0] sm:$0xff]
    %v599 = vld [vmem:[#allocation5 + $0xfa8] sm:$0xff]
    %v600 = vld [vmem:[#allocation5 + $0xfb0] sm:$0xff]
    %v601 = vld [vmem:[#allocation5 + $0xfb8] sm:$0xff]
    %v602 = vld [vmem:[#allocation5 + $0xfc0] sm:$0xff]
    %v603 = vld [vmem:[#allocation5 + $0xfc8] sm:$0xff]
    %v604 = vld [vmem:[#allocation5 + $0xfd0] sm:$0xff]
    %v605 = vld [vmem:[#allocation5 + $0xfd8] sm:$0xff]
    %v606 = vld [vmem:[#allocation5 + $0xfe0] sm:$0xff]
    %v607 = vld [vmem:[#allocation5 + $0xfe8] sm:$0xff]
    %v608 = vld [vmem:[#allocation5 + $0xff0] sm:$0xff]
    %v609 = vld [vmem:[#allocation5 + $0xff8] sm:$0xff]
    %v1122 = vunpack.c.l.b16 %v98
    %v1123 = vunpack.c.h.b16 %v98
    %v1124 = vunpack.c.l.b16 %v99
    %v1125 = vunpack.c.h.b16 %v99
    %v1126 = vunpack.c.l.b16 %v100
    %v1127 = vunpack.c.h.b16 %v100
    %v1128 = vunpack.c.l.b16 %v101
    %v1129 = vunpack.c.h.b16 %v101
    %v1130 = vunpack.c.l.b16 %v102
    %v1131 = vunpack.c.h.b16 %v102
    %v1132 = vunpack.c.l.b16 %v103
    %v1133 = vunpack.c.h.b16 %v103
    %v1134 = vunpack.c.l.b16 %v104
    %v1135 = vunpack.c.h.b16 %v104
    %v1136 = vunpack.c.l.b16 %v105
    %v1137 = vunpack.c.h.b16 %v105
    %v1138 = vunpack.c.l.b16 %v106
    %v1139 = vunpack.c.h.b16 %v106
    %v1140 = vunpack.c.l.b16 %v107
    %v1141 = vunpack.c.h.b16 %v107
    %v1142 = vunpack.c.l.b16 %v108
    %v1143 = vunpack.c.h.b16 %v108
    %v1144 = vunpack.c.l.b16 %v109
    %v1145 = vunpack.c.h.b16 %v109
    %v1146 = vunpack.c.l.b16 %v110
    %v1147 = vunpack.c.h.b16 %v110
    %v1148 = vunpack.c.l.b16 %v111
    %v1149 = vunpack.c.h.b16 %v111
    %v1150 = vunpack.c.l.b16 %v112
    %v1151 = vunpack.c.h.b16 %v112
    %v1152 = vunpack.c.l.b16 %v113
    %v1153 = vunpack.c.h.b16 %v113
    %v1154 = vunpack.c.l.b16 %v114
    %v1155 = vunpack.c.h.b16 %v114
    %v1156 = vunpack.c.l.b16 %v115
    %v1157 = vunpack.c.h.b16 %v115
    %v1158 = vunpack.c.l.b16 %v116
    %v1159 = vunpack.c.h.b16 %v116
    %v1160 = vunpack.c.l.b16 %v117
    %v1161 = vunpack.c.h.b16 %v117
    %v1162 = vunpack.c.l.b16 %v118
    %v1163 = vunpack.c.h.b16 %v118
    %v1164 = vunpack.c.l.b16 %v119
    %v1165 = vunpack.c.h.b16 %v119
    %v1166 = vunpack.c.l.b16 %v120
    %v1167 = vunpack.c.h.b16 %v120
    %v1168 = vunpack.c.l.b16 %v121
    %v1169 = vunpack.c.h.b16 %v121
    %v1170 = vunpack.c.l.b16 %v122
    %v1171 = vunpack.c.h.b16 %v122
    %v1172 = vunpack.c.l.b16 %v123
    %v1173 = vunpack.c.h.b16 %v123
    %v1174 = vunpack.c.l.b16 %v124
    %v1175 = vunpack.c.h.b16 %v124
    %v1176 = vunpack.c.l.b16 %v125
    %v1177 = vunpack.c.h.b16 %v125
    %v1178 = vunpack.c.l.b16 %v126
    %v1179 = vunpack.c.h.b16 %v126
    %v1180 = vunpack.c.l.b16 %v127
    %v1181 = vunpack.c.h.b16 %v127
    %v1182 = vunpack.c.l.b16 %v128
    %v1183 = vunpack.c.h.b16 %v128
    %v1184 = vunpack.c.l.b16 %v129
    %v1185 = vunpack.c.h.b16 %v129
    %v1186 = vunpack.c.l.b16 %v130
    %v1187 = vunpack.c.h.b16 %v130
    %v1188 = vunpack.c.l.b16 %v131
    %v1189 = vunpack.c.h.b16 %v131
    %v1190 = vunpack.c.l.b16 %v132
    %v1191 = vunpack.c.h.b16 %v132
    %v1192 = vunpack.c.l.b16 %v133
    %v1193 = vunpack.c.h.b16 %v133
    %v1194 = vunpack.c.l.b16 %v134
    %v1195 = vunpack.c.h.b16 %v134
    %v1196 = vunpack.c.l.b16 %v135
    %v1197 = vunpack.c.h.b16 %v135
    %v1198 = vunpack.c.l.b16 %v136
    %v1199 = vunpack.c.h.b16 %v136
    %v1200 = vunpack.c.l.b16 %v137
    %v1201 = vunpack.c.h.b16 %v137
    %v1202 = vunpack.c.l.b16 %v138
    %v1203 = vunpack.c.h.b16 %v138
    %v1204 = vunpack.c.l.b16 %v139
    %v1205 = vunpack.c.h.b16 %v139
    %v1206 = vunpack.c.l.b16 %v140
    %v1207 = vunpack.c.h.b16 %v140
    %v1208 = vunpack.c.l.b16 %v141
    %v1209 = vunpack.c.h.b16 %v141
    %v1210 = vunpack.c.l.b16 %v142
    %v1211 = vunpack.c.h.b16 %v142
    %v1212 = vunpack.c.l.b16 %v143
    %v1213 = vunpack.c.h.b16 %v143
    %v1214 = vunpack.c.l.b16 %v144
    %v1215 = vunpack.c.h.b16 %v144
    %v1216 = vunpack.c.l.b16 %v145
    %v1217 = vunpack.c.h.b16 %v145
    %v1218 = vunpack.c.l.b16 %v146
    %v1219 = vunpack.c.h.b16 %v146
    %v1220 = vunpack.c.l.b16 %v147
    %v1221 = vunpack.c.h.b16 %v147
    %v1222 = vunpack.c.l.b16 %v148
    %v1223 = vunpack.c.h.b16 %v148
    %v1224 = vunpack.c.l.b16 %v149
    %v1225 = vunpack.c.h.b16 %v149
    %v1226 = vunpack.c.l.b16 %v150
    %v1227 = vunpack.c.h.b16 %v150
    %v1228 = vunpack.c.l.b16 %v151
    %v1229 = vunpack.c.h.b16 %v151
    %v1230 = vunpack.c.l.b16 %v152
    %v1231 = vunpack.c.h.b16 %v152
    %v1232 = vunpack.c.l.b16 %v153
    %v1233 = vunpack.c.h.b16 %v153
    %v1234 = vunpack.c.l.b16 %v154
    %v1235 = vunpack.c.h.b16 %v154
    %v1236 = vunpack.c.l.b16 %v155
    %v1237 = vunpack.c.h.b16 %v155
    %v1238 = vunpack.c.l.b16 %v156
    %v1239 = vunpack.c.h.b16 %v156
    %v1240 = vunpack.c.l.b16 %v157
    %v1241 = vunpack.c.h.b16 %v157
    %v1242 = vunpack.c.l.b16 %v158
    %v1243 = vunpack.c.h.b16 %v158
    %v1244 = vunpack.c.l.b16 %v159
    %v1245 = vunpack.c.h.b16 %v159
    %v1246 = vunpack.c.l.b16 %v160
    %v1247 = vunpack.c.h.b16 %v160
    %v1248 = vunpack.c.l.b16 %v161
    %v1249 = vunpack.c.h.b16 %v161
    %v1250 = vunpack.c.l.b16 %v162
    %v1251 = vunpack.c.h.b16 %v162
    %v1252 = vunpack.c.l.b16 %v163
    %v1253 = vunpack.c.h.b16 %v163
    %v1254 = vunpack.c.l.b16 %v164
    %v1255 = vunpack.c.h.b16 %v164
    %v1256 = vunpack.c.l.b16 %v165
    %v1257 = vunpack.c.h.b16 %v165
    %v1258 = vunpack.c.l.b16 %v166
    %v1259 = vunpack.c.h.b16 %v166
    %v1260 = vunpack.c.l.b16 %v167
    %v1261 = vunpack.c.h.b16 %v167
    %v1262 = vunpack.c.l.b16 %v168
    %v1263 = vunpack.c.h.b16 %v168
    %v1264 = vunpack.c.l.b16 %v169
    %v1265 = vunpack.c.h.b16 %v169
    %v1266 = vunpack.c.l.b16 %v170
    %v1267 = vunpack.c.h.b16 %v170
    %v1268 = vunpack.c.l.b16 %v171
    %v1269 = vunpack.c.h.b16 %v171
    %v1270 = vunpack.c.l.b16 %v172
    %v1271 = vunpack.c.h.b16 %v172
    %v1272 = vunpack.c.l.b16 %v173
    %v1273 = vunpack.c.h.b16 %v173
    %v1274 = vunpack.c.l.b16 %v174
    %v1275 = vunpack.c.h.b16 %v174
    %v1276 = vunpack.c.l.b16 %v175
    %v1277 = vunpack.c.h.b16 %v175
    %v1278 = vunpack.c.l.b16 %v176
    %v1279 = vunpack.c.h.b16 %v176
    %v1280 = vunpack.c.l.b16 %v177
    %v1281 = vunpack.c.h.b16 %v177
    %v1282 = vunpack.c.l.b16 %v178
    %v1283 = vunpack.c.h.b16 %v178
    %v1284 = vunpack.c.l.b16 %v179
    %v1285 = vunpack.c.h.b16 %v179
    %v1286 = vunpack.c.l.b16 %v180
    %v1287 = vunpack.c.h.b16 %v180
    %v1288 = vunpack.c.l.b16 %v181
    %v1289 = vunpack.c.h.b16 %v181
    %v1290 = vunpack.c.l.b16 %v182
    %v1291 = vunpack.c.h.b16 %v182
    %v1292 = vunpack.c.l.b16 %v183
    %v1293 = vunpack.c.h.b16 %v183
    %v1294 = vunpack.c.l.b16 %v184
    %v1295 = vunpack.c.h.b16 %v184
    %v1296 = vunpack.c.l.b16 %v185
    %v1297 = vunpack.c.h.b16 %v185
    %v1298 = vunpack.c.l.b16 %v186
    %v1299 = vunpack.c.h.b16 %v186
    %v1300 = vunpack.c.l.b16 %v187
    %v1301 = vunpack.c.h.b16 %v187
    %v1302 = vunpack.c.l.b16 %v188
    %v1303 = vunpack.c.h.b16 %v188
    %v1304 = vunpack.c.l.b16 %v189
    %v1305 = vunpack.c.h.b16 %v189
    %v1306 = vunpack.c.l.b16 %v190
    %v1307 = vunpack.c.h.b16 %v190
    %v1308 = vunpack.c.l.b16 %v191
    %v1309 = vunpack.c.h.b16 %v191
    %v1310 = vunpack.c.l.b16 %v192
    %v1311 = vunpack.c.h.b16 %v192
    %v1312 = vunpack.c.l.b16 %v193
    %v1313 = vunpack.c.h.b16 %v193
    %v1314 = vunpack.c.l.b16 %v194
    %v1315 = vunpack.c.h.b16 %v194
    %v1316 = vunpack.c.l.b16 %v195
    %v1317 = vunpack.c.h.b16 %v195
    %v1318 = vunpack.c.l.b16 %v196
    %v1319 = vunpack.c.h.b16 %v196
    %v1320 = vunpack.c.l.b16 %v197
    %v1321 = vunpack.c.h.b16 %v197
    %v1322 = vunpack.c.l.b16 %v198
    %v1323 = vunpack.c.h.b16 %v198
    %v1324 = vunpack.c.l.b16 %v199
    %v1325 = vunpack.c.h.b16 %v199
    %v1326 = vunpack.c.l.b16 %v200
    %v1327 = vunpack.c.h.b16 %v200
    %v1328 = vunpack.c.l.b16 %v201
    %v1329 = vunpack.c.h.b16 %v201
    %v1330 = vunpack.c.l.b16 %v202
    %v1331 = vunpack.c.h.b16 %v202
    %v1332 = vunpack.c.l.b16 %v203
    %v1333 = vunpack.c.h.b16 %v203
    %v1334 = vunpack.c.l.b16 %v204
    %v1335 = vunpack.c.h.b16 %v204
    %v1336 = vunpack.c.l.b16 %v205
    %v1337 = vunpack.c.h.b16 %v205
    %v1338 = vunpack.c.l.b16 %v206
    %v1339 = vunpack.c.h.b16 %v206
    %v1340 = vunpack.c.l.b16 %v207
    %v1341 = vunpack.c.h.b16 %v207
    %v1342 = vunpack.c.l.b16 %v208
    %v1343 = vunpack.c.h.b16 %v208
    %v1344 = vunpack.c.l.b16 %v209
    %v1345 = vunpack.c.h.b16 %v209
    %v1346 = vunpack.c.l.b16 %v210
    %v1347 = vunpack.c.h.b16 %v210
    %v1348 = vunpack.c.l.b16 %v211
    %v1349 = vunpack.c.h.b16 %v211
    %v1350 = vunpack.c.l.b16 %v212
    %v1351 = vunpack.c.h.b16 %v212
    %v1352 = vunpack.c.l.b16 %v213
    %v1353 = vunpack.c.h.b16 %v213
    %v1354 = vunpack.c.l.b16 %v214
    %v1355 = vunpack.c.h.b16 %v214
    %v1356 = vunpack.c.l.b16 %v215
    %v1357 = vunpack.c.h.b16 %v215
    %v1358 = vunpack.c.l.b16 %v216
    %v1359 = vunpack.c.h.b16 %v216
    %v1360 = vunpack.c.l.b16 %v217
    %v1361 = vunpack.c.h.b16 %v217
    %v1362 = vunpack.c.l.b16 %v218
    %v1363 = vunpack.c.h.b16 %v218
    %v1364 = vunpack.c.l.b16 %v219
    %v1365 = vunpack.c.h.b16 %v219
    %v1366 = vunpack.c.l.b16 %v220
    %v1367 = vunpack.c.h.b16 %v220
    %v1368 = vunpack.c.l.b16 %v221
    %v1369 = vunpack.c.h.b16 %v221
    %v1370 = vunpack.c.l.b16 %v222
    %v1371 = vunpack.c.h.b16 %v222
    %v1372 = vunpack.c.l.b16 %v223
    %v1373 = vunpack.c.h.b16 %v223
    %v1374 = vunpack.c.l.b16 %v224
    %v1375 = vunpack.c.h.b16 %v224
    %v1376 = vunpack.c.l.b16 %v225
    %v1377 = vunpack.c.h.b16 %v225
    %v1378 = vunpack.c.l.b16 %v226
    %v1379 = vunpack.c.h.b16 %v226
    %v1380 = vunpack.c.l.b16 %v227
    %v1381 = vunpack.c.h.b16 %v227
    %v1382 = vunpack.c.l.b16 %v228
    %v1383 = vunpack.c.h.b16 %v228
    %v1384 = vunpack.c.l.b16 %v229
    %v1385 = vunpack.c.h.b16 %v229
    %v1386 = vunpack.c.l.b16 %v230
    %v1387 = vunpack.c.h.b16 %v230
    %v1388 = vunpack.c.l.b16 %v231
    %v1389 = vunpack.c.h.b16 %v231
    %v1390 = vunpack.c.l.b16 %v232
    %v1391 = vunpack.c.h.b16 %v232
    %v1392 = vunpack.c.l.b16 %v233
    %v1393 = vunpack.c.h.b16 %v233
    %v1394 = vunpack.c.l.b16 %v234
    %v1395 = vunpack.c.h.b16 %v234
    %v1396 = vunpack.c.l.b16 %v235
    %v1397 = vunpack.c.h.b16 %v235
    %v1398 = vunpack.c.l.b16 %v236
    %v1399 = vunpack.c.h.b16 %v236
    %v1400 = vunpack.c.l.b16 %v237
    %v1401 = vunpack.c.h.b16 %v237
    %v1402 = vunpack.c.l.b16 %v238
    %v1403 = vunpack.c.h.b16 %v238
    %v1404 = vunpack.c.l.b16 %v239
    %v1405 = vunpack.c.h.b16 %v239
    %v1406 = vunpack.c.l.b16 %v240
    %v1407 = vunpack.c.h.b16 %v240
    %v1408 = vunpack.c.l.b16 %v241
    %v1409 = vunpack.c.h.b16 %v241
    %v1410 = vunpack.c.l.b16 %v242
    %v1411 = vunpack.c.h.b16 %v242
    %v1412 = vunpack.c.l.b16 %v243
    %v1413 = vunpack.c.h.b16 %v243
    %v1414 = vunpack.c.l.b16 %v244
    %v1415 = vunpack.c.h.b16 %v244
    %v1416 = vunpack.c.l.b16 %v245
    %v1417 = vunpack.c.h.b16 %v245
    %v1418 = vunpack.c.l.b16 %v246
    %v1419 = vunpack.c.h.b16 %v246
    %v1420 = vunpack.c.l.b16 %v247
    %v1421 = vunpack.c.h.b16 %v247
    %v1422 = vunpack.c.l.b16 %v248
    %v1423 = vunpack.c.h.b16 %v248
    %v1424 = vunpack.c.l.b16 %v249
    %v1425 = vunpack.c.h.b16 %v249
    %v1426 = vunpack.c.l.b16 %v250
    %v1427 = vunpack.c.h.b16 %v250
    %v1428 = vunpack.c.l.b16 %v251
    %v1429 = vunpack.c.h.b16 %v251
    %v1430 = vunpack.c.l.b16 %v252
    %v1431 = vunpack.c.h.b16 %v252
    %v1432 = vunpack.c.l.b16 %v253
    %v1433 = vunpack.c.h.b16 %v253
    %v1434 = vunpack.c.l.b16 %v254
    %v1435 = vunpack.c.h.b16 %v254
    %v1436 = vunpack.c.l.b16 %v255
    %v1437 = vunpack.c.h.b16 %v255
    %v1438 = vunpack.c.l.b16 %v256
    %v1439 = vunpack.c.h.b16 %v256
    %v1440 = vunpack.c.l.b16 %v257
    %v1441 = vunpack.c.h.b16 %v257
    %v1442 = vunpack.c.l.b16 %v258
    %v1443 = vunpack.c.h.b16 %v258
    %v1444 = vunpack.c.l.b16 %v259
    %v1445 = vunpack.c.h.b16 %v259
    %v1446 = vunpack.c.l.b16 %v260
    %v1447 = vunpack.c.h.b16 %v260
    %v1448 = vunpack.c.l.b16 %v261
    %v1449 = vunpack.c.h.b16 %v261
    %v1450 = vunpack.c.l.b16 %v262
    %v1451 = vunpack.c.h.b16 %v262
    %v1452 = vunpack.c.l.b16 %v263
    %v1453 = vunpack.c.h.b16 %v263
    %v1454 = vunpack.c.l.b16 %v264
    %v1455 = vunpack.c.h.b16 %v264
    %v1456 = vunpack.c.l.b16 %v265
    %v1457 = vunpack.c.h.b16 %v265
    %v1458 = vunpack.c.l.b16 %v266
    %v1459 = vunpack.c.h.b16 %v266
    %v1460 = vunpack.c.l.b16 %v267
    %v1461 = vunpack.c.h.b16 %v267
    %v1462 = vunpack.c.l.b16 %v268
    %v1463 = vunpack.c.h.b16 %v268
    %v1464 = vunpack.c.l.b16 %v269
    %v1465 = vunpack.c.h.b16 %v269
    %v1466 = vunpack.c.l.b16 %v270
    %v1467 = vunpack.c.h.b16 %v270
    %v1468 = vunpack.c.l.b16 %v271
    %v1469 = vunpack.c.h.b16 %v271
    %v1470 = vunpack.c.l.b16 %v272
    %v1471 = vunpack.c.h.b16 %v272
    %v1472 = vunpack.c.l.b16 %v273
    %v1473 = vunpack.c.h.b16 %v273
    %v1474 = vunpack.c.l.b16 %v274
    %v1475 = vunpack.c.h.b16 %v274
    %v1476 = vunpack.c.l.b16 %v275
    %v1477 = vunpack.c.h.b16 %v275
    %v1478 = vunpack.c.l.b16 %v276
    %v1479 = vunpack.c.h.b16 %v276
    %v1480 = vunpack.c.l.b16 %v277
    %v1481 = vunpack.c.h.b16 %v277
    %v1482 = vunpack.c.l.b16 %v278
    %v1483 = vunpack.c.h.b16 %v278
    %v1484 = vunpack.c.l.b16 %v279
    %v1485 = vunpack.c.h.b16 %v279
    %v1486 = vunpack.c.l.b16 %v280
    %v1487 = vunpack.c.h.b16 %v280
    %v1488 = vunpack.c.l.b16 %v281
    %v1489 = vunpack.c.h.b16 %v281
    %v1490 = vunpack.c.l.b16 %v282
    %v1491 = vunpack.c.h.b16 %v282
    %v1492 = vunpack.c.l.b16 %v283
    %v1493 = vunpack.c.h.b16 %v283
    %v1494 = vunpack.c.l.b16 %v284
    %v1495 = vunpack.c.h.b16 %v284
    %v1496 = vunpack.c.l.b16 %v285
    %v1497 = vunpack.c.h.b16 %v285
    %v1498 = vunpack.c.l.b16 %v286
    %v1499 = vunpack.c.h.b16 %v286
    %v1500 = vunpack.c.l.b16 %v287
    %v1501 = vunpack.c.h.b16 %v287
    %v1502 = vunpack.c.l.b16 %v288
    %v1503 = vunpack.c.h.b16 %v288
    %v1504 = vunpack.c.l.b16 %v289
    %v1505 = vunpack.c.h.b16 %v289
    %v1506 = vunpack.c.l.b16 %v290
    %v1507 = vunpack.c.h.b16 %v290
    %v1508 = vunpack.c.l.b16 %v291
    %v1509 = vunpack.c.h.b16 %v291
    %v1510 = vunpack.c.l.b16 %v292
    %v1511 = vunpack.c.h.b16 %v292
    %v1512 = vunpack.c.l.b16 %v293
    %v1513 = vunpack.c.h.b16 %v293
    %v1514 = vunpack.c.l.b16 %v294
    %v1515 = vunpack.c.h.b16 %v294
    %v1516 = vunpack.c.l.b16 %v295
    %v1517 = vunpack.c.h.b16 %v295
    %v1518 = vunpack.c.l.b16 %v296
    %v1519 = vunpack.c.h.b16 %v296
    %v1520 = vunpack.c.l.b16 %v297
    %v1521 = vunpack.c.h.b16 %v297
    %v1522 = vunpack.c.l.b16 %v298
    %v1523 = vunpack.c.h.b16 %v298
    %v1524 = vunpack.c.l.b16 %v299
    %v1525 = vunpack.c.h.b16 %v299
    %v1526 = vunpack.c.l.b16 %v300
    %v1527 = vunpack.c.h.b16 %v300
    %v1528 = vunpack.c.l.b16 %v301
    %v1529 = vunpack.c.h.b16 %v301
    %v1530 = vunpack.c.l.b16 %v302
    %v1531 = vunpack.c.h.b16 %v302
    %v1532 = vunpack.c.l.b16 %v303
    %v1533 = vunpack.c.h.b16 %v303
    %v1534 = vunpack.c.l.b16 %v304
    %v1535 = vunpack.c.h.b16 %v304
    %v1536 = vunpack.c.l.b16 %v305
    %v1537 = vunpack.c.h.b16 %v305
    %v1538 = vunpack.c.l.b16 %v306
    %v1539 = vunpack.c.h.b16 %v306
    %v1540 = vunpack.c.l.b16 %v307
    %v1541 = vunpack.c.h.b16 %v307
    %v1542 = vunpack.c.l.b16 %v308
    %v1543 = vunpack.c.h.b16 %v308
    %v1544 = vunpack.c.l.b16 %v309
    %v1545 = vunpack.c.h.b16 %v309
    %v1546 = vunpack.c.l.b16 %v310
    %v1547 = vunpack.c.h.b16 %v310
    %v1548 = vunpack.c.l.b16 %v311
    %v1549 = vunpack.c.h.b16 %v311
    %v1550 = vunpack.c.l.b16 %v312
    %v1551 = vunpack.c.h.b16 %v312
    %v1552 = vunpack.c.l.b16 %v313
    %v1553 = vunpack.c.h.b16 %v313
    %v1554 = vunpack.c.l.b16 %v314
    %v1555 = vunpack.c.h.b16 %v314
    %v1556 = vunpack.c.l.b16 %v315
    %v1557 = vunpack.c.h.b16 %v315
    %v1558 = vunpack.c.l.b16 %v316
    %v1559 = vunpack.c.h.b16 %v316
    %v1560 = vunpack.c.l.b16 %v317
    %v1561 = vunpack.c.h.b16 %v317
    %v1562 = vunpack.c.l.b16 %v318
    %v1563 = vunpack.c.h.b16 %v318
    %v1564 = vunpack.c.l.b16 %v319
    %v1565 = vunpack.c.h.b16 %v319
    %v1566 = vunpack.c.l.b16 %v320
    %v1567 = vunpack.c.h.b16 %v320
    %v1568 = vunpack.c.l.b16 %v321
    %v1569 = vunpack.c.h.b16 %v321
    %v1570 = vunpack.c.l.b16 %v322
    %v1571 = vunpack.c.h.b16 %v322
    %v1572 = vunpack.c.l.b16 %v323
    %v1573 = vunpack.c.h.b16 %v323
    %v1574 = vunpack.c.l.b16 %v324
    %v1575 = vunpack.c.h.b16 %v324
    %v1576 = vunpack.c.l.b16 %v325
    %v1577 = vunpack.c.h.b16 %v325
    %v1578 = vunpack.c.l.b16 %v326
    %v1579 = vunpack.c.h.b16 %v326
    %v1580 = vunpack.c.l.b16 %v327
    %v1581 = vunpack.c.h.b16 %v327
    %v1582 = vunpack.c.l.b16 %v328
    %v1583 = vunpack.c.h.b16 %v328
    %v1584 = vunpack.c.l.b16 %v329
    %v1585 = vunpack.c.h.b16 %v329
    %v1586 = vunpack.c.l.b16 %v330
    %v1587 = vunpack.c.h.b16 %v330
    %v1588 = vunpack.c.l.b16 %v331
    %v1589 = vunpack.c.h.b16 %v331
    %v1590 = vunpack.c.l.b16 %v332
    %v1591 = vunpack.c.h.b16 %v332
    %v1592 = vunpack.c.l.b16 %v333
    %v1593 = vunpack.c.h.b16 %v333
    %v1594 = vunpack.c.l.b16 %v334
    %v1595 = vunpack.c.h.b16 %v334
    %v1596 = vunpack.c.l.b16 %v335
    %v1597 = vunpack.c.h.b16 %v335
    %v1598 = vunpack.c.l.b16 %v336
    %v1599 = vunpack.c.h.b16 %v336
    %v1600 = vunpack.c.l.b16 %v337
    %v1601 = vunpack.c.h.b16 %v337
    %v1602 = vunpack.c.l.b16 %v338
    %v1603 = vunpack.c.h.b16 %v338
    %v1604 = vunpack.c.l.b16 %v339
    %v1605 = vunpack.c.h.b16 %v339
    %v1606 = vunpack.c.l.b16 %v340
    %v1607 = vunpack.c.h.b16 %v340
    %v1608 = vunpack.c.l.b16 %v341
    %v1609 = vunpack.c.h.b16 %v341
    %v1610 = vunpack.c.l.b16 %v342
    %v1611 = vunpack.c.h.b16 %v342
    %v1612 = vunpack.c.l.b16 %v343
    %v1613 = vunpack.c.h.b16 %v343
    %v1614 = vunpack.c.l.b16 %v344
    %v1615 = vunpack.c.h.b16 %v344
    %v1616 = vunpack.c.l.b16 %v345
    %v1617 = vunpack.c.h.b16 %v345
    %v1618 = vunpack.c.l.b16 %v346
    %v1619 = vunpack.c.h.b16 %v346
    %v1620 = vunpack.c.l.b16 %v347
    %v1621 = vunpack.c.h.b16 %v347
    %v1622 = vunpack.c.l.b16 %v348
    %v1623 = vunpack.c.h.b16 %v348
    %v1624 = vunpack.c.l.b16 %v349
    %v1625 = vunpack.c.h.b16 %v349
    %v1626 = vunpack.c.l.b16 %v350
    %v1627 = vunpack.c.h.b16 %v350
    %v1628 = vunpack.c.l.b16 %v351
    %v1629 = vunpack.c.h.b16 %v351
    %v1630 = vunpack.c.l.b16 %v352
    %v1631 = vunpack.c.h.b16 %v352
    %v1632 = vunpack.c.l.b16 %v353
    %v1633 = vunpack.c.h.b16 %v353
    %v1634 = vunpack.c.l.b16 %v354
    %v1635 = vunpack.c.h.b16 %v354
    %v1636 = vunpack.c.l.b16 %v355
    %v1637 = vunpack.c.h.b16 %v355
    %v1638 = vunpack.c.l.b16 %v356
    %v1639 = vunpack.c.h.b16 %v356
    %v1640 = vunpack.c.l.b16 %v357
    %v1641 = vunpack.c.h.b16 %v357
    %v1642 = vunpack.c.l.b16 %v358
    %v1643 = vunpack.c.h.b16 %v358
    %v1644 = vunpack.c.l.b16 %v359
    %v1645 = vunpack.c.h.b16 %v359
    %v1646 = vunpack.c.l.b16 %v360
    %v1647 = vunpack.c.h.b16 %v360
    %v1648 = vunpack.c.l.b16 %v361
    %v1649 = vunpack.c.h.b16 %v361
    %v1650 = vunpack.c.l.b16 %v362
    %v1651 = vunpack.c.h.b16 %v362
    %v1652 = vunpack.c.l.b16 %v363
    %v1653 = vunpack.c.h.b16 %v363
    %v1654 = vunpack.c.l.b16 %v364
    %v1655 = vunpack.c.h.b16 %v364
    %v1656 = vunpack.c.l.b16 %v365
    %v1657 = vunpack.c.h.b16 %v365
    %v1658 = vunpack.c.l.b16 %v366
    %v1659 = vunpack.c.h.b16 %v366
    %v1660 = vunpack.c.l.b16 %v367
    %v1661 = vunpack.c.h.b16 %v367
    %v1662 = vunpack.c.l.b16 %v368
    %v1663 = vunpack.c.h.b16 %v368
    %v1664 = vunpack.c.l.b16 %v369
    %v1665 = vunpack.c.h.b16 %v369
    %v1666 = vunpack.c.l.b16 %v370
    %v1667 = vunpack.c.h.b16 %v370
    %v1668 = vunpack.c.l.b16 %v371
    %v1669 = vunpack.c.h.b16 %v371
    %v1670 = vunpack.c.l.b16 %v372
    %v1671 = vunpack.c.h.b16 %v372
    %v1672 = vunpack.c.l.b16 %v373
    %v1673 = vunpack.c.h.b16 %v373
    %v1674 = vunpack.c.l.b16 %v374
    %v1675 = vunpack.c.h.b16 %v374
    %v1676 = vunpack.c.l.b16 %v375
    %v1677 = vunpack.c.h.b16 %v375
    %v1678 = vunpack.c.l.b16 %v376
    %v1679 = vunpack.c.h.b16 %v376
    %v1680 = vunpack.c.l.b16 %v377
    %v1681 = vunpack.c.h.b16 %v377
    %v1682 = vunpack.c.l.b16 %v378
    %v1683 = vunpack.c.h.b16 %v378
    %v1684 = vunpack.c.l.b16 %v379
    %v1685 = vunpack.c.h.b16 %v379
    %v1686 = vunpack.c.l.b16 %v380
    %v1687 = vunpack.c.h.b16 %v380
    %v1688 = vunpack.c.l.b16 %v381
    %v1689 = vunpack.c.h.b16 %v381
    %v1690 = vunpack.c.l.b16 %v382
    %v1691 = vunpack.c.h.b16 %v382
    %v1692 = vunpack.c.l.b16 %v383
    %v1693 = vunpack.c.h.b16 %v383
    %v1694 = vunpack.c.l.b16 %v384
    %v1695 = vunpack.c.h.b16 %v384
    %v1696 = vunpack.c.l.b16 %v385
    %v1697 = vunpack.c.h.b16 %v385
    %v1698 = vunpack.c.l.b16 %v386
    %v1699 = vunpack.c.h.b16 %v386
    %v1700 = vunpack.c.l.b16 %v387
    %v1701 = vunpack.c.h.b16 %v387
    %v1702 = vunpack.c.l.b16 %v388
    %v1703 = vunpack.c.h.b16 %v388
    %v1704 = vunpack.c.l.b16 %v389
    %v1705 = vunpack.c.h.b16 %v389
    %v1706 = vunpack.c.l.b16 %v390
    %v1707 = vunpack.c.h.b16 %v390
    %v1708 = vunpack.c.l.b16 %v391
    %v1709 = vunpack.c.h.b16 %v391
    %v1710 = vunpack.c.l.b16 %v392
    %v1711 = vunpack.c.h.b16 %v392
    %v1712 = vunpack.c.l.b16 %v393
    %v1713 = vunpack.c.h.b16 %v393
    %v1714 = vunpack.c.l.b16 %v394
    %v1715 = vunpack.c.h.b16 %v394
    %v1716 = vunpack.c.l.b16 %v395
    %v1717 = vunpack.c.h.b16 %v395
    %v1718 = vunpack.c.l.b16 %v396
    %v1719 = vunpack.c.h.b16 %v396
    %v1720 = vunpack.c.l.b16 %v397
    %v1721 = vunpack.c.h.b16 %v397
    %v1722 = vunpack.c.l.b16 %v398
    %v1723 = vunpack.c.h.b16 %v398
    %v1724 = vunpack.c.l.b16 %v399
    %v1725 = vunpack.c.h.b16 %v399
    %v1726 = vunpack.c.l.b16 %v400
    %v1727 = vunpack.c.h.b16 %v400
    %v1728 = vunpack.c.l.b16 %v401
    %v1729 = vunpack.c.h.b16 %v401
    %v1730 = vunpack.c.l.b16 %v402
    %v1731 = vunpack.c.h.b16 %v402
    %v1732 = vunpack.c.l.b16 %v403
    %v1733 = vunpack.c.h.b16 %v403
    %v1734 = vunpack.c.l.b16 %v404
    %v1735 = vunpack.c.h.b16 %v404
    %v1736 = vunpack.c.l.b16 %v405
    %v1737 = vunpack.c.h.b16 %v405
    %v1738 = vunpack.c.l.b16 %v406
    %v1739 = vunpack.c.h.b16 %v406
    %v1740 = vunpack.c.l.b16 %v407
    %v1741 = vunpack.c.h.b16 %v407
    %v1742 = vunpack.c.l.b16 %v408
    %v1743 = vunpack.c.h.b16 %v408
    %v1744 = vunpack.c.l.b16 %v409
    %v1745 = vunpack.c.h.b16 %v409
    %v1746 = vunpack.c.l.b16 %v410
    %v1747 = vunpack.c.h.b16 %v410
    %v1748 = vunpack.c.l.b16 %v411
    %v1749 = vunpack.c.h.b16 %v411
    %v1750 = vunpack.c.l.b16 %v412
    %v1751 = vunpack.c.h.b16 %v412
    %v1752 = vunpack.c.l.b16 %v413
    %v1753 = vunpack.c.h.b16 %v413
    %v1754 = vunpack.c.l.b16 %v414
    %v1755 = vunpack.c.h.b16 %v414
    %v1756 = vunpack.c.l.b16 %v415
    %v1757 = vunpack.c.h.b16 %v415
    %v1758 = vunpack.c.l.b16 %v416
    %v1759 = vunpack.c.h.b16 %v416
    %v1760 = vunpack.c.l.b16 %v417
    %v1761 = vunpack.c.h.b16 %v417
    %v1762 = vunpack.c.l.b16 %v418
    %v1763 = vunpack.c.h.b16 %v418
    %v1764 = vunpack.c.l.b16 %v419
    %v1765 = vunpack.c.h.b16 %v419
    %v1766 = vunpack.c.l.b16 %v420
    %v1767 = vunpack.c.h.b16 %v420
    %v1768 = vunpack.c.l.b16 %v421
    %v1769 = vunpack.c.h.b16 %v421
    %v1770 = vunpack.c.l.b16 %v422
    %v1771 = vunpack.c.h.b16 %v422
    %v1772 = vunpack.c.l.b16 %v423
    %v1773 = vunpack.c.h.b16 %v423
    %v1774 = vunpack.c.l.b16 %v424
    %v1775 = vunpack.c.h.b16 %v424
    %v1776 = vunpack.c.l.b16 %v425
    %v1777 = vunpack.c.h.b16 %v425
    %v1778 = vunpack.c.l.b16 %v426
    %v1779 = vunpack.c.h.b16 %v426
    %v1780 = vunpack.c.l.b16 %v427
    %v1781 = vunpack.c.h.b16 %v427
    %v1782 = vunpack.c.l.b16 %v428
    %v1783 = vunpack.c.h.b16 %v428
    %v1784 = vunpack.c.l.b16 %v429
    %v1785 = vunpack.c.h.b16 %v429
    %v1786 = vunpack.c.l.b16 %v430
    %v1787 = vunpack.c.h.b16 %v430
    %v1788 = vunpack.c.l.b16 %v431
    %v1789 = vunpack.c.h.b16 %v431
    %v1790 = vunpack.c.l.b16 %v432
    %v1791 = vunpack.c.h.b16 %v432
    %v1792 = vunpack.c.l.b16 %v433
    %v1793 = vunpack.c.h.b16 %v433
    %v1794 = vunpack.c.l.b16 %v434
    %v1795 = vunpack.c.h.b16 %v434
    %v1796 = vunpack.c.l.b16 %v435
    %v1797 = vunpack.c.h.b16 %v435
    %v1798 = vunpack.c.l.b16 %v436
    %v1799 = vunpack.c.h.b16 %v436
    %v1800 = vunpack.c.l.b16 %v437
    %v1801 = vunpack.c.h.b16 %v437
    %v1802 = vunpack.c.l.b16 %v438
    %v1803 = vunpack.c.h.b16 %v438
    %v1804 = vunpack.c.l.b16 %v439
    %v1805 = vunpack.c.h.b16 %v439
    %v1806 = vunpack.c.l.b16 %v440
    %v1807 = vunpack.c.h.b16 %v440
    %v1808 = vunpack.c.l.b16 %v441
    %v1809 = vunpack.c.h.b16 %v441
    %v1810 = vunpack.c.l.b16 %v442
    %v1811 = vunpack.c.h.b16 %v442
    %v1812 = vunpack.c.l.b16 %v443
    %v1813 = vunpack.c.h.b16 %v443
    %v1814 = vunpack.c.l.b16 %v444
    %v1815 = vunpack.c.h.b16 %v444
    %v1816 = vunpack.c.l.b16 %v445
    %v1817 = vunpack.c.h.b16 %v445
    %v1818 = vunpack.c.l.b16 %v446
    %v1819 = vunpack.c.h.b16 %v446
    %v1820 = vunpack.c.l.b16 %v447
    %v1821 = vunpack.c.h.b16 %v447
    %v1822 = vunpack.c.l.b16 %v448
    %v1823 = vunpack.c.h.b16 %v448
    %v1824 = vunpack.c.l.b16 %v449
    %v1825 = vunpack.c.h.b16 %v449
    %v1826 = vunpack.c.l.b16 %v450
    %v1827 = vunpack.c.h.b16 %v450
    %v1828 = vunpack.c.l.b16 %v451
    %v1829 = vunpack.c.h.b16 %v451
    %v1830 = vunpack.c.l.b16 %v452
    %v1831 = vunpack.c.h.b16 %v452
    %v1832 = vunpack.c.l.b16 %v453
    %v1833 = vunpack.c.h.b16 %v453
    %v1834 = vunpack.c.l.b16 %v454
    %v1835 = vunpack.c.h.b16 %v454
    %v1836 = vunpack.c.l.b16 %v455
    %v1837 = vunpack.c.h.b16 %v455
    %v1838 = vunpack.c.l.b16 %v456
    %v1839 = vunpack.c.h.b16 %v456
    %v1840 = vunpack.c.l.b16 %v457
    %v1841 = vunpack.c.h.b16 %v457
    %v1842 = vunpack.c.l.b16 %v458
    %v1843 = vunpack.c.h.b16 %v458
    %v1844 = vunpack.c.l.b16 %v459
    %v1845 = vunpack.c.h.b16 %v459
    %v1846 = vunpack.c.l.b16 %v460
    %v1847 = vunpack.c.h.b16 %v460
    %v1848 = vunpack.c.l.b16 %v461
    %v1849 = vunpack.c.h.b16 %v461
    %v1850 = vunpack.c.l.b16 %v462
    %v1851 = vunpack.c.h.b16 %v462
    %v1852 = vunpack.c.l.b16 %v463
    %v1853 = vunpack.c.h.b16 %v463
    %v1854 = vunpack.c.l.b16 %v464
    %v1855 = vunpack.c.h.b16 %v464
    %v1856 = vunpack.c.l.b16 %v465
    %v1857 = vunpack.c.h.b16 %v465
    %v1858 = vunpack.c.l.b16 %v466
    %v1859 = vunpack.c.h.b16 %v466
    %v1860 = vunpack.c.l.b16 %v467
    %v1861 = vunpack.c.h.b16 %v467
    %v1862 = vunpack.c.l.b16 %v468
    %v1863 = vunpack.c.h.b16 %v468
    %v1864 = vunpack.c.l.b16 %v469
    %v1865 = vunpack.c.h.b16 %v469
    %v1866 = vunpack.c.l.b16 %v470
    %v1867 = vunpack.c.h.b16 %v470
    %v1868 = vunpack.c.l.b16 %v471
    %v1869 = vunpack.c.h.b16 %v471
    %v1870 = vunpack.c.l.b16 %v472
    %v1871 = vunpack.c.h.b16 %v472
    %v1872 = vunpack.c.l.b16 %v473
    %v1873 = vunpack.c.h.b16 %v473
    %v1874 = vunpack.c.l.b16 %v474
    %v1875 = vunpack.c.h.b16 %v474
    %v1876 = vunpack.c.l.b16 %v475
    %v1877 = vunpack.c.h.b16 %v475
    %v1878 = vunpack.c.l.b16 %v476
    %v1879 = vunpack.c.h.b16 %v476
    %v1880 = vunpack.c.l.b16 %v477
    %v1881 = vunpack.c.h.b16 %v477
    %v1882 = vunpack.c.l.b16 %v478
    %v1883 = vunpack.c.h.b16 %v478
    %v1884 = vunpack.c.l.b16 %v479
    %v1885 = vunpack.c.h.b16 %v479
    %v1886 = vunpack.c.l.b16 %v480
    %v1887 = vunpack.c.h.b16 %v480
    %v1888 = vunpack.c.l.b16 %v481
    %v1889 = vunpack.c.h.b16 %v481
    %v1890 = vunpack.c.l.b16 %v482
    %v1891 = vunpack.c.h.b16 %v482
    %v1892 = vunpack.c.l.b16 %v483
    %v1893 = vunpack.c.h.b16 %v483
    %v1894 = vunpack.c.l.b16 %v484
    %v1895 = vunpack.c.h.b16 %v484
    %v1896 = vunpack.c.l.b16 %v485
    %v1897 = vunpack.c.h.b16 %v485
    %v1898 = vunpack.c.l.b16 %v486
    %v1899 = vunpack.c.h.b16 %v486
    %v1900 = vunpack.c.l.b16 %v487
    %v1901 = vunpack.c.h.b16 %v487
    %v1902 = vunpack.c.l.b16 %v488
    %v1903 = vunpack.c.h.b16 %v488
    %v1904 = vunpack.c.l.b16 %v489
    %v1905 = vunpack.c.h.b16 %v489
    %v1906 = vunpack.c.l.b16 %v490
    %v1907 = vunpack.c.h.b16 %v490
    %v1908 = vunpack.c.l.b16 %v491
    %v1909 = vunpack.c.h.b16 %v491
    %v1910 = vunpack.c.l.b16 %v492
    %v1911 = vunpack.c.h.b16 %v492
    %v1912 = vunpack.c.l.b16 %v493
    %v1913 = vunpack.c.h.b16 %v493
    %v1914 = vunpack.c.l.b16 %v494
    %v1915 = vunpack.c.h.b16 %v494
    %v1916 = vunpack.c.l.b16 %v495
    %v1917 = vunpack.c.h.b16 %v495
    %v1918 = vunpack.c.l.b16 %v496
    %v1919 = vunpack.c.h.b16 %v496
    %v1920 = vunpack.c.l.b16 %v497
    %v1921 = vunpack.c.h.b16 %v497
    %v1922 = vunpack.c.l.b16 %v498
    %v1923 = vunpack.c.h.b16 %v498
    %v1924 = vunpack.c.l.b16 %v499
    %v1925 = vunpack.c.h.b16 %v499
    %v1926 = vunpack.c.l.b16 %v500
    %v1927 = vunpack.c.h.b16 %v500
    %v1928 = vunpack.c.l.b16 %v501
    %v1929 = vunpack.c.h.b16 %v501
    %v1930 = vunpack.c.l.b16 %v502
    %v1931 = vunpack.c.h.b16 %v502
    %v1932 = vunpack.c.l.b16 %v503
    %v1933 = vunpack.c.h.b16 %v503
    %v1934 = vunpack.c.l.b16 %v504
    %v1935 = vunpack.c.h.b16 %v504
    %v1936 = vunpack.c.l.b16 %v505
    %v1937 = vunpack.c.h.b16 %v505
    %v1938 = vunpack.c.l.b16 %v506
    %v1939 = vunpack.c.h.b16 %v506
    %v1940 = vunpack.c.l.b16 %v507
    %v1941 = vunpack.c.h.b16 %v507
    %v1942 = vunpack.c.l.b16 %v508
    %v1943 = vunpack.c.h.b16 %v508
    %v1944 = vunpack.c.l.b16 %v509
    %v1945 = vunpack.c.h.b16 %v509
    %v1946 = vunpack.c.l.b16 %v510
    %v1947 = vunpack.c.h.b16 %v510
    %v1948 = vunpack.c.l.b16 %v511
    %v1949 = vunpack.c.h.b16 %v511
    %v1950 = vunpack.c.l.b16 %v512
    %v1951 = vunpack.c.h.b16 %v512
    %v1952 = vunpack.c.l.b16 %v513
    %v1953 = vunpack.c.h.b16 %v513
    %v1954 = vunpack.c.l.b16 %v514
    %v1955 = vunpack.c.h.b16 %v514
    %v1956 = vunpack.c.l.b16 %v515
    %v1957 = vunpack.c.h.b16 %v515
    %v1958 = vunpack.c.l.b16 %v516
    %v1959 = vunpack.c.h.b16 %v516
    %v1960 = vunpack.c.l.b16 %v517
    %v1961 = vunpack.c.h.b16 %v517
    %v1962 = vunpack.c.l.b16 %v518
    %v1963 = vunpack.c.h.b16 %v518
    %v1964 = vunpack.c.l.b16 %v519
    %v1965 = vunpack.c.h.b16 %v519
    %v1966 = vunpack.c.l.b16 %v520
    %v1967 = vunpack.c.h.b16 %v520
    %v1968 = vunpack.c.l.b16 %v521
    %v1969 = vunpack.c.h.b16 %v521
    %v1970 = vunpack.c.l.b16 %v522
    %v1971 = vunpack.c.h.b16 %v522
    %v1972 = vunpack.c.l.b16 %v523
    %v1973 = vunpack.c.h.b16 %v523
    %v1974 = vunpack.c.l.b16 %v524
    %v1975 = vunpack.c.h.b16 %v524
    %v1976 = vunpack.c.l.b16 %v525
    %v1977 = vunpack.c.h.b16 %v525
    %v1978 = vunpack.c.l.b16 %v526
    %v1979 = vunpack.c.h.b16 %v526
    %v1980 = vunpack.c.l.b16 %v527
    %v1981 = vunpack.c.h.b16 %v527
    %v1982 = vunpack.c.l.b16 %v528
    %v1983 = vunpack.c.h.b16 %v528
    %v1984 = vunpack.c.l.b16 %v529
    %v1985 = vunpack.c.h.b16 %v529
    %v1986 = vunpack.c.l.b16 %v530
    %v1987 = vunpack.c.h.b16 %v530
    %v1988 = vunpack.c.l.b16 %v531
    %v1989 = vunpack.c.h.b16 %v531
    %v1990 = vunpack.c.l.b16 %v532
    %v1991 = vunpack.c.h.b16 %v532
    %v1992 = vunpack.c.l.b16 %v533
    %v1993 = vunpack.c.h.b16 %v533
    %v1994 = vunpack.c.l.b16 %v534
    %v1995 = vunpack.c.h.b16 %v534
    %v1996 = vunpack.c.l.b16 %v535
    %v1997 = vunpack.c.h.b16 %v535
    %v1998 = vunpack.c.l.b16 %v536
    %v1999 = vunpack.c.h.b16 %v536
    %v2000 = vunpack.c.l.b16 %v537
    %v2001 = vunpack.c.h.b16 %v537
    %v2002 = vunpack.c.l.b16 %v538
    %v2003 = vunpack.c.h.b16 %v538
    %v2004 = vunpack.c.l.b16 %v539
    %v2005 = vunpack.c.h.b16 %v539
    %v2006 = vunpack.c.l.b16 %v540
    %v2007 = vunpack.c.h.b16 %v540
    %v2008 = vunpack.c.l.b16 %v541
    %v2009 = vunpack.c.h.b16 %v541
    %v2010 = vunpack.c.l.b16 %v542
    %v2011 = vunpack.c.h.b16 %v542
    %v2012 = vunpack.c.l.b16 %v543
    %v2013 = vunpack.c.h.b16 %v543
    %v2014 = vunpack.c.l.b16 %v544
    %v2015 = vunpack.c.h.b16 %v544
    %v2016 = vunpack.c.l.b16 %v545
    %v2017 = vunpack.c.h.b16 %v545
    %v2018 = vunpack.c.l.b16 %v546
    %v2019 = vunpack.c.h.b16 %v546
    %v2020 = vunpack.c.l.b16 %v547
    %v2021 = vunpack.c.h.b16 %v547
    %v2022 = vunpack.c.l.b16 %v548
    %v2023 = vunpack.c.h.b16 %v548
    %v2024 = vunpack.c.l.b16 %v549
    %v2025 = vunpack.c.h.b16 %v549
    %v2026 = vunpack.c.l.b16 %v550
    %v2027 = vunpack.c.h.b16 %v550
    %v2028 = vunpack.c.l.b16 %v551
    %v2029 = vunpack.c.h.b16 %v551
    %v2030 = vunpack.c.l.b16 %v552
    %v2031 = vunpack.c.h.b16 %v552
    %v2032 = vunpack.c.l.b16 %v553
    %v2033 = vunpack.c.h.b16 %v553
    %v2034 = vunpack.c.l.b16 %v554
    %v2035 = vunpack.c.h.b16 %v554
    %v2036 = vunpack.c.l.b16 %v555
    %v2037 = vunpack.c.h.b16 %v555
    %v2038 = vunpack.c.l.b16 %v556
    %v2039 = vunpack.c.h.b16 %v556
    %v2040 = vunpack.c.l.b16 %v557
    %v2041 = vunpack.c.h.b16 %v557
    %v2042 = vunpack.c.l.b16 %v558
    %v2043 = vunpack.c.h.b16 %v558
    %v2044 = vunpack.c.l.b16 %v559
    %v2045 = vunpack.c.h.b16 %v559
    %v2046 = vunpack.c.l.b16 %v560
    %v2047 = vunpack.c.h.b16 %v560
    %v2048 = vunpack.c.l.b16 %v561
    %v2049 = vunpack.c.h.b16 %v561
    %v2050 = vunpack.c.l.b16 %v562
    %v2051 = vunpack.c.h.b16 %v562
    %v2052 = vunpack.c.l.b16 %v563
    %v2053 = vunpack.c.h.b16 %v563
    %v2054 = vunpack.c.l.b16 %v564
    %v2055 = vunpack.c.h.b16 %v564
    %v2056 = vunpack.c.l.b16 %v565
    %v2057 = vunpack.c.h.b16 %v565
    %v2058 = vunpack.c.l.b16 %v566
    %v2059 = vunpack.c.h.b16 %v566
    %v2060 = vunpack.c.l.b16 %v567
    %v2061 = vunpack.c.h.b16 %v567
    %v2062 = vunpack.c.l.b16 %v568
    %v2063 = vunpack.c.h.b16 %v568
    %v2064 = vunpack.c.l.b16 %v569
    %v2065 = vunpack.c.h.b16 %v569
    %v2066 = vunpack.c.l.b16 %v570
    %v2067 = vunpack.c.h.b16 %v570
    %v2068 = vunpack.c.l.b16 %v571
    %v2069 = vunpack.c.h.b16 %v571
    %v2070 = vunpack.c.l.b16 %v572
    %v2071 = vunpack.c.h.b16 %v572
    %v2072 = vunpack.c.l.b16 %v573
    %v2073 = vunpack.c.h.b16 %v573
    %v2074 = vunpack.c.l.b16 %v574
    %v2075 = vunpack.c.h.b16 %v574
    %v2076 = vunpack.c.l.b16 %v575
    %v2077 = vunpack.c.h.b16 %v575
    %v2078 = vunpack.c.l.b16 %v576
    %v2079 = vunpack.c.h.b16 %v576
    %v2080 = vunpack.c.l.b16 %v577
    %v2081 = vunpack.c.h.b16 %v577
    %v2082 = vunpack.c.l.b16 %v578
    %v2083 = vunpack.c.h.b16 %v578
    %v2084 = vunpack.c.l.b16 %v579
    %v2085 = vunpack.c.h.b16 %v579
    %v2086 = vunpack.c.l.b16 %v580
    %v2087 = vunpack.c.h.b16 %v580
    %v2088 = vunpack.c.l.b16 %v581
    %v2089 = vunpack.c.h.b16 %v581
    %v2090 = vunpack.c.l.b16 %v582
    %v2091 = vunpack.c.h.b16 %v582
    %v2092 = vunpack.c.l.b16 %v583
    %v2093 = vunpack.c.h.b16 %v583
    %v2094 = vunpack.c.l.b16 %v584
    %v2095 = vunpack.c.h.b16 %v584
    %v2096 = vunpack.c.l.b16 %v585
    %v2097 = vunpack.c.h.b16 %v585
    %v2098 = vunpack.c.l.b16 %v586
    %v2099 = vunpack.c.h.b16 %v586
    %v2100 = vunpack.c.l.b16 %v587
    %v2101 = vunpack.c.h.b16 %v587
    %v2102 = vunpack.c.l.b16 %v588
    %v2103 = vunpack.c.h.b16 %v588
    %v2104 = vunpack.c.l.b16 %v589
    %v2105 = vunpack.c.h.b16 %v589
    %v2106 = vunpack.c.l.b16 %v590
    %v2107 = vunpack.c.h.b16 %v590
    %v2108 = vunpack.c.l.b16 %v591
    %v2109 = vunpack.c.h.b16 %v591
    %v2110 = vunpack.c.l.b16 %v592
    %v2111 = vunpack.c.h.b16 %v592
    %v2112 = vunpack.c.l.b16 %v593
    %v2113 = vunpack.c.h.b16 %v593
    %v2114 = vunpack.c.l.b16 %v594
    %v2115 = vunpack.c.h.b16 %v594
    %v2116 = vunpack.c.l.b16 %v595
    %v2117 = vunpack.c.h.b16 %v595
    %v2118 = vunpack.c.l.b16 %v596
    %v2119 = vunpack.c.h.b16 %v596
    %v2120 = vunpack.c.l.b16 %v597
    %v2121 = vunpack.c.h.b16 %v597
    %v2122 = vunpack.c.l.b16 %v598
    %v2123 = vunpack.c.h.b16 %v598
    %v2124 = vunpack.c.l.b16 %v599
    %v2125 = vunpack.c.h.b16 %v599
    %v2126 = vunpack.c.l.b16 %v600
    %v2127 = vunpack.c.h.b16 %v600
    %v2128 = vunpack.c.l.b16 %v601
    %v2129 = vunpack.c.h.b16 %v601
    %v2130 = vunpack.c.l.b16 %v602
    %v2131 = vunpack.c.h.b16 %v602
    %v2132 = vunpack.c.l.b16 %v603
    %v2133 = vunpack.c.h.b16 %v603
    %v2134 = vunpack.c.l.b16 %v604
    %v2135 = vunpack.c.h.b16 %v604
    %v2136 = vunpack.c.l.b16 %v605
    %v2137 = vunpack.c.h.b16 %v605
    %v2138 = vunpack.c.l.b16 %v606
    %v2139 = vunpack.c.h.b16 %v606
    %v2140 = vunpack.c.l.b16 %v607
    %v2141 = vunpack.c.h.b16 %v607
    %v2142 = vunpack.c.l.b16 %v608
    %v2143 = vunpack.c.h.b16 %v608
    %v2144 = vunpack.c.l.b16 %v609
    %v2145 = vunpack.c.h.b16 %v609
    %v2146 = vpack.c.b16 %v1130, %v1122
    %v2147 = vpack.c.b16 %v1131, %v1123
    %v2148 = vpack.c.b16 %v1132, %v1124
    %v2149 = vpack.c.b16 %v1133, %v1125
    %v2150 = vpack.c.b16 %v1134, %v1126
    %v2151 = vpack.c.b16 %v1135, %v1127
    %v2152 = vpack.c.b16 %v1136, %v1128
    %v2153 = vpack.c.b16 %v1137, %v1129
    %v2154 = vpack.c.b16 %v1146, %v1138
    %v2155 = vpack.c.b16 %v1147, %v1139
    %v2156 = vpack.c.b16 %v1148, %v1140
    %v2157 = vpack.c.b16 %v1149, %v1141
    %v2158 = vpack.c.b16 %v1150, %v1142
    %v2159 = vpack.c.b16 %v1151, %v1143
    %v2160 = vpack.c.b16 %v1152, %v1144
    %v2161 = vpack.c.b16 %v1153, %v1145
    %v2162 = vpack.c.b16 %v1162, %v1154
    %v2163 = vpack.c.b16 %v1163, %v1155
    %v2164 = vpack.c.b16 %v1164, %v1156
    %v2165 = vpack.c.b16 %v1165, %v1157
    %v2166 = vpack.c.b16 %v1166, %v1158
    %v2167 = vpack.c.b16 %v1167, %v1159
    %v2168 = vpack.c.b16 %v1168, %v1160
    %v2169 = vpack.c.b16 %v1169, %v1161
    %v2170 = vpack.c.b16 %v1178, %v1170
    %v2171 = vpack.c.b16 %v1179, %v1171
    %v2172 = vpack.c.b16 %v1180, %v1172
    %v2173 = vpack.c.b16 %v1181, %v1173
    %v2174 = vpack.c.b16 %v1182, %v1174
    %v2175 = vpack.c.b16 %v1183, %v1175
    %v2176 = vpack.c.b16 %v1184, %v1176
    %v2177 = vpack.c.b16 %v1185, %v1177
    %v2178 = vpack.c.b16 %v1194, %v1186
    %v2179 = vpack.c.b16 %v1195, %v1187
    %v2180 = vpack.c.b16 %v1196, %v1188
    %v2181 = vpack.c.b16 %v1197, %v1189
    %v2182 = vpack.c.b16 %v1198, %v1190
    %v2183 = vpack.c.b16 %v1199, %v1191
    %v2184 = vpack.c.b16 %v1200, %v1192
    %v2185 = vpack.c.b16 %v1201, %v1193
    %v2186 = vpack.c.b16 %v1210, %v1202
    %v2187 = vpack.c.b16 %v1211, %v1203
    %v2188 = vpack.c.b16 %v1212, %v1204
    %v2189 = vpack.c.b16 %v1213, %v1205
    %v2190 = vpack.c.b16 %v1214, %v1206
    %v2191 = vpack.c.b16 %v1215, %v1207
    %v2192 = vpack.c.b16 %v1216, %v1208
    %v2193 = vpack.c.b16 %v1217, %v1209
    %v2194 = vpack.c.b16 %v1226, %v1218
    %v2195 = vpack.c.b16 %v1227, %v1219
    %v2196 = vpack.c.b16 %v1228, %v1220
    %v2197 = vpack.c.b16 %v1229, %v1221
    %v2198 = vpack.c.b16 %v1230, %v1222
    %v2199 = vpack.c.b16 %v1231, %v1223
    %v2200 = vpack.c.b16 %v1232, %v1224
    %v2201 = vpack.c.b16 %v1233, %v1225
    %v2202 = vpack.c.b16 %v1242, %v1234
    %v2203 = vpack.c.b16 %v1243, %v1235
    %v2204 = vpack.c.b16 %v1244, %v1236
    %v2205 = vpack.c.b16 %v1245, %v1237
    %v2206 = vpack.c.b16 %v1246, %v1238
    %v2207 = vpack.c.b16 %v1247, %v1239
    %v2208 = vpack.c.b16 %v1248, %v1240
    %v2209 = vpack.c.b16 %v1249, %v1241
    %v2210 = vpack.c.b16 %v1258, %v1250
    %v2211 = vpack.c.b16 %v1259, %v1251
    %v2212 = vpack.c.b16 %v1260, %v1252
    %v2213 = vpack.c.b16 %v1261, %v1253
    %v2214 = vpack.c.b16 %v1262, %v1254
    %v2215 = vpack.c.b16 %v1263, %v1255
    %v2216 = vpack.c.b16 %v1264, %v1256
    %v2217 = vpack.c.b16 %v1265, %v1257
    %v2218 = vpack.c.b16 %v1274, %v1266
    %v2219 = vpack.c.b16 %v1275, %v1267
    %v2220 = vpack.c.b16 %v1276, %v1268
    %v2221 = vpack.c.b16 %v1277, %v1269
    %v2222 = vpack.c.b16 %v1278, %v1270
    %v2223 = vpack.c.b16 %v1279, %v1271
    %v2224 = vpack.c.b16 %v1280, %v1272
    %v2225 = vpack.c.b16 %v1281, %v1273
    %v2226 = vpack.c.b16 %v1290, %v1282
    %v2227 = vpack.c.b16 %v1291, %v1283
    %v2228 = vpack.c.b16 %v1292, %v1284
    %v2229 = vpack.c.b16 %v1293, %v1285
    %v2230 = vpack.c.b16 %v1294, %v1286
    %v2231 = vpack.c.b16 %v1295, %v1287
    %v2232 = vpack.c.b16 %v1296, %v1288
    %v2233 = vpack.c.b16 %v1297, %v1289
    %v2234 = vpack.c.b16 %v1306, %v1298
    %v2235 = vpack.c.b16 %v1307, %v1299
    %v2236 = vpack.c.b16 %v1308, %v1300
    %v2237 = vpack.c.b16 %v1309, %v1301
    %v2238 = vpack.c.b16 %v1310, %v1302
    %v2239 = vpack.c.b16 %v1311, %v1303
    %v2240 = vpack.c.b16 %v1312, %v1304
    %v2241 = vpack.c.b16 %v1313, %v1305
    %v2242 = vpack.c.b16 %v1322, %v1314
    %v2243 = vpack.c.b16 %v1323, %v1315
    %v2244 = vpack.c.b16 %v1324, %v1316
    %v2245 = vpack.c.b16 %v1325, %v1317
    %v2246 = vpack.c.b16 %v1326, %v1318
    %v2247 = vpack.c.b16 %v1327, %v1319
    %v2248 = vpack.c.b16 %v1328, %v1320
    %v2249 = vpack.c.b16 %v1329, %v1321
    %v2250 = vpack.c.b16 %v1338, %v1330
    %v2251 = vpack.c.b16 %v1339, %v1331
    %v2252 = vpack.c.b16 %v1340, %v1332
    %v2253 = vpack.c.b16 %v1341, %v1333
    %v2254 = vpack.c.b16 %v1342, %v1334
    %v2255 = vpack.c.b16 %v1343, %v1335
    %v2256 = vpack.c.b16 %v1344, %v1336
    %v2257 = vpack.c.b16 %v1345, %v1337
    %v2258 = vpack.c.b16 %v1354, %v1346
    %v2259 = vpack.c.b16 %v1355, %v1347
    %v2260 = vpack.c.b16 %v1356, %v1348
    %v2261 = vpack.c.b16 %v1357, %v1349
    %v2262 = vpack.c.b16 %v1358, %v1350
    %v2263 = vpack.c.b16 %v1359, %v1351
    %v2264 = vpack.c.b16 %v1360, %v1352
    %v2265 = vpack.c.b16 %v1361, %v1353
    %v2266 = vpack.c.b16 %v1370, %v1362
    %v2267 = vpack.c.b16 %v1371, %v1363
    %v2268 = vpack.c.b16 %v1372, %v1364
    %v2269 = vpack.c.b16 %v1373, %v1365
    %v2270 = vpack.c.b16 %v1374, %v1366
    %v2271 = vpack.c.b16 %v1375, %v1367
    %v2272 = vpack.c.b16 %v1376, %v1368
    %v2273 = vpack.c.b16 %v1377, %v1369
    %v2274 = vpack.c.b16 %v1386, %v1378
    %v2275 = vpack.c.b16 %v1387, %v1379
    %v2276 = vpack.c.b16 %v1388, %v1380
    %v2277 = vpack.c.b16 %v1389, %v1381
    %v2278 = vpack.c.b16 %v1390, %v1382
    %v2279 = vpack.c.b16 %v1391, %v1383
    %v2280 = vpack.c.b16 %v1392, %v1384
    %v2281 = vpack.c.b16 %v1393, %v1385
    %v2282 = vpack.c.b16 %v1402, %v1394
    %v2283 = vpack.c.b16 %v1403, %v1395
    %v2284 = vpack.c.b16 %v1404, %v1396
    %v2285 = vpack.c.b16 %v1405, %v1397
    %v2286 = vpack.c.b16 %v1406, %v1398
    %v2287 = vpack.c.b16 %v1407, %v1399
    %v2288 = vpack.c.b16 %v1408, %v1400
    %v2289 = vpack.c.b16 %v1409, %v1401
    %v2290 = vpack.c.b16 %v1418, %v1410
    %v2291 = vpack.c.b16 %v1419, %v1411
    %v2292 = vpack.c.b16 %v1420, %v1412
    %v2293 = vpack.c.b16 %v1421, %v1413
    %v2294 = vpack.c.b16 %v1422, %v1414
    %v2295 = vpack.c.b16 %v1423, %v1415
    %v2296 = vpack.c.b16 %v1424, %v1416
    %v2297 = vpack.c.b16 %v1425, %v1417
    %v2298 = vpack.c.b16 %v1434, %v1426
    %v2299 = vpack.c.b16 %v1435, %v1427
    %v2300 = vpack.c.b16 %v1436, %v1428
    %v2301 = vpack.c.b16 %v1437, %v1429
    %v2302 = vpack.c.b16 %v1438, %v1430
    %v2303 = vpack.c.b16 %v1439, %v1431
    %v2304 = vpack.c.b16 %v1440, %v1432
    %v2305 = vpack.c.b16 %v1441, %v1433
    %v2306 = vpack.c.b16 %v1450, %v1442
    %v2307 = vpack.c.b16 %v1451, %v1443
    %v2308 = vpack.c.b16 %v1452, %v1444
    %v2309 = vpack.c.b16 %v1453, %v1445
    %v2310 = vpack.c.b16 %v1454, %v1446
    %v2311 = vpack.c.b16 %v1455, %v1447
    %v2312 = vpack.c.b16 %v1456, %v1448
    %v2313 = vpack.c.b16 %v1457, %v1449
    %v2314 = vpack.c.b16 %v1466, %v1458
    %v2315 = vpack.c.b16 %v1467, %v1459
    %v2316 = vpack.c.b16 %v1468, %v1460
    %v2317 = vpack.c.b16 %v1469, %v1461
    %v2318 = vpack.c.b16 %v1470, %v1462
    %v2319 = vpack.c.b16 %v1471, %v1463
    %v2320 = vpack.c.b16 %v1472, %v1464
    %v2321 = vpack.c.b16 %v1473, %v1465
    %v2322 = vpack.c.b16 %v1482, %v1474
    %v2323 = vpack.c.b16 %v1483, %v1475
    %v2324 = vpack.c.b16 %v1484, %v1476
    %v2325 = vpack.c.b16 %v1485, %v1477
    %v2326 = vpack.c.b16 %v1486, %v1478
    %v2327 = vpack.c.b16 %v1487, %v1479
    %v2328 = vpack.c.b16 %v1488, %v1480
    %v2329 = vpack.c.b16 %v1489, %v1481
    %v2330 = vpack.c.b16 %v1498, %v1490
    %v2331 = vpack.c.b16 %v1499, %v1491
    %v2332 = vpack.c.b16 %v1500, %v1492
    %v2333 = vpack.c.b16 %v1501, %v1493
    %v2334 = vpack.c.b16 %v1502, %v1494
    %v2335 = vpack.c.b16 %v1503, %v1495
    %v2336 = vpack.c.b16 %v1504, %v1496
    %v2337 = vpack.c.b16 %v1505, %v1497
    %v2338 = vpack.c.b16 %v1514, %v1506
    %v2339 = vpack.c.b16 %v1515, %v1507
    %v2340 = vpack.c.b16 %v1516, %v1508
    %v2341 = vpack.c.b16 %v1517, %v1509
    %v2342 = vpack.c.b16 %v1518, %v1510
    %v2343 = vpack.c.b16 %v1519, %v1511
    %v2344 = vpack.c.b16 %v1520, %v1512
    %v2345 = vpack.c.b16 %v1521, %v1513
    %v2346 = vpack.c.b16 %v1530, %v1522
    %v2347 = vpack.c.b16 %v1531, %v1523
    %v2348 = vpack.c.b16 %v1532, %v1524
    %v2349 = vpack.c.b16 %v1533, %v1525
    %v2350 = vpack.c.b16 %v1534, %v1526
    %v2351 = vpack.c.b16 %v1535, %v1527
    %v2352 = vpack.c.b16 %v1536, %v1528
    %v2353 = vpack.c.b16 %v1537, %v1529
    %v2354 = vpack.c.b16 %v1546, %v1538
    %v2355 = vpack.c.b16 %v1547, %v1539
    %v2356 = vpack.c.b16 %v1548, %v1540
    %v2357 = vpack.c.b16 %v1549, %v1541
    %v2358 = vpack.c.b16 %v1550, %v1542
    %v2359 = vpack.c.b16 %v1551, %v1543
    %v2360 = vpack.c.b16 %v1552, %v1544
    %v2361 = vpack.c.b16 %v1553, %v1545
    %v2362 = vpack.c.b16 %v1562, %v1554
    %v2363 = vpack.c.b16 %v1563, %v1555
    %v2364 = vpack.c.b16 %v1564, %v1556
    %v2365 = vpack.c.b16 %v1565, %v1557
    %v2366 = vpack.c.b16 %v1566, %v1558
    %v2367 = vpack.c.b16 %v1567, %v1559
    %v2368 = vpack.c.b16 %v1568, %v1560
    %v2369 = vpack.c.b16 %v1569, %v1561
    %v2370 = vpack.c.b16 %v1578, %v1570
    %v2371 = vpack.c.b16 %v1579, %v1571
    %v2372 = vpack.c.b16 %v1580, %v1572
    %v2373 = vpack.c.b16 %v1581, %v1573
    %v2374 = vpack.c.b16 %v1582, %v1574
    %v2375 = vpack.c.b16 %v1583, %v1575
    %v2376 = vpack.c.b16 %v1584, %v1576
    %v2377 = vpack.c.b16 %v1585, %v1577
    %v2378 = vpack.c.b16 %v1594, %v1586
    %v2379 = vpack.c.b16 %v1595, %v1587
    %v2380 = vpack.c.b16 %v1596, %v1588
    %v2381 = vpack.c.b16 %v1597, %v1589
    %v2382 = vpack.c.b16 %v1598, %v1590
    %v2383 = vpack.c.b16 %v1599, %v1591
    %v2384 = vpack.c.b16 %v1600, %v1592
    %v2385 = vpack.c.b16 %v1601, %v1593
    %v2386 = vpack.c.b16 %v1610, %v1602
    %v2387 = vpack.c.b16 %v1611, %v1603
    %v2388 = vpack.c.b16 %v1612, %v1604
    %v2389 = vpack.c.b16 %v1613, %v1605
    %v2390 = vpack.c.b16 %v1614, %v1606
    %v2391 = vpack.c.b16 %v1615, %v1607
    %v2392 = vpack.c.b16 %v1616, %v1608
    %v2393 = vpack.c.b16 %v1617, %v1609
    %v2394 = vpack.c.b16 %v1626, %v1618
    %v2395 = vpack.c.b16 %v1627, %v1619
    %v2396 = vpack.c.b16 %v1628, %v1620
    %v2397 = vpack.c.b16 %v1629, %v1621
    %v2398 = vpack.c.b16 %v1630, %v1622
    %v2399 = vpack.c.b16 %v1631, %v1623
    %v2400 = vpack.c.b16 %v1632, %v1624
    %v2401 = vpack.c.b16 %v1633, %v1625
    %v2402 = vpack.c.b16 %v1642, %v1634
    %v2403 = vpack.c.b16 %v1643, %v1635
    %v2404 = vpack.c.b16 %v1644, %v1636
    %v2405 = vpack.c.b16 %v1645, %v1637
    %v2406 = vpack.c.b16 %v1646, %v1638
    %v2407 = vpack.c.b16 %v1647, %v1639
    %v2408 = vpack.c.b16 %v1648, %v1640
    %v2409 = vpack.c.b16 %v1649, %v1641
    %v2410 = vpack.c.b16 %v1658, %v1650
    %v2411 = vpack.c.b16 %v1659, %v1651
    %v2412 = vpack.c.b16 %v1660, %v1652
    %v2413 = vpack.c.b16 %v1661, %v1653
    %v2414 = vpack.c.b16 %v1662, %v1654
    %v2415 = vpack.c.b16 %v1663, %v1655
    %v2416 = vpack.c.b16 %v1664, %v1656
    %v2417 = vpack.c.b16 %v1665, %v1657
    %v2418 = vpack.c.b16 %v1674, %v1666
    %v2419 = vpack.c.b16 %v1675, %v1667
    %v2420 = vpack.c.b16 %v1676, %v1668
    %v2421 = vpack.c.b16 %v1677, %v1669
    %v2422 = vpack.c.b16 %v1678, %v1670
    %v2423 = vpack.c.b16 %v1679, %v1671
    %v2424 = vpack.c.b16 %v1680, %v1672
    %v2425 = vpack.c.b16 %v1681, %v1673
    %v2426 = vpack.c.b16 %v1690, %v1682
    %v2427 = vpack.c.b16 %v1691, %v1683
    %v2428 = vpack.c.b16 %v1692, %v1684
    %v2429 = vpack.c.b16 %v1693, %v1685
    %v2430 = vpack.c.b16 %v1694, %v1686
    %v2431 = vpack.c.b16 %v1695, %v1687
    %v2432 = vpack.c.b16 %v1696, %v1688
    %v2433 = vpack.c.b16 %v1697, %v1689
    %v2434 = vpack.c.b16 %v1706, %v1698
    %v2435 = vpack.c.b16 %v1707, %v1699
    %v2436 = vpack.c.b16 %v1708, %v1700
    %v2437 = vpack.c.b16 %v1709, %v1701
    %v2438 = vpack.c.b16 %v1710, %v1702
    %v2439 = vpack.c.b16 %v1711, %v1703
    %v2440 = vpack.c.b16 %v1712, %v1704
    %v2441 = vpack.c.b16 %v1713, %v1705
    %v2442 = vpack.c.b16 %v1722, %v1714
    %v2443 = vpack.c.b16 %v1723, %v1715
    %v2444 = vpack.c.b16 %v1724, %v1716
    %v2445 = vpack.c.b16 %v1725, %v1717
    %v2446 = vpack.c.b16 %v1726, %v1718
    %v2447 = vpack.c.b16 %v1727, %v1719
    %v2448 = vpack.c.b16 %v1728, %v1720
    %v2449 = vpack.c.b16 %v1729, %v1721
    %v2450 = vpack.c.b16 %v1738, %v1730
    %v2451 = vpack.c.b16 %v1739, %v1731
    %v2452 = vpack.c.b16 %v1740, %v1732
    %v2453 = vpack.c.b16 %v1741, %v1733
    %v2454 = vpack.c.b16 %v1742, %v1734
    %v2455 = vpack.c.b16 %v1743, %v1735
    %v2456 = vpack.c.b16 %v1744, %v1736
    %v2457 = vpack.c.b16 %v1745, %v1737
    %v2458 = vpack.c.b16 %v1754, %v1746
    %v2459 = vpack.c.b16 %v1755, %v1747
    %v2460 = vpack.c.b16 %v1756, %v1748
    %v2461 = vpack.c.b16 %v1757, %v1749
    %v2462 = vpack.c.b16 %v1758, %v1750
    %v2463 = vpack.c.b16 %v1759, %v1751
    %v2464 = vpack.c.b16 %v1760, %v1752
    %v2465 = vpack.c.b16 %v1761, %v1753
    %v2466 = vpack.c.b16 %v1770, %v1762
    %v2467 = vpack.c.b16 %v1771, %v1763
    %v2468 = vpack.c.b16 %v1772, %v1764
    %v2469 = vpack.c.b16 %v1773, %v1765
    %v2470 = vpack.c.b16 %v1774, %v1766
    %v2471 = vpack.c.b16 %v1775, %v1767
    %v2472 = vpack.c.b16 %v1776, %v1768
    %v2473 = vpack.c.b16 %v1777, %v1769
    %v2474 = vpack.c.b16 %v1786, %v1778
    %v2475 = vpack.c.b16 %v1787, %v1779
    %v2476 = vpack.c.b16 %v1788, %v1780
    %v2477 = vpack.c.b16 %v1789, %v1781
    %v2478 = vpack.c.b16 %v1790, %v1782
    %v2479 = vpack.c.b16 %v1791, %v1783
    %v2480 = vpack.c.b16 %v1792, %v1784
    %v2481 = vpack.c.b16 %v1793, %v1785
    %v2482 = vpack.c.b16 %v1802, %v1794
    %v2483 = vpack.c.b16 %v1803, %v1795
    %v2484 = vpack.c.b16 %v1804, %v1796
    %v2485 = vpack.c.b16 %v1805, %v1797
    %v2486 = vpack.c.b16 %v1806, %v1798
    %v2487 = vpack.c.b16 %v1807, %v1799
    %v2488 = vpack.c.b16 %v1808, %v1800
    %v2489 = vpack.c.b16 %v1809, %v1801
    %v2490 = vpack.c.b16 %v1818, %v1810
    %v2491 = vpack.c.b16 %v1819, %v1811
    %v2492 = vpack.c.b16 %v1820, %v1812
    %v2493 = vpack.c.b16 %v1821, %v1813
    %v2494 = vpack.c.b16 %v1822, %v1814
    %v2495 = vpack.c.b16 %v1823, %v1815
    %v2496 = vpack.c.b16 %v1824, %v1816
    %v2497 = vpack.c.b16 %v1825, %v1817
    %v2498 = vpack.c.b16 %v1834, %v1826
    %v2499 = vpack.c.b16 %v1835, %v1827
    %v2500 = vpack.c.b16 %v1836, %v1828
    %v2501 = vpack.c.b16 %v1837, %v1829
    %v2502 = vpack.c.b16 %v1838, %v1830
    %v2503 = vpack.c.b16 %v1839, %v1831
    %v2504 = vpack.c.b16 %v1840, %v1832
    %v2505 = vpack.c.b16 %v1841, %v1833
    %v2506 = vpack.c.b16 %v1850, %v1842
    %v2507 = vpack.c.b16 %v1851, %v1843
    %v2508 = vpack.c.b16 %v1852, %v1844
    %v2509 = vpack.c.b16 %v1853, %v1845
    %v2510 = vpack.c.b16 %v1854, %v1846
    %v2511 = vpack.c.b16 %v1855, %v1847
    %v2512 = vpack.c.b16 %v1856, %v1848
    %v2513 = vpack.c.b16 %v1857, %v1849
    %v2514 = vpack.c.b16 %v1866, %v1858
    %v2515 = vpack.c.b16 %v1867, %v1859
    %v2516 = vpack.c.b16 %v1868, %v1860
    %v2517 = vpack.c.b16 %v1869, %v1861
    %v2518 = vpack.c.b16 %v1870, %v1862
    %v2519 = vpack.c.b16 %v1871, %v1863
    %v2520 = vpack.c.b16 %v1872, %v1864
    %v2521 = vpack.c.b16 %v1873, %v1865
    %v2522 = vpack.c.b16 %v1882, %v1874
    %v2523 = vpack.c.b16 %v1883, %v1875
    %v2524 = vpack.c.b16 %v1884, %v1876
    %v2525 = vpack.c.b16 %v1885, %v1877
    %v2526 = vpack.c.b16 %v1886, %v1878
    %v2527 = vpack.c.b16 %v1887, %v1879
    %v2528 = vpack.c.b16 %v1888, %v1880
    %v2529 = vpack.c.b16 %v1889, %v1881
    %v2530 = vpack.c.b16 %v1898, %v1890
    %v2531 = vpack.c.b16 %v1899, %v1891
    %v2532 = vpack.c.b16 %v1900, %v1892
    %v2533 = vpack.c.b16 %v1901, %v1893
    %v2534 = vpack.c.b16 %v1902, %v1894
    %v2535 = vpack.c.b16 %v1903, %v1895
    %v2536 = vpack.c.b16 %v1904, %v1896
    %v2537 = vpack.c.b16 %v1905, %v1897
    %v2538 = vpack.c.b16 %v1914, %v1906
    %v2539 = vpack.c.b16 %v1915, %v1907
    %v2540 = vpack.c.b16 %v1916, %v1908
    %v2541 = vpack.c.b16 %v1917, %v1909
    %v2542 = vpack.c.b16 %v1918, %v1910
    %v2543 = vpack.c.b16 %v1919, %v1911
    %v2544 = vpack.c.b16 %v1920, %v1912
    %v2545 = vpack.c.b16 %v1921, %v1913
    %v2546 = vpack.c.b16 %v1930, %v1922
    %v2547 = vpack.c.b16 %v1931, %v1923
    %v2548 = vpack.c.b16 %v1932, %v1924
    %v2549 = vpack.c.b16 %v1933, %v1925
    %v2550 = vpack.c.b16 %v1934, %v1926
    %v2551 = vpack.c.b16 %v1935, %v1927
    %v2552 = vpack.c.b16 %v1936, %v1928
    %v2553 = vpack.c.b16 %v1937, %v1929
    %v2554 = vpack.c.b16 %v1946, %v1938
    %v2555 = vpack.c.b16 %v1947, %v1939
    %v2556 = vpack.c.b16 %v1948, %v1940
    %v2557 = vpack.c.b16 %v1949, %v1941
    %v2558 = vpack.c.b16 %v1950, %v1942
    %v2559 = vpack.c.b16 %v1951, %v1943
    %v2560 = vpack.c.b16 %v1952, %v1944
    %v2561 = vpack.c.b16 %v1953, %v1945
    %v2562 = vpack.c.b16 %v1962, %v1954
    %v2563 = vpack.c.b16 %v1963, %v1955
    %v2564 = vpack.c.b16 %v1964, %v1956
    %v2565 = vpack.c.b16 %v1965, %v1957
    %v2566 = vpack.c.b16 %v1966, %v1958
    %v2567 = vpack.c.b16 %v1967, %v1959
    %v2568 = vpack.c.b16 %v1968, %v1960
    %v2569 = vpack.c.b16 %v1969, %v1961
    %v2570 = vpack.c.b16 %v1978, %v1970
    %v2571 = vpack.c.b16 %v1979, %v1971
    %v2572 = vpack.c.b16 %v1980, %v1972
    %v2573 = vpack.c.b16 %v1981, %v1973
    %v2574 = vpack.c.b16 %v1982, %v1974
    %v2575 = vpack.c.b16 %v1983, %v1975
    %v2576 = vpack.c.b16 %v1984, %v1976
    %v2577 = vpack.c.b16 %v1985, %v1977
    %v2578 = vpack.c.b16 %v1994, %v1986
    %v2579 = vpack.c.b16 %v1995, %v1987
    %v2580 = vpack.c.b16 %v1996, %v1988
    %v2581 = vpack.c.b16 %v1997, %v1989
    %v2582 = vpack.c.b16 %v1998, %v1990
    %v2583 = vpack.c.b16 %v1999, %v1991
    %v2584 = vpack.c.b16 %v2000, %v1992
    %v2585 = vpack.c.b16 %v2001, %v1993
    %v2586 = vpack.c.b16 %v2010, %v2002
    %v2587 = vpack.c.b16 %v2011, %v2003
    %v2588 = vpack.c.b16 %v2012, %v2004
    %v2589 = vpack.c.b16 %v2013, %v2005
    %v2590 = vpack.c.b16 %v2014, %v2006
    %v2591 = vpack.c.b16 %v2015, %v2007
    %v2592 = vpack.c.b16 %v2016, %v2008
    %v2593 = vpack.c.b16 %v2017, %v2009
    %v2594 = vpack.c.b16 %v2026, %v2018
    %v2595 = vpack.c.b16 %v2027, %v2019
    %v2596 = vpack.c.b16 %v2028, %v2020
    %v2597 = vpack.c.b16 %v2029, %v2021
    %v2598 = vpack.c.b16 %v2030, %v2022
    %v2599 = vpack.c.b16 %v2031, %v2023
    %v2600 = vpack.c.b16 %v2032, %v2024
    %v2601 = vpack.c.b16 %v2033, %v2025
    %v2602 = vpack.c.b16 %v2042, %v2034
    %v2603 = vpack.c.b16 %v2043, %v2035
    %v2604 = vpack.c.b16 %v2044, %v2036
    %v2605 = vpack.c.b16 %v2045, %v2037
    %v2606 = vpack.c.b16 %v2046, %v2038
    %v2607 = vpack.c.b16 %v2047, %v2039
    %v2608 = vpack.c.b16 %v2048, %v2040
    %v2609 = vpack.c.b16 %v2049, %v2041
    %v2610 = vpack.c.b16 %v2058, %v2050
    %v2611 = vpack.c.b16 %v2059, %v2051
    %v2612 = vpack.c.b16 %v2060, %v2052
    %v2613 = vpack.c.b16 %v2061, %v2053
    %v2614 = vpack.c.b16 %v2062, %v2054
    %v2615 = vpack.c.b16 %v2063, %v2055
    %v2616 = vpack.c.b16 %v2064, %v2056
    %v2617 = vpack.c.b16 %v2065, %v2057
    %v2618 = vpack.c.b16 %v2074, %v2066
    %v2619 = vpack.c.b16 %v2075, %v2067
    %v2620 = vpack.c.b16 %v2076, %v2068
    %v2621 = vpack.c.b16 %v2077, %v2069
    %v2622 = vpack.c.b16 %v2078, %v2070
    %v2623 = vpack.c.b16 %v2079, %v2071
    %v2624 = vpack.c.b16 %v2080, %v2072
    %v2625 = vpack.c.b16 %v2081, %v2073
    %v2626 = vpack.c.b16 %v2090, %v2082
    %v2627 = vpack.c.b16 %v2091, %v2083
    %v2628 = vpack.c.b16 %v2092, %v2084
    %v2629 = vpack.c.b16 %v2093, %v2085
    %v2630 = vpack.c.b16 %v2094, %v2086
    %v2631 = vpack.c.b16 %v2095, %v2087
    %v2632 = vpack.c.b16 %v2096, %v2088
    %v2633 = vpack.c.b16 %v2097, %v2089
    %v2634 = vpack.c.b16 %v2106, %v2098
    %v2635 = vpack.c.b16 %v2107, %v2099
    %v2636 = vpack.c.b16 %v2108, %v2100
    %v2637 = vpack.c.b16 %v2109, %v2101
    %v2638 = vpack.c.b16 %v2110, %v2102
    %v2639 = vpack.c.b16 %v2111, %v2103
    %v2640 = vpack.c.b16 %v2112, %v2104
    %v2641 = vpack.c.b16 %v2113, %v2105
    %v2642 = vpack.c.b16 %v2122, %v2114
    %v2643 = vpack.c.b16 %v2123, %v2115
    %v2644 = vpack.c.b16 %v2124, %v2116
    %v2645 = vpack.c.b16 %v2125, %v2117
    %v2646 = vpack.c.b16 %v2126, %v2118
    %v2647 = vpack.c.b16 %v2127, %v2119
    %v2648 = vpack.c.b16 %v2128, %v2120
    %v2649 = vpack.c.b16 %v2129, %v2121
    %v2650 = vpack.c.b16 %v2138, %v2130
    %v2651 = vpack.c.b16 %v2139, %v2131
    %v2652 = vpack.c.b16 %v2140, %v2132
    %v2653 = vpack.c.b16 %v2141, %v2133
    %v2654 = vpack.c.b16 %v2142, %v2134
    %v2655 = vpack.c.b16 %v2143, %v2135
    %v2656 = vpack.c.b16 %v2144, %v2136
    %v2657 = vpack.c.b16 %v2145, %v2137
    %3170 = vmatprep.subr.bf16.mxu0 %v2203
    %3171 = vmatpush1.bf16.msra.mxu0 %v2202
    %3172 = vmatprep.subr.bf16.mxu0 %v2195
    %3173 = vmatpush1.bf16.msra.mxu0 %v2194
    %3174 = vmatprep.subr.bf16.mxu0 %v2187
    %3175 = vmatpush1.bf16.msra.mxu0 %v2186
    %3176 = vmatprep.subr.bf16.mxu0 %v2179
    %3177 = vmatpush1.bf16.msra.mxu0 %v2178
    %3178 = vmatprep.subr.bf16.mxu0 %v2171
    %3179 = vmatpush1.bf16.msra.mxu0 %v2170
    %3180 = vmatprep.subr.bf16.mxu0 %v2163
    %3181 = vmatpush1.bf16.msra.mxu0 %v2162
    %3182 = vmatprep.subr.bf16.mxu0 %v2155
    %3183 = vmatpush1.bf16.msra.mxu0 %v2154
    %3184 = vmatprep.subr.bf16.mxu0 %v2147
    %3185 = vmatpush1.bf16.msra.mxu0 %v2146
    %3186 = vmatprep.subr.bf16.mxu0 %v2267
    %3187 = vmatpush2.bf16.msra.mxu0 %v2266
    %3188 = vmatprep.subr.bf16.mxu0 %v2259
    %3189 = vmatpush2.bf16.msra.mxu0 %v2258
    %3190 = vmatprep.subr.bf16.mxu0 %v2251
    %3191 = vmatpush2.bf16.msra.mxu0 %v2250
    %3192 = vmatprep.subr.bf16.mxu0 %v2243
    %3193 = vmatpush2.bf16.msra.mxu0 %v2242
    %3194 = vmatprep.subr.bf16.mxu0 %v2235
    %3195 = vmatpush2.bf16.msra.mxu0 %v2234
    %3196 = vmatprep.subr.bf16.mxu0 %v2227
    %3197 = vmatpush2.bf16.msra.mxu0 %v2226
    %3198 = vmatprep.subr.bf16.mxu0 %v2219
    %3199 = vmatpush2.bf16.msra.mxu0 %v2218
    %3200 = vmatprep.subr.bf16.mxu0 %v2211
    %3201 = vmatpush2.bf16.msra.mxu0 %v2210
    %3202 = vmatprep.mubr.bf16.mxu0 %v91
    %3203 = vmatmul.mubr.bf16.gmra.mxu0 %v90
    %v3204 = vpop.f32.mrf.mxu0
    %v3205 = vadd.f32 0.0, %v3204
    %v3206 = vpop.f32.mrf.mxu0
    %v3207 = vadd.f32 0.0, %v3206
    %v3208 = vpop.f32.mrf.mxu0
    %v3209 = vpop.f32.mrf.mxu0
    %3210 = vdwg.mxu0
    %3211 = vmatprep.subr.bf16.mxu0 %v2331
    %3212 = vmatpush1.bf16.msra.mxu0 %v2330
    %3213 = vmatprep.subr.bf16.mxu0 %v2323
    %3214 = vmatpush1.bf16.msra.mxu0 %v2322
    %3215 = vmatprep.subr.bf16.mxu0 %v2315
    %3216 = vmatpush1.bf16.msra.mxu0 %v2314
    %3217 = vmatprep.subr.bf16.mxu0 %v2307
    %3218 = vmatpush1.bf16.msra.mxu0 %v2306
    %3219 = vmatprep.subr.bf16.mxu0 %v2299
    %3220 = vmatpush1.bf16.msra.mxu0 %v2298
    %3221 = vmatprep.subr.bf16.mxu0 %v2291
    %3222 = vmatpush1.bf16.msra.mxu0 %v2290
    %3223 = vmatprep.subr.bf16.mxu0 %v2283
    %3224 = vmatpush1.bf16.msra.mxu0 %v2282
    %3225 = vmatprep.subr.bf16.mxu0 %v2275
    %3226 = vmatpush1.bf16.msra.mxu0 %v2274
    %3227 = vmatprep.subr.bf16.mxu0 %v2395
    %3228 = vmatpush2.bf16.msra.mxu0 %v2394
    %3229 = vmatprep.subr.bf16.mxu0 %v2387
    %3230 = vmatpush2.bf16.msra.mxu0 %v2386
    %3231 = vmatprep.subr.bf16.mxu0 %v2379
    %3232 = vmatpush2.bf16.msra.mxu0 %v2378
    %3233 = vmatprep.subr.bf16.mxu0 %v2371
    %3234 = vmatpush2.bf16.msra.mxu0 %v2370
    %3235 = vmatprep.subr.bf16.mxu0 %v2363
    %3236 = vmatpush2.bf16.msra.mxu0 %v2362
    %3237 = vmatprep.subr.bf16.mxu0 %v2355
    %3238 = vmatpush2.bf16.msra.mxu0 %v2354
    %3239 = vmatprep.subr.bf16.mxu0 %v2347
    %3240 = vmatpush2.bf16.msra.mxu0 %v2346
    %3241 = vmatprep.subr.bf16.mxu0 %v2339
    %3242 = vmatpush2.bf16.msra.mxu0 %v2338
    %3243 = vmatprep.mubr.bf16.mxu0 %v93
    %3244 = vmatmul.mubr.bf16.gmra.mxu0 %v92
    %v3245 = vpop.f32.mrf.mxu0
    %v3246 = vadd.f32 %v3205, %v3245
    %v3247 = vpop.f32.mrf.mxu0
    %v3248 = vadd.f32 %v3207, %v3247
    %v3249 = vpop.f32.mrf.mxu0
    %v3250 = vpop.f32.mrf.mxu0
    %3251 = vdwg.mxu0
    %3252 = vmatprep.subr.bf16.mxu0 %v2459
    %3253 = vmatpush1.bf16.msra.mxu0 %v2458
    %3254 = vmatprep.subr.bf16.mxu0 %v2451
    %3255 = vmatpush1.bf16.msra.mxu0 %v2450
    %3256 = vmatprep.subr.bf16.mxu0 %v2443
    %3257 = vmatpush1.bf16.msra.mxu0 %v2442
    %3258 = vmatprep.subr.bf16.mxu0 %v2435
    %3259 = vmatpush1.bf16.msra.mxu0 %v2434
    %3260 = vmatprep.subr.bf16.mxu0 %v2427
    %3261 = vmatpush1.bf16.msra.mxu0 %v2426
    %3262 = vmatprep.subr.bf16.mxu0 %v2419
    %3263 = vmatpush1.bf16.msra.mxu0 %v2418
    %3264 = vmatprep.subr.bf16.mxu0 %v2411
    %3265 = vmatpush1.bf16.msra.mxu0 %v2410
    %3266 = vmatprep.subr.bf16.mxu0 %v2403
    %3267 = vmatpush1.bf16.msra.mxu0 %v2402
    %3268 = vmatprep.subr.bf16.mxu0 %v2523
    %3269 = vmatpush2.bf16.msra.mxu0 %v2522
    %3270 = vmatprep.subr.bf16.mxu0 %v2515
    %3271 = vmatpush2.bf16.msra.mxu0 %v2514
    %3272 = vmatprep.subr.bf16.mxu0 %v2507
    %3273 = vmatpush2.bf16.msra.mxu0 %v2506
    %3274 = vmatprep.subr.bf16.mxu0 %v2499
    %3275 = vmatpush2.bf16.msra.mxu0 %v2498
    %3276 = vmatprep.subr.bf16.mxu0 %v2491
    %3277 = vmatpush2.bf16.msra.mxu0 %v2490
    %3278 = vmatprep.subr.bf16.mxu0 %v2483
    %3279 = vmatpush2.bf16.msra.mxu0 %v2482
    %3280 = vmatprep.subr.bf16.mxu0 %v2475
    %3281 = vmatpush2.bf16.msra.mxu0 %v2474
    %3282 = vmatprep.subr.bf16.mxu0 %v2467
    %3283 = vmatpush2.bf16.msra.mxu0 %v2466
    %3284 = vmatprep.mubr.bf16.mxu0 %v95
    %3285 = vmatmul.mubr.bf16.gmra.mxu0 %v94
    %v3286 = vpop.f32.mrf.mxu0
    %v3287 = vadd.f32 %v3246, %v3286
    %v3288 = vpop.f32.mrf.mxu0
    %v3289 = vadd.f32 %v3248, %v3288
    %v3290 = vpop.f32.mrf.mxu0
    %v3291 = vpop.f32.mrf.mxu0
    %3292 = vdwg.mxu0
    %3293 = vmatprep.subr.bf16.mxu0 %v2587
    %3294 = vmatpush1.bf16.msra.mxu0 %v2586
    %3295 = vmatprep.subr.bf16.mxu0 %v2579
    %3296 = vmatpush1.bf16.msra.mxu0 %v2578
    %3297 = vmatprep.subr.bf16.mxu0 %v2571
    %3298 = vmatpush1.bf16.msra.mxu0 %v2570
    %3299 = vmatprep.subr.bf16.mxu0 %v2563
    %3300 = vmatpush1.bf16.msra.mxu0 %v2562
    %3301 = vmatprep.subr.bf16.mxu0 %v2555
    %3302 = vmatpush1.bf16.msra.mxu0 %v2554
    %3303 = vmatprep.subr.bf16.mxu0 %v2547
    %3304 = vmatpush1.bf16.msra.mxu0 %v2546
    %3305 = vmatprep.subr.bf16.mxu0 %v2539
    %3306 = vmatpush1.bf16.msra.mxu0 %v2538
    %3307 = vmatprep.subr.bf16.mxu0 %v2531
    %3308 = vmatpush1.bf16.msra.mxu0 %v2530
    %3309 = vmatprep.subr.bf16.mxu0 %v2651
    %3310 = vmatpush2.bf16.msra.mxu0 %v2650
    %3311 = vmatprep.subr.bf16.mxu0 %v2643
    %3312 = vmatpush2.bf16.msra.mxu0 %v2642
    %3313 = vmatprep.subr.bf16.mxu0 %v2635
    %3314 = vmatpush2.bf16.msra.mxu0 %v2634
    %3315 = vmatprep.subr.bf16.mxu0 %v2627
    %3316 = vmatpush2.bf16.msra.mxu0 %v2626
    %3317 = vmatprep.subr.bf16.mxu0 %v2619
    %3318 = vmatpush2.bf16.msra.mxu0 %v2618
    %3319 = vmatprep.subr.bf16.mxu0 %v2611
    %3320 = vmatpush2.bf16.msra.mxu0 %v2610
    %3321 = vmatprep.subr.bf16.mxu0 %v2603
    %3322 = vmatpush2.bf16.msra.mxu0 %v2602
    %3323 = vmatprep.subr.bf16.mxu0 %v2595
    %3324 = vmatpush2.bf16.msra.mxu0 %v2594
    %3325 = vmatprep.mubr.bf16.mxu0 %v97
    %3326 = vmatmul.mubr.bf16.gmra.mxu0 %v96
    %v3327 = vpop.f32.mrf.mxu0
    %v3328 = vadd.f32 %v3287, %v3327
    %v3329 = vpop.f32.mrf.mxu0
    %v3330 = vadd.f32 %v3289, %v3329
    %v3331 = vpop.f32.mrf.mxu0
    %v3332 = vpop.f32.mrf.mxu0
    %3333 = vdwg.mxu0
    %3334 = vmatprep.subr.bf16.mxu0 %v2205
    %3335 = vmatpush1.bf16.msra.mxu0 %v2204
    %3336 = vmatprep.subr.bf16.mxu0 %v2197
    %3337 = vmatpush1.bf16.msra.mxu0 %v2196
    %3338 = vmatprep.subr.bf16.mxu0 %v2189
    %3339 = vmatpush1.bf16.msra.mxu0 %v2188
    %3340 = vmatprep.subr.bf16.mxu0 %v2181
    %3341 = vmatpush1.bf16.msra.mxu0 %v2180
    %3342 = vmatprep.subr.bf16.mxu0 %v2173
    %3343 = vmatpush1.bf16.msra.mxu0 %v2172
    %3344 = vmatprep.subr.bf16.mxu0 %v2165
    %3345 = vmatpush1.bf16.msra.mxu0 %v2164
    %3346 = vmatprep.subr.bf16.mxu0 %v2157
    %3347 = vmatpush1.bf16.msra.mxu0 %v2156
    %3348 = vmatprep.subr.bf16.mxu0 %v2149
    %3349 = vmatpush1.bf16.msra.mxu0 %v2148
    %3350 = vmatprep.subr.bf16.mxu0 %v2269
    %3351 = vmatpush2.bf16.msra.mxu0 %v2268
    %3352 = vmatprep.subr.bf16.mxu0 %v2261
    %3353 = vmatpush2.bf16.msra.mxu0 %v2260
    %3354 = vmatprep.subr.bf16.mxu0 %v2253
    %3355 = vmatpush2.bf16.msra.mxu0 %v2252
    %3356 = vmatprep.subr.bf16.mxu0 %v2245
    %3357 = vmatpush2.bf16.msra.mxu0 %v2244
    %3358 = vmatprep.subr.bf16.mxu0 %v2237
    %3359 = vmatpush2.bf16.msra.mxu0 %v2236
    %3360 = vmatprep.subr.bf16.mxu0 %v2229
    %3361 = vmatpush2.bf16.msra.mxu0 %v2228
    %3362 = vmatprep.subr.bf16.mxu0 %v2221
    %3363 = vmatpush2.bf16.msra.mxu0 %v2220
    %3364 = vmatprep.subr.bf16.mxu0 %v2213
    %3365 = vmatpush2.bf16.msra.mxu0 %v2212
    %3366 = vmatprep.mubr.bf16.mxu0 %v91
    %3367 = vmatmul.mubr.bf16.gmra.mxu0 %v90
    %v3368 = vpop.f32.mrf.mxu0
    %v3369 = vadd.f32 0.0, %v3368
    %v3370 = vpop.f32.mrf.mxu0
    %v3371 = vadd.f32 0.0, %v3370
    %v3372 = vpop.f32.mrf.mxu0
    %v3373 = vpop.f32.mrf.mxu0
    %3374 = vdwg.mxu0
    %3375 = vmatprep.subr.bf16.mxu0 %v2333
    %3376 = vmatpush1.bf16.msra.mxu0 %v2332
    %3377 = vmatprep.subr.bf16.mxu0 %v2325
    %3378 = vmatpush1.bf16.msra.mxu0 %v2324
    %3379 = vmatprep.subr.bf16.mxu0 %v2317
    %3380 = vmatpush1.bf16.msra.mxu0 %v2316
    %3381 = vmatprep.subr.bf16.mxu0 %v2309
    %3382 = vmatpush1.bf16.msra.mxu0 %v2308
    %3383 = vmatprep.subr.bf16.mxu0 %v2301
    %3384 = vmatpush1.bf16.msra.mxu0 %v2300
    %3385 = vmatprep.subr.bf16.mxu0 %v2293
    %3386 = vmatpush1.bf16.msra.mxu0 %v2292
    %3387 = vmatprep.subr.bf16.mxu0 %v2285
    %3388 = vmatpush1.bf16.msra.mxu0 %v2284
    %3389 = vmatprep.subr.bf16.mxu0 %v2277
    %3390 = vmatpush1.bf16.msra.mxu0 %v2276
    %3391 = vmatprep.subr.bf16.mxu0 %v2397
    %3392 = vmatpush2.bf16.msra.mxu0 %v2396
    %3393 = vmatprep.subr.bf16.mxu0 %v2389
    %3394 = vmatpush2.bf16.msra.mxu0 %v2388
    %3395 = vmatprep.subr.bf16.mxu0 %v2381
    %3396 = vmatpush2.bf16.msra.mxu0 %v2380
    %3397 = vmatprep.subr.bf16.mxu0 %v2373
    %3398 = vmatpush2.bf16.msra.mxu0 %v2372
    %3399 = vmatprep.subr.bf16.mxu0 %v2365
    %3400 = vmatpush2.bf16.msra.mxu0 %v2364
    %3401 = vmatprep.subr.bf16.mxu0 %v2357
    %3402 = vmatpush2.bf16.msra.mxu0 %v2356
    %3403 = vmatprep.subr.bf16.mxu0 %v2349
    %3404 = vmatpush2.bf16.msra.mxu0 %v2348
    %3405 = vmatprep.subr.bf16.mxu0 %v2341
    %3406 = vmatpush2.bf16.msra.mxu0 %v2340
    %3407 = vmatprep.mubr.bf16.mxu0 %v93
    %3408 = vmatmul.mubr.bf16.gmra.mxu0 %v92
    %v3409 = vpop.f32.mrf.mxu0
    %v3410 = vadd.f32 %v3369, %v3409
    %v3411 = vpop.f32.mrf.mxu0
    %v3412 = vadd.f32 %v3371, %v3411
    %v3413 = vpop.f32.mrf.mxu0
    %v3414 = vpop.f32.mrf.mxu0
    %3415 = vdwg.mxu0
    %3416 = vmatprep.subr.bf16.mxu0 %v2461
    %3417 = vmatpush1.bf16.msra.mxu0 %v2460
    %3418 = vmatprep.subr.bf16.mxu0 %v2453
    %3419 = vmatpush1.bf16.msra.mxu0 %v2452
    %3420 = vmatprep.subr.bf16.mxu0 %v2445
    %3421 = vmatpush1.bf16.msra.mxu0 %v2444
    %3422 = vmatprep.subr.bf16.mxu0 %v2437
    %3423 = vmatpush1.bf16.msra.mxu0 %v2436
    %3424 = vmatprep.subr.bf16.mxu0 %v2429
    %3425 = vmatpush1.bf16.msra.mxu0 %v2428
    %3426 = vmatprep.subr.bf16.mxu0 %v2421
    %3427 = vmatpush1.bf16.msra.mxu0 %v2420
    %3428 = vmatprep.subr.bf16.mxu0 %v2413
    %3429 = vmatpush1.bf16.msra.mxu0 %v2412
    %3430 = vmatprep.subr.bf16.mxu0 %v2405
    %3431 = vmatpush1.bf16.msra.mxu0 %v2404
    %3432 = vmatprep.subr.bf16.mxu0 %v2525
    %3433 = vmatpush2.bf16.msra.mxu0 %v2524
    %3434 = vmatprep.subr.bf16.mxu0 %v2517
    %3435 = vmatpush2.bf16.msra.mxu0 %v2516
    %3436 = vmatprep.subr.bf16.mxu0 %v2509
    %3437 = vmatpush2.bf16.msra.mxu0 %v2508
    %3438 = vmatprep.subr.bf16.mxu0 %v2501
    %3439 = vmatpush2.bf16.msra.mxu0 %v2500
    %3440 = vmatprep.subr.bf16.mxu0 %v2493
    %3441 = vmatpush2.bf16.msra.mxu0 %v2492
    %3442 = vmatprep.subr.bf16.mxu0 %v2485
    %3443 = vmatpush2.bf16.msra.mxu0 %v2484
    %3444 = vmatprep.subr.bf16.mxu0 %v2477
    %3445 = vmatpush2.bf16.msra.mxu0 %v2476
    %3446 = vmatprep.subr.bf16.mxu0 %v2469
    %3447 = vmatpush2.bf16.msra.mxu0 %v2468
    %3448 = vmatprep.mubr.bf16.mxu0 %v95
    %3449 = vmatmul.mubr.bf16.gmra.mxu0 %v94
    %v3450 = vpop.f32.mrf.mxu0
    %v3451 = vadd.f32 %v3410, %v3450
    %v3452 = vpop.f32.mrf.mxu0
    %v3453 = vadd.f32 %v3412, %v3452
    %v3454 = vpop.f32.mrf.mxu0
    %v3455 = vpop.f32.mrf.mxu0
    %3456 = vdwg.mxu0
    %3457 = vmatprep.subr.bf16.mxu0 %v2589
    %3458 = vmatpush1.bf16.msra.mxu0 %v2588
    %3459 = vmatprep.subr.bf16.mxu0 %v2581
    %3460 = vmatpush1.bf16.msra.mxu0 %v2580
    %3461 = vmatprep.subr.bf16.mxu0 %v2573
    %3462 = vmatpush1.bf16.msra.mxu0 %v2572
    %3463 = vmatprep.subr.bf16.mxu0 %v2565
    %3464 = vmatpush1.bf16.msra.mxu0 %v2564
    %3465 = vmatprep.subr.bf16.mxu0 %v2557
    %3466 = vmatpush1.bf16.msra.mxu0 %v2556
    %3467 = vmatprep.subr.bf16.mxu0 %v2549
    %3468 = vmatpush1.bf16.msra.mxu0 %v2548
    %3469 = vmatprep.subr.bf16.mxu0 %v2541
    %3470 = vmatpush1.bf16.msra.mxu0 %v2540
    %3471 = vmatprep.subr.bf16.mxu0 %v2533
    %3472 = vmatpush1.bf16.msra.mxu0 %v2532
    %3473 = vmatprep.subr.bf16.mxu0 %v2653
    %3474 = vmatpush2.bf16.msra.mxu0 %v2652
    %3475 = vmatprep.subr.bf16.mxu0 %v2645
    %3476 = vmatpush2.bf16.msra.mxu0 %v2644
    %3477 = vmatprep.subr.bf16.mxu0 %v2637
    %3478 = vmatpush2.bf16.msra.mxu0 %v2636
    %3479 = vmatprep.subr.bf16.mxu0 %v2629
    %3480 = vmatpush2.bf16.msra.mxu0 %v2628
    %3481 = vmatprep.subr.bf16.mxu0 %v2621
    %3482 = vmatpush2.bf16.msra.mxu0 %v2620
    %3483 = vmatprep.subr.bf16.mxu0 %v2613
    %3484 = vmatpush2.bf16.msra.mxu0 %v2612
    %3485 = vmatprep.subr.bf16.mxu0 %v2605
    %3486 = vmatpush2.bf16.msra.mxu0 %v2604
    %3487 = vmatprep.subr.bf16.mxu0 %v2597
    %3488 = vmatpush2.bf16.msra.mxu0 %v2596
    %3489 = vmatprep.mubr.bf16.mxu0 %v97
    %3490 = vmatmul.mubr.bf16.gmra.mxu0 %v96
    %v3491 = vpop.f32.mrf.mxu0
    %v3492 = vadd.f32 %v3451, %v3491
    %v3493 = vpop.f32.mrf.mxu0
    %v3494 = vadd.f32 %v3453, %v3493
    %v3495 = vpop.f32.mrf.mxu0
    %v3496 = vpop.f32.mrf.mxu0
    %3497 = vdwg.mxu0
    %3498 = vmatprep.subr.bf16.mxu0 %v2207
    %3499 = vmatpush1.bf16.msra.mxu0 %v2206
    %3500 = vmatprep.subr.bf16.mxu0 %v2199
    %3501 = vmatpush1.bf16.msra.mxu0 %v2198
    %3502 = vmatprep.subr.bf16.mxu0 %v2191
    %3503 = vmatpush1.bf16.msra.mxu0 %v2190
    %3504 = vmatprep.subr.bf16.mxu0 %v2183
    %3505 = vmatpush1.bf16.msra.mxu0 %v2182
    %3506 = vmatprep.subr.bf16.mxu0 %v2175
    %3507 = vmatpush1.bf16.msra.mxu0 %v2174
    %3508 = vmatprep.subr.bf16.mxu0 %v2167
    %3509 = vmatpush1.bf16.msra.mxu0 %v2166
    %3510 = vmatprep.subr.bf16.mxu0 %v2159
    %3511 = vmatpush1.bf16.msra.mxu0 %v2158
    %3512 = vmatprep.subr.bf16.mxu0 %v2151
    %3513 = vmatpush1.bf16.msra.mxu0 %v2150
    %3514 = vmatprep.subr.bf16.mxu0 %v2271
    %3515 = vmatpush2.bf16.msra.mxu0 %v2270
    %3516 = vmatprep.subr.bf16.mxu0 %v2263
    %3517 = vmatpush2.bf16.msra.mxu0 %v2262
    %3518 = vmatprep.subr.bf16.mxu0 %v2255
    %3519 = vmatpush2.bf16.msra.mxu0 %v2254
    %3520 = vmatprep.subr.bf16.mxu0 %v2247
    %3521 = vmatpush2.bf16.msra.mxu0 %v2246
    %3522 = vmatprep.subr.bf16.mxu0 %v2239
    %3523 = vmatpush2.bf16.msra.mxu0 %v2238
    %3524 = vmatprep.subr.bf16.mxu0 %v2231
    %3525 = vmatpush2.bf16.msra.mxu0 %v2230
    %3526 = vmatprep.subr.bf16.mxu0 %v2223
    %3527 = vmatpush2.bf16.msra.mxu0 %v2222
    %3528 = vmatprep.subr.bf16.mxu0 %v2215
    %3529 = vmatpush2.bf16.msra.mxu0 %v2214
    %3530 = vmatprep.mubr.bf16.mxu0 %v91
    %3531 = vmatmul.mubr.bf16.gmra.mxu0 %v90
    %v3532 = vpop.f32.mrf.mxu0
    %v3533 = vadd.f32 0.0, %v3532
    %v3534 = vpop.f32.mrf.mxu0
    %v3535 = vadd.f32 0.0, %v3534
    %v3536 = vpop.f32.mrf.mxu0
    %v3537 = vpop.f32.mrf.mxu0
    %3538 = vdwg.mxu0
    %3539 = vmatprep.subr.bf16.mxu0 %v2335
    %3540 = vmatpush1.bf16.msra.mxu0 %v2334
    %3541 = vmatprep.subr.bf16.mxu0 %v2327
    %3542 = vmatpush1.bf16.msra.mxu0 %v2326
    %3543 = vmatprep.subr.bf16.mxu0 %v2319
    %3544 = vmatpush1.bf16.msra.mxu0 %v2318
    %3545 = vmatprep.subr.bf16.mxu0 %v2311
    %3546 = vmatpush1.bf16.msra.mxu0 %v2310
    %3547 = vmatprep.subr.bf16.mxu0 %v2303
    %3548 = vmatpush1.bf16.msra.mxu0 %v2302
    %3549 = vmatprep.subr.bf16.mxu0 %v2295
    %3550 = vmatpush1.bf16.msra.mxu0 %v2294
    %3551 = vmatprep.subr.bf16.mxu0 %v2287
    %3552 = vmatpush1.bf16.msra.mxu0 %v2286
    %3553 = vmatprep.subr.bf16.mxu0 %v2279
    %3554 = vmatpush1.bf16.msra.mxu0 %v2278
    %3555 = vmatprep.subr.bf16.mxu0 %v2399
    %3556 = vmatpush2.bf16.msra.mxu0 %v2398
    %3557 = vmatprep.subr.bf16.mxu0 %v2391
    %3558 = vmatpush2.bf16.msra.mxu0 %v2390
    %3559 = vmatprep.subr.bf16.mxu0 %v2383
    %3560 = vmatpush2.bf16.msra.mxu0 %v2382
    %3561 = vmatprep.subr.bf16.mxu0 %v2375
    %3562 = vmatpush2.bf16.msra.mxu0 %v2374
    %3563 = vmatprep.subr.bf16.mxu0 %v2367
    %3564 = vmatpush2.bf16.msra.mxu0 %v2366
    %3565 = vmatprep.subr.bf16.mxu0 %v2359
    %3566 = vmatpush2.bf16.msra.mxu0 %v2358
    %3567 = vmatprep.subr.bf16.mxu0 %v2351
    %3568 = vmatpush2.bf16.msra.mxu0 %v2350
    %3569 = vmatprep.subr.bf16.mxu0 %v2343
    %3570 = vmatpush2.bf16.msra.mxu0 %v2342
    %3571 = vmatprep.mubr.bf16.mxu0 %v93
    %3572 = vmatmul.mubr.bf16.gmra.mxu0 %v92
    %v3573 = vpop.f32.mrf.mxu0
    %v3574 = vadd.f32 %v3533, %v3573
    %v3575 = vpop.f32.mrf.mxu0
    %v3576 = vadd.f32 %v3535, %v3575
    %v3577 = vpop.f32.mrf.mxu0
    %v3578 = vpop.f32.mrf.mxu0
    %3579 = vdwg.mxu0
    %3580 = vmatprep.subr.bf16.mxu0 %v2463
    %3581 = vmatpush1.bf16.msra.mxu0 %v2462
    %3582 = vmatprep.subr.bf16.mxu0 %v2455
    %3583 = vmatpush1.bf16.msra.mxu0 %v2454
    %3584 = vmatprep.subr.bf16.mxu0 %v2447
    %3585 = vmatpush1.bf16.msra.mxu0 %v2446
    %3586 = vmatprep.subr.bf16.mxu0 %v2439
    %3587 = vmatpush1.bf16.msra.mxu0 %v2438
    %3588 = vmatprep.subr.bf16.mxu0 %v2431
    %3589 = vmatpush1.bf16.msra.mxu0 %v2430
    %3590 = vmatprep.subr.bf16.mxu0 %v2423
    %3591 = vmatpush1.bf16.msra.mxu0 %v2422
    %3592 = vmatprep.subr.bf16.mxu0 %v2415
    %3593 = vmatpush1.bf16.msra.mxu0 %v2414
    %3594 = vmatprep.subr.bf16.mxu0 %v2407
    %3595 = vmatpush1.bf16.msra.mxu0 %v2406
    %3596 = vmatprep.subr.bf16.mxu0 %v2527
    %3597 = vmatpush2.bf16.msra.mxu0 %v2526
    %3598 = vmatprep.subr.bf16.mxu0 %v2519
    %3599 = vmatpush2.bf16.msra.mxu0 %v2518
    %3600 = vmatprep.subr.bf16.mxu0 %v2511
    %3601 = vmatpush2.bf16.msra.mxu0 %v2510
    %3602 = vmatprep.subr.bf16.mxu0 %v2503
    %3603 = vmatpush2.bf16.msra.mxu0 %v2502
    %3604 = vmatprep.subr.bf16.mxu0 %v2495
    %3605 = vmatpush2.bf16.msra.mxu0 %v2494
    %3606 = vmatprep.subr.bf16.mxu0 %v2487
    %3607 = vmatpush2.bf16.msra.mxu0 %v2486
    %3608 = vmatprep.subr.bf16.mxu0 %v2479
    %3609 = vmatpush2.bf16.msra.mxu0 %v2478
    %3610 = vmatprep.subr.bf16.mxu0 %v2471
    %3611 = vmatpush2.bf16.msra.mxu0 %v2470
    %3612 = vmatprep.mubr.bf16.mxu0 %v95
    %3613 = vmatmul.mubr.bf16.gmra.mxu0 %v94
    %v3614 = vpop.f32.mrf.mxu0
    %v3615 = vadd.f32 %v3574, %v3614
    %v3616 = vpop.f32.mrf.mxu0
    %v3617 = vadd.f32 %v3576, %v3616
    %v3618 = vpop.f32.mrf.mxu0
    %v3619 = vpop.f32.mrf.mxu0
    %3620 = vdwg.mxu0
    %3621 = vmatprep.subr.bf16.mxu0 %v2591
    %3622 = vmatpush1.bf16.msra.mxu0 %v2590
    %3623 = vmatprep.subr.bf16.mxu0 %v2583
    %3624 = vmatpush1.bf16.msra.mxu0 %v2582
    %3625 = vmatprep.subr.bf16.mxu0 %v2575
    %3626 = vmatpush1.bf16.msra.mxu0 %v2574
    %3627 = vmatprep.subr.bf16.mxu0 %v2567
    %3628 = vmatpush1.bf16.msra.mxu0 %v2566
    %3629 = vmatprep.subr.bf16.mxu0 %v2559
    %3630 = vmatpush1.bf16.msra.mxu0 %v2558
    %3631 = vmatprep.subr.bf16.mxu0 %v2551
    %3632 = vmatpush1.bf16.msra.mxu0 %v2550
    %3633 = vmatprep.subr.bf16.mxu0 %v2543
    %3634 = vmatpush1.bf16.msra.mxu0 %v2542
    %3635 = vmatprep.subr.bf16.mxu0 %v2535
    %3636 = vmatpush1.bf16.msra.mxu0 %v2534
    %3637 = vmatprep.subr.bf16.mxu0 %v2655
    %3638 = vmatpush2.bf16.msra.mxu0 %v2654
    %3639 = vmatprep.subr.bf16.mxu0 %v2647
    %3640 = vmatpush2.bf16.msra.mxu0 %v2646
    %3641 = vmatprep.subr.bf16.mxu0 %v2639
    %3642 = vmatpush2.bf16.msra.mxu0 %v2638
    %3643 = vmatprep.subr.bf16.mxu0 %v2631
    %3644 = vmatpush2.bf16.msra.mxu0 %v2630
    %3645 = vmatprep.subr.bf16.mxu0 %v2623
    %3646 = vmatpush2.bf16.msra.mxu0 %v2622
    %3647 = vmatprep.subr.bf16.mxu0 %v2615
    %3648 = vmatpush2.bf16.msra.mxu0 %v2614
    %3649 = vmatprep.subr.bf16.mxu0 %v2607
    %3650 = vmatpush2.bf16.msra.mxu0 %v2606
    %3651 = vmatprep.subr.bf16.mxu0 %v2599
    %3652 = vmatpush2.bf16.msra.mxu0 %v2598
    %3653 = vmatprep.mubr.bf16.mxu0 %v97
    %3654 = vmatmul.mubr.bf16.gmra.mxu0 %v96
    %v3655 = vpop.f32.mrf.mxu0
    %v3656 = vadd.f32 %v3615, %v3655
    %v3657 = vpop.f32.mrf.mxu0
    %v3658 = vadd.f32 %v3617, %v3657
    %v3659 = vpop.f32.mrf.mxu0
    %v3660 = vpop.f32.mrf.mxu0
    %3661 = vdwg.mxu0
    %3662 = vmatprep.subr.bf16.mxu0 %v2209
    %3663 = vmatpush1.bf16.msra.mxu0 %v2208
    %3664 = vmatprep.subr.bf16.mxu0 %v2201
    %3665 = vmatpush1.bf16.msra.mxu0 %v2200
    %3666 = vmatprep.subr.bf16.mxu0 %v2193
    %3667 = vmatpush1.bf16.msra.mxu0 %v2192
    %3668 = vmatprep.subr.bf16.mxu0 %v2185
    %3669 = vmatpush1.bf16.msra.mxu0 %v2184
    %3670 = vmatprep.subr.bf16.mxu0 %v2177
    %3671 = vmatpush1.bf16.msra.mxu0 %v2176
    %3672 = vmatprep.subr.bf16.mxu0 %v2169
    %3673 = vmatpush1.bf16.msra.mxu0 %v2168
    %3674 = vmatprep.subr.bf16.mxu0 %v2161
    %3675 = vmatpush1.bf16.msra.mxu0 %v2160
    %3676 = vmatprep.subr.bf16.mxu0 %v2153
    %3677 = vmatpush1.bf16.msra.mxu0 %v2152
    %3678 = vmatprep.subr.bf16.mxu0 %v2273
    %3679 = vmatpush2.bf16.msra.mxu0 %v2272
    %3680 = vmatprep.subr.bf16.mxu0 %v2265
    %3681 = vmatpush2.bf16.msra.mxu0 %v2264
    %3682 = vmatprep.subr.bf16.mxu0 %v2257
    %3683 = vmatpush2.bf16.msra.mxu0 %v2256
    %3684 = vmatprep.subr.bf16.mxu0 %v2249
    %3685 = vmatpush2.bf16.msra.mxu0 %v2248
    %3686 = vmatprep.subr.bf16.mxu0 %v2241
    %3687 = vmatpush2.bf16.msra.mxu0 %v2240
    %3688 = vmatprep.subr.bf16.mxu0 %v2233
    %3689 = vmatpush2.bf16.msra.mxu0 %v2232
    %3690 = vmatprep.subr.bf16.mxu0 %v2225
    %3691 = vmatpush2.bf16.msra.mxu0 %v2224
    %3692 = vmatprep.subr.bf16.mxu0 %v2217
    %3693 = vmatpush2.bf16.msra.mxu0 %v2216
    %3694 = vmatprep.mubr.bf16.mxu0 %v91
    %3695 = vmatmul.mubr.bf16.gmra.mxu0 %v90
    %v3696 = vpop.f32.mrf.mxu0
    %v3697 = vadd.f32 0.0, %v3696
    %v3698 = vpop.f32.mrf.mxu0
    %v3699 = vadd.f32 0.0, %v3698
    %v3700 = vpop.f32.mrf.mxu0
    %v3701 = vpop.f32.mrf.mxu0
    %3702 = vdwg.mxu0
    %3703 = vmatprep.subr.bf16.mxu0 %v2337
    %3704 = vmatpush1.bf16.msra.mxu0 %v2336
    %3705 = vmatprep.subr.bf16.mxu0 %v2329
    %3706 = vmatpush1.bf16.msra.mxu0 %v2328
    %3707 = vmatprep.subr.bf16.mxu0 %v2321
    %3708 = vmatpush1.bf16.msra.mxu0 %v2320
    %3709 = vmatprep.subr.bf16.mxu0 %v2313
    %3710 = vmatpush1.bf16.msra.mxu0 %v2312
    %3711 = vmatprep.subr.bf16.mxu0 %v2305
    %3712 = vmatpush1.bf16.msra.mxu0 %v2304
    %3713 = vmatprep.subr.bf16.mxu0 %v2297
    %3714 = vmatpush1.bf16.msra.mxu0 %v2296
    %3715 = vmatprep.subr.bf16.mxu0 %v2289
    %3716 = vmatpush1.bf16.msra.mxu0 %v2288
    %3717 = vmatprep.subr.bf16.mxu0 %v2281
    %3718 = vmatpush1.bf16.msra.mxu0 %v2280
    %3719 = vmatprep.subr.bf16.mxu0 %v2401
    %3720 = vmatpush2.bf16.msra.mxu0 %v2400
    %3721 = vmatprep.subr.bf16.mxu0 %v2393
    %3722 = vmatpush2.bf16.msra.mxu0 %v2392
    %3723 = vmatprep.subr.bf16.mxu0 %v2385
    %3724 = vmatpush2.bf16.msra.mxu0 %v2384
    %3725 = vmatprep.subr.bf16.mxu0 %v2377
    %3726 = vmatpush2.bf16.msra.mxu0 %v2376
    %3727 = vmatprep.subr.bf16.mxu0 %v2369
    %3728 = vmatpush2.bf16.msra.mxu0 %v2368
    %3729 = vmatprep.subr.bf16.mxu0 %v2361
    %3730 = vmatpush2.bf16.msra.mxu0 %v2360
    %3731 = vmatprep.subr.bf16.mxu0 %v2353
    %3732 = vmatpush2.bf16.msra.mxu0 %v2352
    %3733 = vmatprep.subr.bf16.mxu0 %v2345
    %3734 = vmatpush2.bf16.msra.mxu0 %v2344
    %3735 = vmatprep.mubr.bf16.mxu0 %v93
    %3736 = vmatmul.mubr.bf16.gmra.mxu0 %v92
    %v3737 = vpop.f32.mrf.mxu0
    %v3738 = vadd.f32 %v3697, %v3737
    %v3739 = vpop.f32.mrf.mxu0
    %v3740 = vadd.f32 %v3699, %v3739
    %v3741 = vpop.f32.mrf.mxu0
    %v3742 = vpop.f32.mrf.mxu0
    %3743 = vdwg.mxu0
    %3744 = vmatprep.subr.bf16.mxu0 %v2465
    %3745 = vmatpush1.bf16.msra.mxu0 %v2464
    %3746 = vmatprep.subr.bf16.mxu0 %v2457
    %3747 = vmatpush1.bf16.msra.mxu0 %v2456
    %3748 = vmatprep.subr.bf16.mxu0 %v2449
    %3749 = vmatpush1.bf16.msra.mxu0 %v2448
    %3750 = vmatprep.subr.bf16.mxu0 %v2441
    %3751 = vmatpush1.bf16.msra.mxu0 %v2440
    %3752 = vmatprep.subr.bf16.mxu0 %v2433
    %3753 = vmatpush1.bf16.msra.mxu0 %v2432
    %3754 = vmatprep.subr.bf16.mxu0 %v2425
    %3755 = vmatpush1.bf16.msra.mxu0 %v2424
    %3756 = vmatprep.subr.bf16.mxu0 %v2417
    %3757 = vmatpush1.bf16.msra.mxu0 %v2416
    %3758 = vmatprep.subr.bf16.mxu0 %v2409
    %3759 = vmatpush1.bf16.msra.mxu0 %v2408
    %3760 = vmatprep.subr.bf16.mxu0 %v2529
    %3761 = vmatpush2.bf16.msra.mxu0 %v2528
    %3762 = vmatprep.subr.bf16.mxu0 %v2521
    %3763 = vmatpush2.bf16.msra.mxu0 %v2520
    %3764 = vmatprep.subr.bf16.mxu0 %v2513
    %3765 = vmatpush2.bf16.msra.mxu0 %v2512
    %3766 = vmatprep.subr.bf16.mxu0 %v2505
    %3767 = vmatpush2.bf16.msra.mxu0 %v2504
    %3768 = vmatprep.subr.bf16.mxu0 %v2497
    %3769 = vmatpush2.bf16.msra.mxu0 %v2496
    %3770 = vmatprep.subr.bf16.mxu0 %v2489
    %3771 = vmatpush2.bf16.msra.mxu0 %v2488
    %3772 = vmatprep.subr.bf16.mxu0 %v2481
    %3773 = vmatpush2.bf16.msra.mxu0 %v2480
    %3774 = vmatprep.subr.bf16.mxu0 %v2473
    %3775 = vmatpush2.bf16.msra.mxu0 %v2472
    %3776 = vmatprep.mubr.bf16.mxu0 %v95
    %3777 = vmatmul.mubr.bf16.gmra.mxu0 %v94
    %v3778 = vpop.f32.mrf.mxu0
    %v3779 = vadd.f32 %v3738, %v3778
    %v3780 = vpop.f32.mrf.mxu0
    %v3781 = vadd.f32 %v3740, %v3780
    %v3782 = vpop.f32.mrf.mxu0
    %v3783 = vpop.f32.mrf.mxu0
    %3784 = vdwg.mxu0
    %3785 = vmatprep.subr.bf16.mxu0 %v2593
    %3786 = vmatpush1.bf16.msra.mxu0 %v2592
    %3787 = vmatprep.subr.bf16.mxu0 %v2585
    %3788 = vmatpush1.bf16.msra.mxu0 %v2584
    %3789 = vmatprep.subr.bf16.mxu0 %v2577
    %3790 = vmatpush1.bf16.msra.mxu0 %v2576
    %3791 = vmatprep.subr.bf16.mxu0 %v2569
    %3792 = vmatpush1.bf16.msra.mxu0 %v2568
    %3793 = vmatprep.subr.bf16.mxu0 %v2561
    %3794 = vmatpush1.bf16.msra.mxu0 %v2560
    %3795 = vmatprep.subr.bf16.mxu0 %v2553
    %3796 = vmatpush1.bf16.msra.mxu0 %v2552
    %3797 = vmatprep.subr.bf16.mxu0 %v2545
    %3798 = vmatpush1.bf16.msra.mxu0 %v2544
    %3799 = vmatprep.subr.bf16.mxu0 %v2537
    %3800 = vmatpush1.bf16.msra.mxu0 %v2536
    %3801 = vmatprep.subr.bf16.mxu0 %v2657
    %3802 = vmatpush2.bf16.msra.mxu0 %v2656
    %3803 = vmatprep.subr.bf16.mxu0 %v2649
    %3804 = vmatpush2.bf16.msra.mxu0 %v2648
    %3805 = vmatprep.subr.bf16.mxu0 %v2641
    %3806 = vmatpush2.bf16.msra.mxu0 %v2640
    %3807 = vmatprep.subr.bf16.mxu0 %v2633
    %3808 = vmatpush2.bf16.msra.mxu0 %v2632
    %3809 = vmatprep.subr.bf16.mxu0 %v2625
    %3810 = vmatpush2.bf16.msra.mxu0 %v2624
    %3811 = vmatprep.subr.bf16.mxu0 %v2617
    %3812 = vmatpush2.bf16.msra.mxu0 %v2616
    %3813 = vmatprep.subr.bf16.mxu0 %v2609
    %3814 = vmatpush2.bf16.msra.mxu0 %v2608
    %3815 = vmatprep.subr.bf16.mxu0 %v2601
    %3816 = vmatpush2.bf16.msra.mxu0 %v2600
    %3817 = vmatprep.mubr.bf16.mxu0 %v97
    %3818 = vmatmul.mubr.bf16.gmra.mxu0 %v96
    %v3819 = vpop.f32.mrf.mxu0
    %v3820 = vadd.f32 %v3779, %v3819
    %v3821 = vpop.f32.mrf.mxu0
    %v3822 = vadd.f32 %v3781, %v3821
    %v3823 = vpop.f32.mrf.mxu0
    %v3824 = vpop.f32.mrf.mxu0
    %3825 = vdwg.mxu0
    %v3826 = vmul.f32 %v3328, %v3328
    %v3827 = vmul.f32 %v3330, %v3330
    %v3828 = vmul.f32 %v3492, %v3492
    %v3829 = vmul.f32 %v3494, %v3494
    %v3830 = vmul.f32 %v3656, %v3656
    %v3831 = vmul.f32 %v3658, %v3658
    %v3832 = vmul.f32 %v3820, %v3820
    %v3833 = vmul.f32 %v3822, %v3822
    %v3834 = vpack.c.bf16 %v3826, %v3826
    %v3835 = vpack.c.bf16 %v3827, %v3827
    %v3836 = vpack.c.bf16 %v3828, %v3828
    %v3837 = vpack.c.bf16 %v3829, %v3829
    %v3838 = vpack.c.bf16 %v3830, %v3830
    %v3839 = vpack.c.bf16 %v3831, %v3831
    %v3840 = vpack.c.bf16 %v3832, %v3832
    %v3841 = vpack.c.bf16 %v3833, %v3833
    %v3842 = vld [vmem:[#allocation7] sm:$0xf]
    %v3843 = vld [vmem:[#allocation7 + $0x4] sm:$0xf]
    %v3844 = vld [vmem:[#allocation7 + $0x8] sm:$0xf]
    %v3845 = vld [vmem:[#allocation7 + $0xc] sm:$0xf]
    %v3846 = vld [vmem:[#allocation7 + $0x10] sm:$0xf]
    %v3847 = vld [vmem:[#allocation7 + $0x14] sm:$0xf]
    %v3848 = vld [vmem:[#allocation7 + $0x18] sm:$0xf]
    %v3849 = vld [vmem:[#allocation7 + $0x1c] sm:$0xf]
    %v3850 = vld [vmem:[#allocation7 + $0x20] sm:$0xf]
    %v3851 = vld [vmem:[#allocation7 + $0x24] sm:$0xf]
    %v3852 = vld [vmem:[#allocation7 + $0x28] sm:$0xf]
    %v3853 = vld [vmem:[#allocation7 + $0x2c] sm:$0xf]
    %v3854 = vld [vmem:[#allocation7 + $0x30] sm:$0xf]
    %v3855 = vld [vmem:[#allocation7 + $0x34] sm:$0xf]
    %v3856 = vld [vmem:[#allocation7 + $0x38] sm:$0xf]
    %v3857 = vld [vmem:[#allocation7 + $0x3c] sm:$0xf]
    %v3858 = vld [vmem:[#allocation7 + $0x40] sm:$0xf]
    %v3859 = vld [vmem:[#allocation7 + $0x44] sm:$0xf]
    %v3860 = vld [vmem:[#allocation7 + $0x48] sm:$0xf]
    %v3861 = vld [vmem:[#allocation7 + $0x4c] sm:$0xf]
    %v3862 = vld [vmem:[#allocation7 + $0x50] sm:$0xf]
    %v3863 = vld [vmem:[#allocation7 + $0x54] sm:$0xf]
    %v3864 = vld [vmem:[#allocation7 + $0x58] sm:$0xf]
    %v3865 = vld [vmem:[#allocation7 + $0x5c] sm:$0xf]
    %v3866 = vld [vmem:[#allocation7 + $0x60] sm:$0xf]
    %v3867 = vld [vmem:[#allocation7 + $0x64] sm:$0xf]
    %v3868 = vld [vmem:[#allocation7 + $0x68] sm:$0xf]
    %v3869 = vld [vmem:[#allocation7 + $0x6c] sm:$0xf]
    %v3870 = vld [vmem:[#allocation7 + $0x70] sm:$0xf]
    %v3871 = vld [vmem:[#allocation7 + $0x74] sm:$0xf]
    %v3872 = vld [vmem:[#allocation7 + $0x78] sm:$0xf]
    %v3873 = vld [vmem:[#allocation7 + $0x7c] sm:$0xf]
    %v3874 = vld [vmem:[#allocation7 + $0x80] sm:$0xf]
    %v3875 = vld [vmem:[#allocation7 + $0x84] sm:$0xf]
    %v3876 = vld [vmem:[#allocation7 + $0x88] sm:$0xf]
    %v3877 = vld [vmem:[#allocation7 + $0x8c] sm:$0xf]
    %v3878 = vld [vmem:[#allocation7 + $0x90] sm:$0xf]
    %v3879 = vld [vmem:[#allocation7 + $0x94] sm:$0xf]
    %v3880 = vld [vmem:[#allocation7 + $0x98] sm:$0xf]
    %v3881 = vld [vmem:[#allocation7 + $0x9c] sm:$0xf]
    %v3882 = vld [vmem:[#allocation7 + $0xa0] sm:$0xf]
    %v3883 = vld [vmem:[#allocation7 + $0xa4] sm:$0xf]
    %v3884 = vld [vmem:[#allocation7 + $0xa8] sm:$0xf]
    %v3885 = vld [vmem:[#allocation7 + $0xac] sm:$0xf]
    %v3886 = vld [vmem:[#allocation7 + $0xb0] sm:$0xf]
    %v3887 = vld [vmem:[#allocation7 + $0xb4] sm:$0xf]
    %v3888 = vld [vmem:[#allocation7 + $0xb8] sm:$0xf]
    %v3889 = vld [vmem:[#allocation7 + $0xbc] sm:$0xf]
    %v3890 = vld [vmem:[#allocation7 + $0xc0] sm:$0xf]
    %v3891 = vld [vmem:[#allocation7 + $0xc4] sm:$0xf]
    %v3892 = vld [vmem:[#allocation7 + $0xc8] sm:$0xf]
    %v3893 = vld [vmem:[#allocation7 + $0xcc] sm:$0xf]
    %v3894 = vld [vmem:[#allocation7 + $0xd0] sm:$0xf]
    %v3895 = vld [vmem:[#allocation7 + $0xd4] sm:$0xf]
    %v3896 = vld [vmem:[#allocation7 + $0xd8] sm:$0xf]
    %v3897 = vld [vmem:[#allocation7 + $0xdc] sm:$0xf]
    %v3898 = vld [vmem:[#allocation7 + $0xe0] sm:$0xf]
    %v3899 = vld [vmem:[#allocation7 + $0xe4] sm:$0xf]
    %v3900 = vld [vmem:[#allocation7 + $0xe8] sm:$0xf]
    %v3901 = vld [vmem:[#allocation7 + $0xec] sm:$0xf]
    %v3902 = vld [vmem:[#allocation7 + $0xf0] sm:$0xf]
    %v3903 = vld [vmem:[#allocation7 + $0xf4] sm:$0xf]
    %v3904 = vld [vmem:[#allocation7 + $0xf8] sm:$0xf]
    %v3905 = vld [vmem:[#allocation7 + $0xfc] sm:$0xf]
    %v3906 = vld [vmem:[#allocation7 + $0x100] sm:$0xf]
    %v3907 = vld [vmem:[#allocation7 + $0x104] sm:$0xf]
    %v3908 = vld [vmem:[#allocation7 + $0x108] sm:$0xf]
    %v3909 = vld [vmem:[#allocation7 + $0x10c] sm:$0xf]
    %v3910 = vld [vmem:[#allocation7 + $0x110] sm:$0xf]
    %v3911 = vld [vmem:[#allocation7 + $0x114] sm:$0xf]
    %v3912 = vld [vmem:[#allocation7 + $0x118] sm:$0xf]
    %v3913 = vld [vmem:[#allocation7 + $0x11c] sm:$0xf]
    %v3914 = vld [vmem:[#allocation7 + $0x120] sm:$0xf]
    %v3915 = vld [vmem:[#allocation7 + $0x124] sm:$0xf]
    %v3916 = vld [vmem:[#allocation7 + $0x128] sm:$0xf]
    %v3917 = vld [vmem:[#allocation7 + $0x12c] sm:$0xf]
    %v3918 = vld [vmem:[#allocation7 + $0x130] sm:$0xf]
    %v3919 = vld [vmem:[#allocation7 + $0x134] sm:$0xf]
    %v3920 = vld [vmem:[#allocation7 + $0x138] sm:$0xf]
    %v3921 = vld [vmem:[#allocation7 + $0x13c] sm:$0xf]
    %v3922 = vld [vmem:[#allocation7 + $0x140] sm:$0xf]
    %v3923 = vld [vmem:[#allocation7 + $0x144] sm:$0xf]
    %v3924 = vld [vmem:[#allocation7 + $0x148] sm:$0xf]
    %v3925 = vld [vmem:[#allocation7 + $0x14c] sm:$0xf]
    %v3926 = vld [vmem:[#allocation7 + $0x150] sm:$0xf]
    %v3927 = vld [vmem:[#allocation7 + $0x154] sm:$0xf]
    %v3928 = vld [vmem:[#allocation7 + $0x158] sm:$0xf]
    %v3929 = vld [vmem:[#allocation7 + $0x15c] sm:$0xf]
    %v3930 = vld [vmem:[#allocation7 + $0x160] sm:$0xf]
    %v3931 = vld [vmem:[#allocation7 + $0x164] sm:$0xf]
    %v3932 = vld [vmem:[#allocation7 + $0x168] sm:$0xf]
    %v3933 = vld [vmem:[#allocation7 + $0x16c] sm:$0xf]
    %v3934 = vld [vmem:[#allocation7 + $0x170] sm:$0xf]
    %v3935 = vld [vmem:[#allocation7 + $0x174] sm:$0xf]
    %v3936 = vld [vmem:[#allocation7 + $0x178] sm:$0xf]
    %v3937 = vld [vmem:[#allocation7 + $0x17c] sm:$0xf]
    %v3938 = vld [vmem:[#allocation7 + $0x180] sm:$0xf]
    %v3939 = vld [vmem:[#allocation7 + $0x184] sm:$0xf]
    %v3940 = vld [vmem:[#allocation7 + $0x188] sm:$0xf]
    %v3941 = vld [vmem:[#allocation7 + $0x18c] sm:$0xf]
    %v3942 = vld [vmem:[#allocation7 + $0x190] sm:$0xf]
    %v3943 = vld [vmem:[#allocation7 + $0x194] sm:$0xf]
    %v3944 = vld [vmem:[#allocation7 + $0x198] sm:$0xf]
    %v3945 = vld [vmem:[#allocation7 + $0x19c] sm:$0xf]
    %v3946 = vld [vmem:[#allocation7 + $0x1a0] sm:$0xf]
    %v3947 = vld [vmem:[#allocation7 + $0x1a4] sm:$0xf]
    %v3948 = vld [vmem:[#allocation7 + $0x1a8] sm:$0xf]
    %v3949 = vld [vmem:[#allocation7 + $0x1ac] sm:$0xf]
    %v3950 = vld [vmem:[#allocation7 + $0x1b0] sm:$0xf]
    %v3951 = vld [vmem:[#allocation7 + $0x1b4] sm:$0xf]
    %v3952 = vld [vmem:[#allocation7 + $0x1b8] sm:$0xf]
    %v3953 = vld [vmem:[#allocation7 + $0x1bc] sm:$0xf]
    %v3954 = vld [vmem:[#allocation7 + $0x1c0] sm:$0xf]
    %v3955 = vld [vmem:[#allocation7 + $0x1c4] sm:$0xf]
    %v3956 = vld [vmem:[#allocation7 + $0x1c8] sm:$0xf]
    %v3957 = vld [vmem:[#allocation7 + $0x1cc] sm:$0xf]
    %v3958 = vld [vmem:[#allocation7 + $0x1d0] sm:$0xf]
    %v3959 = vld [vmem:[#allocation7 + $0x1d4] sm:$0xf]
    %v3960 = vld [vmem:[#allocation7 + $0x1d8] sm:$0xf]
    %v3961 = vld [vmem:[#allocation7 + $0x1dc] sm:$0xf]
    %v3962 = vld [vmem:[#allocation7 + $0x1e0] sm:$0xf]
    %v3963 = vld [vmem:[#allocation7 + $0x1e4] sm:$0xf]
    %v3964 = vld [vmem:[#allocation7 + $0x1e8] sm:$0xf]
    %v3965 = vld [vmem:[#allocation7 + $0x1ec] sm:$0xf]
    %v3966 = vld [vmem:[#allocation7 + $0x1f0] sm:$0xf]
    %v3967 = vld [vmem:[#allocation7 + $0x1f4] sm:$0xf]
    %v3968 = vld [vmem:[#allocation7 + $0x1f8] sm:$0xf]
    %v3969 = vld [vmem:[#allocation7 + $0x1fc] sm:$0xf]
    %v4098 = vunpack.c.l.b16 %v3842
    %v4099 = vunpack.c.l.b16 %v3843
    %v4100 = vunpack.c.l.b16 %v3844
    %v4101 = vunpack.c.l.b16 %v3845
    %v4102 = vunpack.c.l.b16 %v3846
    %v4103 = vunpack.c.l.b16 %v3847
    %v4104 = vunpack.c.l.b16 %v3848
    %v4105 = vunpack.c.l.b16 %v3849
    %v4106 = vunpack.c.l.b16 %v3850
    %v4107 = vunpack.c.l.b16 %v3851
    %v4108 = vunpack.c.l.b16 %v3852
    %v4109 = vunpack.c.l.b16 %v3853
    %v4110 = vunpack.c.l.b16 %v3854
    %v4111 = vunpack.c.l.b16 %v3855
    %v4112 = vunpack.c.l.b16 %v3856
    %v4113 = vunpack.c.l.b16 %v3857
    %v4114 = vunpack.c.l.b16 %v3858
    %v4115 = vunpack.c.l.b16 %v3859
    %v4116 = vunpack.c.l.b16 %v3860
    %v4117 = vunpack.c.l.b16 %v3861
    %v4118 = vunpack.c.l.b16 %v3862
    %v4119 = vunpack.c.l.b16 %v3863
    %v4120 = vunpack.c.l.b16 %v3864
    %v4121 = vunpack.c.l.b16 %v3865
    %v4122 = vunpack.c.l.b16 %v3866
    %v4123 = vunpack.c.l.b16 %v3867
    %v4124 = vunpack.c.l.b16 %v3868
    %v4125 = vunpack.c.l.b16 %v3869
    %v4126 = vunpack.c.l.b16 %v3870
    %v4127 = vunpack.c.l.b16 %v3871
    %v4128 = vunpack.c.l.b16 %v3872
    %v4129 = vunpack.c.l.b16 %v3873
    %v4130 = vunpack.c.l.b16 %v3874
    %v4131 = vunpack.c.l.b16 %v3875
    %v4132 = vunpack.c.l.b16 %v3876
    %v4133 = vunpack.c.l.b16 %v3877
    %v4134 = vunpack.c.l.b16 %v3878
    %v4135 = vunpack.c.l.b16 %v3879
    %v4136 = vunpack.c.l.b16 %v3880
    %v4137 = vunpack.c.l.b16 %v3881
    %v4138 = vunpack.c.l.b16 %v3882
    %v4139 = vunpack.c.l.b16 %v3883
    %v4140 = vunpack.c.l.b16 %v3884
    %v4141 = vunpack.c.l.b16 %v3885
    %v4142 = vunpack.c.l.b16 %v3886
    %v4143 = vunpack.c.l.b16 %v3887
    %v4144 = vunpack.c.l.b16 %v3888
    %v4145 = vunpack.c.l.b16 %v3889
    %v4146 = vunpack.c.l.b16 %v3890
    %v4147 = vunpack.c.l.b16 %v3891
    %v4148 = vunpack.c.l.b16 %v3892
    %v4149 = vunpack.c.l.b16 %v3893
    %v4150 = vunpack.c.l.b16 %v3894
    %v4151 = vunpack.c.l.b16 %v3895
    %v4152 = vunpack.c.l.b16 %v3896
    %v4153 = vunpack.c.l.b16 %v3897
    %v4154 = vunpack.c.l.b16 %v3898
    %v4155 = vunpack.c.l.b16 %v3899
    %v4156 = vunpack.c.l.b16 %v3900
    %v4157 = vunpack.c.l.b16 %v3901
    %v4158 = vunpack.c.l.b16 %v3902
    %v4159 = vunpack.c.l.b16 %v3903
    %v4160 = vunpack.c.l.b16 %v3904
    %v4161 = vunpack.c.l.b16 %v3905
    %v4162 = vunpack.c.l.b16 %v3906
    %v4163 = vunpack.c.l.b16 %v3907
    %v4164 = vunpack.c.l.b16 %v3908
    %v4165 = vunpack.c.l.b16 %v3909
    %v4166 = vunpack.c.l.b16 %v3910
    %v4167 = vunpack.c.l.b16 %v3911
    %v4168 = vunpack.c.l.b16 %v3912
    %v4169 = vunpack.c.l.b16 %v3913
    %v4170 = vunpack.c.l.b16 %v3914
    %v4171 = vunpack.c.l.b16 %v3915
    %v4172 = vunpack.c.l.b16 %v3916
    %v4173 = vunpack.c.l.b16 %v3917
    %v4174 = vunpack.c.l.b16 %v3918
    %v4175 = vunpack.c.l.b16 %v3919
    %v4176 = vunpack.c.l.b16 %v3920
    %v4177 = vunpack.c.l.b16 %v3921
    %v4178 = vunpack.c.l.b16 %v3922
    %v4179 = vunpack.c.l.b16 %v3923
    %v4180 = vunpack.c.l.b16 %v3924
    %v4181 = vunpack.c.l.b16 %v3925
    %v4182 = vunpack.c.l.b16 %v3926
    %v4183 = vunpack.c.l.b16 %v3927
    %v4184 = vunpack.c.l.b16 %v3928
    %v4185 = vunpack.c.l.b16 %v3929
    %v4186 = vunpack.c.l.b16 %v3930
    %v4187 = vunpack.c.l.b16 %v3931
    %v4188 = vunpack.c.l.b16 %v3932
    %v4189 = vunpack.c.l.b16 %v3933
    %v4190 = vunpack.c.l.b16 %v3934
    %v4191 = vunpack.c.l.b16 %v3935
    %v4192 = vunpack.c.l.b16 %v3936
    %v4193 = vunpack.c.l.b16 %v3937
    %v4194 = vunpack.c.l.b16 %v3938
    %v4195 = vunpack.c.l.b16 %v3939
    %v4196 = vunpack.c.l.b16 %v3940
    %v4197 = vunpack.c.l.b16 %v3941
    %v4198 = vunpack.c.l.b16 %v3942
    %v4199 = vunpack.c.l.b16 %v3943
    %v4200 = vunpack.c.l.b16 %v3944
    %v4201 = vunpack.c.l.b16 %v3945
    %v4202 = vunpack.c.l.b16 %v3946
    %v4203 = vunpack.c.l.b16 %v3947
    %v4204 = vunpack.c.l.b16 %v3948
    %v4205 = vunpack.c.l.b16 %v3949
    %v4206 = vunpack.c.l.b16 %v3950
    %v4207 = vunpack.c.l.b16 %v3951
    %v4208 = vunpack.c.l.b16 %v3952
    %v4209 = vunpack.c.l.b16 %v3953
    %v4210 = vunpack.c.l.b16 %v3954
    %v4211 = vunpack.c.l.b16 %v3955
    %v4212 = vunpack.c.l.b16 %v3956
    %v4213 = vunpack.c.l.b16 %v3957
    %v4214 = vunpack.c.l.b16 %v3958
    %v4215 = vunpack.c.l.b16 %v3959
    %v4216 = vunpack.c.l.b16 %v3960
    %v4217 = vunpack.c.l.b16 %v3961
    %v4218 = vunpack.c.l.b16 %v3962
    %v4219 = vunpack.c.l.b16 %v3963
    %v4220 = vunpack.c.l.b16 %v3964
    %v4221 = vunpack.c.l.b16 %v3965
    %v4222 = vunpack.c.l.b16 %v3966
    %v4223 = vunpack.c.l.b16 %v3967
    %v4224 = vunpack.c.l.b16 %v3968
    %v4225 = vunpack.c.l.b16 %v3969
    %v4226 = vpack.c.b16 %v4099, %v4098
    %v4227 = vpack.c.b16 %v4101, %v4100
    %v4228 = vpack.c.b16 %v4103, %v4102
    %v4229 = vpack.c.b16 %v4105, %v4104
    %v4230 = vpack.c.b16 %v4107, %v4106
    %v4231 = vpack.c.b16 %v4109, %v4108
    %v4232 = vpack.c.b16 %v4111, %v4110
    %v4233 = vpack.c.b16 %v4113, %v4112
    %v4234 = vpack.c.b16 %v4115, %v4114
    %v4235 = vpack.c.b16 %v4117, %v4116
    %v4236 = vpack.c.b16 %v4119, %v4118
    %v4237 = vpack.c.b16 %v4121, %v4120
    %v4238 = vpack.c.b16 %v4123, %v4122
    %v4239 = vpack.c.b16 %v4125, %v4124
    %v4240 = vpack.c.b16 %v4127, %v4126
    %v4241 = vpack.c.b16 %v4129, %v4128
    %v4242 = vpack.c.b16 %v4131, %v4130
    %v4243 = vpack.c.b16 %v4133, %v4132
    %v4244 = vpack.c.b16 %v4135, %v4134
    %v4245 = vpack.c.b16 %v4137, %v4136
    %v4246 = vpack.c.b16 %v4139, %v4138
    %v4247 = vpack.c.b16 %v4141, %v4140
    %v4248 = vpack.c.b16 %v4143, %v4142
    %v4249 = vpack.c.b16 %v4145, %v4144
    %v4250 = vpack.c.b16 %v4147, %v4146
    %v4251 = vpack.c.b16 %v4149, %v4148
    %v4252 = vpack.c.b16 %v4151, %v4150
    %v4253 = vpack.c.b16 %v4153, %v4152
    %v4254 = vpack.c.b16 %v4155, %v4154
    %v4255 = vpack.c.b16 %v4157, %v4156
    %v4256 = vpack.c.b16 %v4159, %v4158
    %v4257 = vpack.c.b16 %v4161, %v4160
    %v4258 = vpack.c.b16 %v4163, %v4162
    %v4259 = vpack.c.b16 %v4165, %v4164
    %v4260 = vpack.c.b16 %v4167, %v4166
    %v4261 = vpack.c.b16 %v4169, %v4168
    %v4262 = vpack.c.b16 %v4171, %v4170
    %v4263 = vpack.c.b16 %v4173, %v4172
    %v4264 = vpack.c.b16 %v4175, %v4174
    %v4265 = vpack.c.b16 %v4177, %v4176
    %v4266 = vpack.c.b16 %v4179, %v4178
    %v4267 = vpack.c.b16 %v4181, %v4180
    %v4268 = vpack.c.b16 %v4183, %v4182
    %v4269 = vpack.c.b16 %v4185, %v4184
    %v4270 = vpack.c.b16 %v4187, %v4186
    %v4271 = vpack.c.b16 %v4189, %v4188
    %v4272 = vpack.c.b16 %v4191, %v4190
    %v4273 = vpack.c.b16 %v4193, %v4192
    %v4274 = vpack.c.b16 %v4195, %v4194
    %v4275 = vpack.c.b16 %v4197, %v4196
    %v4276 = vpack.c.b16 %v4199, %v4198
    %v4277 = vpack.c.b16 %v4201, %v4200
    %v4278 = vpack.c.b16 %v4203, %v4202
    %v4279 = vpack.c.b16 %v4205, %v4204
    %v4280 = vpack.c.b16 %v4207, %v4206
    %v4281 = vpack.c.b16 %v4209, %v4208
    %v4282 = vpack.c.b16 %v4211, %v4210
    %v4283 = vpack.c.b16 %v4213, %v4212
    %v4284 = vpack.c.b16 %v4215, %v4214
    %v4285 = vpack.c.b16 %v4217, %v4216
    %v4286 = vpack.c.b16 %v4219, %v4218
    %v4287 = vpack.c.b16 %v4221, %v4220
    %v4288 = vpack.c.b16 %v4223, %v4222
    %v4289 = vpack.c.b16 %v4225, %v4224
    %4354 = vmatprep.subr.bf16.mxu0 0
    %4355 = vmatpush1.bf16.msra.mxu0 %v4233
    %4356 = vmatprep.subr.bf16.mxu0 0
    %4357 = vmatpush1.bf16.msra.mxu0 %v4232
    %4358 = vmatprep.subr.bf16.mxu0 0
    %4359 = vmatpush1.bf16.msra.mxu0 %v4231
    %4360 = vmatprep.subr.bf16.mxu0 0
    %4361 = vmatpush1.bf16.msra.mxu0 %v4230
    %4362 = vmatprep.subr.bf16.mxu0 0
    %4363 = vmatpush1.bf16.msra.mxu0 %v4229
    %4364 = vmatprep.subr.bf16.mxu0 0
    %4365 = vmatpush1.bf16.msra.mxu0 %v4228
    %4366 = vmatprep.subr.bf16.mxu0 0
    %4367 = vmatpush1.bf16.msra.mxu0 %v4227
    %4368 = vmatprep.subr.bf16.mxu0 0
    %4369 = vmatpush1.bf16.msra.mxu0 %v4226
    %4370 = vmatprep.subr.bf16.mxu0 0
    %4371 = vmatpush2.bf16.msra.mxu0 %v4241
    %4372 = vmatprep.subr.bf16.mxu0 0
    %4373 = vmatpush2.bf16.msra.mxu0 %v4240
    %4374 = vmatprep.subr.bf16.mxu0 0
    %4375 = vmatpush2.bf16.msra.mxu0 %v4239
    %4376 = vmatprep.subr.bf16.mxu0 0
    %4377 = vmatpush2.bf16.msra.mxu0 %v4238
    %4378 = vmatprep.subr.bf16.mxu0 0
    %4379 = vmatpush2.bf16.msra.mxu0 %v4237
    %4380 = vmatprep.subr.bf16.mxu0 0
    %4381 = vmatpush2.bf16.msra.mxu0 %v4236
    %4382 = vmatprep.subr.bf16.mxu0 0
    %4383 = vmatpush2.bf16.msra.mxu0 %v4235
    %4384 = vmatprep.subr.bf16.mxu0 0
    %4385 = vmatpush2.bf16.msra.mxu0 %v4234
    %4386 = vmatprep.mubr.bf16.mxu0 %v3835
    %4387 = vmatmul.mubr.bf16.gmra.mxu0 %v3834
    %v4388 = vpop.f32.mrf.mxu0
    %v4389 = vadd.f32 0.0, %v4388
    %v4390 = vpop.f32.mrf.mxu0
    %v4391 = vpop.f32.mrf.mxu0
    %v4392 = vpop.f32.mrf.mxu0
    %4393 = vdwg.mxu0
    %4394 = vmatprep.subr.bf16.mxu0 0
    %4395 = vmatpush1.bf16.msra.mxu0 %v4249
    %4396 = vmatprep.subr.bf16.mxu0 0
    %4397 = vmatpush1.bf16.msra.mxu0 %v4248
    %4398 = vmatprep.subr.bf16.mxu0 0
    %4399 = vmatpush1.bf16.msra.mxu0 %v4247
    %4400 = vmatprep.subr.bf16.mxu0 0
    %4401 = vmatpush1.bf16.msra.mxu0 %v4246
    %4402 = vmatprep.subr.bf16.mxu0 0
    %4403 = vmatpush1.bf16.msra.mxu0 %v4245
    %4404 = vmatprep.subr.bf16.mxu0 0
    %4405 = vmatpush1.bf16.msra.mxu0 %v4244
    %4406 = vmatprep.subr.bf16.mxu0 0
    %4407 = vmatpush1.bf16.msra.mxu0 %v4243
    %4408 = vmatprep.subr.bf16.mxu0 0
    %4409 = vmatpush1.bf16.msra.mxu0 %v4242
    %4410 = vmatprep.subr.bf16.mxu0 0
    %4411 = vmatpush2.bf16.msra.mxu0 %v4257
    %4412 = vmatprep.subr.bf16.mxu0 0
    %4413 = vmatpush2.bf16.msra.mxu0 %v4256
    %4414 = vmatprep.subr.bf16.mxu0 0
    %4415 = vmatpush2.bf16.msra.mxu0 %v4255
    %4416 = vmatprep.subr.bf16.mxu0 0
    %4417 = vmatpush2.bf16.msra.mxu0 %v4254
    %4418 = vmatprep.subr.bf16.mxu0 0
    %4419 = vmatpush2.bf16.msra.mxu0 %v4253
    %4420 = vmatprep.subr.bf16.mxu0 0
    %4421 = vmatpush2.bf16.msra.mxu0 %v4252
    %4422 = vmatprep.subr.bf16.mxu0 0
    %4423 = vmatpush2.bf16.msra.mxu0 %v4251
    %4424 = vmatprep.subr.bf16.mxu0 0
    %4425 = vmatpush2.bf16.msra.mxu0 %v4250
    %4426 = vmatprep.mubr.bf16.mxu0 %v3837
    %4427 = vmatmul.mubr.bf16.gmra.mxu0 %v3836
    %v4428 = vpop.f32.mrf.mxu0
    %v4429 = vadd.f32 %v4389, %v4428
    %v4430 = vpop.f32.mrf.mxu0
    %v4431 = vpop.f32.mrf.mxu0
    %v4432 = vpop.f32.mrf.mxu0
    %4433 = vdwg.mxu0
    %4434 = vmatprep.subr.bf16.mxu0 0
    %4435 = vmatpush1.bf16.msra.mxu0 %v4265
    %4436 = vmatprep.subr.bf16.mxu0 0
    %4437 = vmatpush1.bf16.msra.mxu0 %v4264
    %4438 = vmatprep.subr.bf16.mxu0 0
    %4439 = vmatpush1.bf16.msra.mxu0 %v4263
    %4440 = vmatprep.subr.bf16.mxu0 0
    %4441 = vmatpush1.bf16.msra.mxu0 %v4262
    %4442 = vmatprep.subr.bf16.mxu0 0
    %4443 = vmatpush1.bf16.msra.mxu0 %v4261
    %4444 = vmatprep.subr.bf16.mxu0 0
    %4445 = vmatpush1.bf16.msra.mxu0 %v4260
    %4446 = vmatprep.subr.bf16.mxu0 0
    %4447 = vmatpush1.bf16.msra.mxu0 %v4259
    %4448 = vmatprep.subr.bf16.mxu0 0
    %4449 = vmatpush1.bf16.msra.mxu0 %v4258
    %4450 = vmatprep.subr.bf16.mxu0 0
    %4451 = vmatpush2.bf16.msra.mxu0 %v4273
    %4452 = vmatprep.subr.bf16.mxu0 0
    %4453 = vmatpush2.bf16.msra.mxu0 %v4272
    %4454 = vmatprep.subr.bf16.mxu0 0
    %4455 = vmatpush2.bf16.msra.mxu0 %v4271
    %4456 = vmatprep.subr.bf16.mxu0 0
    %4457 = vmatpush2.bf16.msra.mxu0 %v4270
    %4458 = vmatprep.subr.bf16.mxu0 0
    %4459 = vmatpush2.bf16.msra.mxu0 %v4269
    %4460 = vmatprep.subr.bf16.mxu0 0
    %4461 = vmatpush2.bf16.msra.mxu0 %v4268
    %4462 = vmatprep.subr.bf16.mxu0 0
    %4463 = vmatpush2.bf16.msra.mxu0 %v4267
    %4464 = vmatprep.subr.bf16.mxu0 0
    %4465 = vmatpush2.bf16.msra.mxu0 %v4266
    %4466 = vmatprep.mubr.bf16.mxu0 %v3839
    %4467 = vmatmul.mubr.bf16.gmra.mxu0 %v3838
    %v4468 = vpop.f32.mrf.mxu0
    %v4469 = vadd.f32 %v4429, %v4468
    %v4470 = vpop.f32.mrf.mxu0
    %v4471 = vpop.f32.mrf.mxu0
    %v4472 = vpop.f32.mrf.mxu0
    %4473 = vdwg.mxu0
    %4474 = vmatprep.subr.bf16.mxu0 0
    %4475 = vmatpush1.bf16.msra.mxu0 %v4281
    %4476 = vmatprep.subr.bf16.mxu0 0
    %4477 = vmatpush1.bf16.msra.mxu0 %v4280
    %4478 = vmatprep.subr.bf16.mxu0 0
    %4479 = vmatpush1.bf16.msra.mxu0 %v4279
    %4480 = vmatprep.subr.bf16.mxu0 0
    %4481 = vmatpush1.bf16.msra.mxu0 %v4278
    %4482 = vmatprep.subr.bf16.mxu0 0
    %4483 = vmatpush1.bf16.msra.mxu0 %v4277
    %4484 = vmatprep.subr.bf16.mxu0 0
    %4485 = vmatpush1.bf16.msra.mxu0 %v4276
    %4486 = vmatprep.subr.bf16.mxu0 0
    %4487 = vmatpush1.bf16.msra.mxu0 %v4275
    %4488 = vmatprep.subr.bf16.mxu0 0
    %4489 = vmatpush1.bf16.msra.mxu0 %v4274
    %4490 = vmatprep.subr.bf16.mxu0 0
    %4491 = vmatpush2.bf16.msra.mxu0 %v4289
    %4492 = vmatprep.subr.bf16.mxu0 0
    %4493 = vmatpush2.bf16.msra.mxu0 %v4288
    %4494 = vmatprep.subr.bf16.mxu0 0
    %4495 = vmatpush2.bf16.msra.mxu0 %v4287
    %4496 = vmatprep.subr.bf16.mxu0 0
    %4497 = vmatpush2.bf16.msra.mxu0 %v4286
    %4498 = vmatprep.subr.bf16.mxu0 0
    %4499 = vmatpush2.bf16.msra.mxu0 %v4285
    %4500 = vmatprep.subr.bf16.mxu0 0
    %4501 = vmatpush2.bf16.msra.mxu0 %v4284
    %4502 = vmatprep.subr.bf16.mxu0 0
    %4503 = vmatpush2.bf16.msra.mxu0 %v4283
    %4504 = vmatprep.subr.bf16.mxu0 0
    %4505 = vmatpush2.bf16.msra.mxu0 %v4282
    %4506 = vmatprep.mubr.bf16.mxu0 %v3841
    %4507 = vmatmul.mubr.bf16.gmra.mxu0 %v3840
    %v4508 = vpop.f32.mrf.mxu0
    %v4509 = vadd.f32 %v4469, %v4508
    %v4510 = vpop.f32.mrf.mxu0
    %v4511 = vpop.f32.mrf.mxu0
    %v4512 = vpop.f32.mrf.mxu0
    %4513 = vdwg.mxu0
    %4514 = vst [vmem:[#allocation8] sm:$0xff] %v4509
    // Predicated region
    $region26: #{tpu_custom_call.1} parent=1 // pred_check
      _
    $region27: #{tpu_custom_call.1} parent=1 // pred_check_branch
      %4516 = sbr.rel (0) target = $region29
    $region28: #{tpu_custom_call.1} parent=1 // pred_region
      %s4518 = ssub.s32 128, 128
      %4519 = vsyncadd [#allocation4], %s4518
      %s4521 = sshll.u32 [#allocation8], 4
      %s4522 = int_to_ptr.vmem [resolvable:$true] %s4521
      %4524 = dma.vmem_to_hbm [thread:$0]  %s4522, 128, %s3, [#allocation4]
    $region29: #{tpu_custom_call.1} parent=1 // pred_fallthru
      _
    // Predicated region
    $region30: #{tpu_custom_call.1} parent=1 // pred_check
      _
    $region31: #{tpu_custom_call.1} parent=1 // pred_check_branch
      %4526 = sbr.rel (0) target = $region33
    $region32: #{tpu_custom_call.1} parent=1 // pred_region
      %4527 = dma.done [#allocation4], 128
    $region33: #{tpu_custom_call.1} parent=1 // pred_fallthru
      _
    %4528 = vsyncpa [#allocation3], 1
    %4529 = vsyncpa [#allocation6], 1
    %4530 = vsyncpa [#allocation4], 1

</llo_original>
